<compile_context>
chip_gen: v6e
topology: v6e:2x2x1
jax: 0.10.0
libtpu: 0.0.40
codegen_flags: <defaults>
</compile_context>

<pallas_src>
import functools

import jax
import jax.numpy as jnp
from jax import lax
from jax.experimental import pallas as pl
from jax.experimental.pallas import tpu as pltpu

IN_DIM = 1024              # MILNet input_dim (default)
EMB_DIM = 512              # patch_to_emb output
Q_DIM = 128                # BClassifier.q output
CLS_PAD = 128              # n_classes padded to one full 128-lane tile
CQ_DIM = CLS_PAD + Q_DIM   # fused [classes | Q] RHS width (one 256-wide MXU tile)
NEG_BIG = -1e30


def _round_up(n, m):
    return ((n + m - 1) // m) * m


# ---------------------------------------------------------------------------
# Fused kernel: instance tiles fill VMEM scratch; bag-level work on the last step.
# ---------------------------------------------------------------------------
def _milnet_kernel(n_valid_ref,                                   # SMEM scalar prefetch
                   x_ref, w1_ref, b1_ref, wcq_ref, bcq_ref, wct_ref, bc_ref,
                   pred_ref, a_ref,
                   feats_s, q_s, cls_s,
                   *, tile_n, n_classes):
    i = pl.program_id(0)
    off = pl.multiple_of(i * tile_n, tile_n)

    # ---- per-instance-tile compute (bf16 MXU matmuls, f32 accumulation) ----
    h = jnp.dot(x_ref[...], w1_ref[...], preferred_element_type=jnp.float32)
    h = jnp.maximum(h + b1_ref[...], 0.0)                 # (tile_n, 512); Dropout/rrt = identity
    h16 = h.astype(jnp.bfloat16)
    feats_s[pl.ds(off, tile_n), :] = h16

    # One 256-lane matmul produces [classes (128 padded lanes) | Q (128 lanes)].
    cq = jnp.dot(h16, wcq_ref[...], preferred_element_type=jnp.float32) + bcq_ref[...]
    cls_s[pl.ds(off, tile_n), :] = cq[:, :CLS_PAD]
    q_s[pl.ds(off, tile_n), :] = cq[:, CLS_PAD:].astype(jnp.bfloat16)

    # ---- bag-level attention + classifier head, last grid step only ----
    @pl.when(i == pl.num_programs(0) - 1)
    def _():
        n_valid = n_valid_ref[0]
        feats = feats_s[...]                               # (n_pad, 512) bf16
        q = q_s[...]                                       # (n_pad, 128) bf16
        cls = cls_s[...]                                   # (n_pad, 128) f32
        n_pad = cls.shape[0]

        row_i = lax.broadcasted_iota(jnp.int32, (n_pad, 1), 0)
        valid = row_i < n_valid                            # (n_pad, 1) — broadcast everywhere
        row_f = row_i.astype(jnp.float32)

        # Critical instance per class: lowest index attaining the per-class max logit.
        cls_m = jnp.where(valid, cls, NEG_BIG)
        cmax = jnp.max(cls_m, axis=0, keepdims=True)                    # (1, 128)
        idxf = jnp.where(cls_m == cmax, row_f, jnp.float32(n_pad))
        min_idx = jnp.min(idxf, axis=0, keepdims=True)                  # (1, 128)
        sel = jnp.where(row_f == min_idx, 1.0, 0.0).astype(jnp.bfloat16)  # one-hot (n_pad, 128)

        # q_max[c, :] = Q[argmax_c]   (one-hot gather as a trans_a MXU matmul)
        q_max = lax.dot_general(sel, q, (((0,), (0,)), ((), ())),
                                preferred_element_type=jnp.float32)     # (128, 128)

        # s[n, c] = <Q[n], q_max[c]> / sqrt(128); softmax over instances (axis 0).
        s = lax.dot_general(q, q_max.astype(jnp.bfloat16),
                            (((1,), (1,)), ((), ())),
                            preferred_element_type=jnp.float32)         # (n_pad, 128)
        s = s * (Q_DIM ** -0.5)
        s = jnp.where(valid, s, NEG_BIG)
        s = s - jnp.max(s, axis=0, keepdims=True)
        e = jnp.exp(s)
        a = e / jnp.sum(e, axis=0, keepdims=True)                        # (n_pad, 128)
        a_ref[...] = a                                                   # lane-dense, final layout

        # B = A^T @ V   (V == feats since passing_v=False)
        b_mat = lax.dot_general(a.astype(jnp.bfloat16), feats,
                                (((0,), (0,)), ((), ())),
                                preferred_element_type=jnp.float32)      # (128, 512)

        # fcc: Conv1d(C, C, kernel_size=512)(B[None]) == bias + sum_c B[c,:] @ Wc[:,c,:]^T
        pred = bc_ref[...]                                               # (1, 128)
        for c in range(n_classes):                                       # small static C
            pred = pred + jnp.dot(b_mat[c:c + 1, :], wct_ref[c],
                                  preferred_element_type=jnp.float32)
        pred_ref[...] = pred


def _fused_call(n_valid, x_pad, prep, *, tile_n):
    n_pad = x_pad.shape[0]
    n_classes = prep["n_classes"]
    grid = (n_pad // tile_n,)
    kernel = functools.partial(_milnet_kernel, tile_n=tile_n, n_classes=n_classes)

    # Raise the scoped VMEM limit only when the bag actually needs it (large bags);
    # the default limit is kept for small/typical bags.  Cap at 48 MiB (v7x physical 64 MiB).
    est = 16 * 2**20 + n_pad * 8192
    vmem_limit = None if est <= 28 * 2**20 else int(min(est, 48 * 2**20))

    return pl.pallas_call(
        kernel,
        out_shape=(
            jax.ShapeDtypeStruct((1, CLS_PAD), jnp.float32),       # prediction_bag (padded lanes)
            jax.ShapeDtypeStruct((n_pad, CLS_PAD), jnp.float32),   # A (instance-major, padded)
        ),
        grid_spec=pltpu.PrefetchScalarGridSpec(
            num_scalar_prefetch=1,
            grid=grid,
            in_specs=[
                pl.BlockSpec((tile_n, IN_DIM), lambda i, nv: (i, 0)),            # x tile (bf16)
                pl.BlockSpec((IN_DIM, EMB_DIM), lambda i, nv: (0, 0)),            # W1 (bf16, resident)
                pl.BlockSpec((1, EMB_DIM), lambda i, nv: (0, 0)),                 # b1
                pl.BlockSpec((EMB_DIM, CQ_DIM), lambda i, nv: (0, 0)),            # [Wi | Wq] (bf16)
                pl.BlockSpec((1, CQ_DIM), lambda i, nv: (0, 0)),                  # [bi | bq]
                pl.BlockSpec((n_classes, EMB_DIM, CLS_PAD), lambda i, nv: (0, 0, 0)),  # conv W
                pl.BlockSpec((1, CLS_PAD), lambda i, nv: (0, 0)),                 # conv bias
            ],
            out_specs=[
                pl.BlockSpec((1, CLS_PAD), lambda i, nv: (0, 0)),
                pl.BlockSpec((n_pad, CLS_PAD), lambda i, nv: (0, 0)),
            ],
            scratch_shapes=[
                pltpu.VMEM((n_pad, EMB_DIM), jnp.bfloat16),   # feats, VMEM-resident across grid
                pltpu.VMEM((n_pad, Q_DIM), jnp.bfloat16),     # Q
                pltpu.VMEM((n_pad, CLS_PAD), jnp.float32),    # instance logits
            ],
        ),
        compiler_params=pltpu.CompilerParams(
            dimension_semantics=("arbitrary",),               # scratch carries state across tiles
            vmem_limit_bytes=vmem_limit),
    )(n_valid, x_pad, prep["w1"], prep["b1"], prep["wcq"], prep["bcq"],
      prep["wct"], prep["bc"])


# ---------------------------------------------------------------------------
# Wrapper: one-time parameter prep + per-bag forward.
# ---------------------------------------------------------------------------
def prepare_params(params, n_classes):
    """One-time parameter prep (cast / pad / concat), hoisted off the per-bag path."""
    w1, b1, wi, bi, wq, bq, wc, bc = params
    wcq = jnp.zeros((EMB_DIM, CQ_DIM), jnp.float32)
    wcq = wcq.at[:, :n_classes].set(wi).at[:, CLS_PAD:].set(wq).astype(jnp.bfloat16)
    bcq = jnp.zeros((1, CQ_DIM), jnp.float32)
    bcq = bcq.at[:, :n_classes].set(bi).at[:, CLS_PAD:].set(bq)
    # Conv1d(C, C, k=512) weight (out_c, in_c, k) -> (in_c, k, out_c padded to 128 lanes).
    wct = jnp.zeros((n_classes, EMB_DIM, CLS_PAD), jnp.float32)
    wct = wct.at[:, :, :n_classes].set(jnp.transpose(wc, (1, 2, 0)))
    bc_pad = jnp.zeros((1, CLS_PAD), jnp.float32).at[:, :n_classes].set(bc)
    return dict(w1=w1.astype(jnp.bfloat16), b1=b1, wcq=wcq, bcq=bcq,
                wct=wct, bc=bc_pad, n_classes=n_classes)


def milnet_forward(x, prep, *, tile_n=512):
    """x: (1, N, 1024) bag. Returns (prediction_bag, max_loss, ps, A) like MILNet.forward."""
    n_classes = prep["n_classes"]
    assert x.ndim == 3 and x.shape[0] == 1 and x.shape[2] == IN_DIM
    n = x.shape[1]
    ps = n

    # Pad the instance axis so it tiles cleanly; small bags collapse to one grid step.
    tile = _round_up(n, 8) if n < tile_n else tile_n
    n_pad = _round_up(n, tile)
    x_pad = jnp.pad(x.reshape(n, IN_DIM), ((0, n_pad - n), (0, 0))).astype(jnp.bfloat16)
    n_valid = jnp.array([n], jnp.int32)       # SMEM scalar: no recompile within an n_pad bucket

    pred_p, a_p = _fused_call(n_valid, x_pad, prep, tile_n=tile)

    prediction_bag = pred_p[:, :n_classes]    # (1, C)
    A = a_p[:n, :n_classes]                   # (N, C)
    max_loss = None  # TODO(synk): CE/BCE on classes.max(0) needs label/loss objects (host-side glue).
    return prediction_bag, max_loss, ps, A


# ---------------------------------------------------------------------------
# Pure-JAX reference (mirrors the kernel's dtype choices) and demo.
# ---------------------------------------------------------------------------
def milnet_reference(x, params, *, n_classes):
    w1, b1, wi, bi, wq, bq, wc, bc = params
    xf = x.reshape(-1, IN_DIM)
    h = jnp.maximum(
        jnp.dot(xf.astype(jnp.bfloat16), w1.astype(jnp.bfloat16),
                preferred_element_type=jnp.float32) + b1, 0.0)
    h16 = h.astype(jnp.bfloat16)
    classes = jnp.dot(h16, wi.astype(jnp.bfloat16),
                      preferred_element_type=jnp.float32) + bi            # (N, C)
    q = jnp.dot(h16, wq.astype(jnp.bfloat16),
                preferred_element_type=jnp.float32) + bq                  # (N, 128)
    q16 = q.astype(jnp.bfloat16)
    idx = jnp.argmax(classes, axis=0)                                     # (C,)
    q_max = q16[idx]                                                      # (C, 128)
    s = jnp.dot(q16, q_max.T, preferred_element_type=jnp.float32) / jnp.sqrt(
        jnp.float32(Q_DIM))
    a = jax.nn.softmax(s, axis=0)                                         # (N, C)
    b_mat = jnp.dot(a.T.astype(jnp.bfloat16), h16,
                    preferred_element_type=jnp.float32)                   # (C, 512)
    pred = jnp.dot(b_mat.reshape(1, -1), wc.reshape(n_classes, -1).T,
                   precision=jax.lax.Precision.HIGHEST) + bc
    return pred, a


def _init_params(key, n_classes):
    # Linear weights stored transposed vs nn.Linear (shape (in, out)); Conv1d weight
    # keeps the PyTorch (out_c, in_c, k) layout.
    ks = jax.random.split(key, 8)

    def u(k, shape, fan_in):
        lim = 1.0 / jnp.sqrt(jnp.float32(fan_in))
        return jax.random.uniform(k, shape, jnp.float32, -lim, lim)

    w1 = u(ks[0], (IN_DIM, EMB_DIM), IN_DIM)
    b1 = u(ks[1], (1, EMB_DIM), IN_DIM)
    wi = u(ks[2], (EMB_DIM, n_classes), EMB_DIM)
    bi = u(ks[3], (1, n_classes), EMB_DIM)
    wq = u(ks[4], (EMB_DIM, Q_DIM), EMB_DIM)
    bq = u(ks[5], (1, Q_DIM), EMB_DIM)
    wc = u(ks[6], (n_classes, n_classes, EMB_DIM), n_classes * EMB_DIM)
    bc = u(ks[7], (1, n_classes), n_classes * EMB_DIM)
    return w1, b1, wi, bi, wq, bq, wc, bc


if __name__ == "__main__":
    key = jax.random.PRNGKey(0)
    n_classes = 2
    kp, kx1, kx2 = jax.random.split(key, 3)
    params = _init_params(kp, n_classes)
    prep = prepare_params(params, n_classes)      # hoisted once, reused per bag

    # Case 1: small bag, single grid step.
    n1 = 16
    x1 = jax.random.normal(kx1, (1, n1, IN_DIM), jnp.float32)
    pred1, max_loss1, ps1, A1 = milnet_forward(x1, prep)
    jax.block_until_ready((pred1, A1))
    pred1_ref, A1_ref = milnet_reference(x1, params, n_classes=n_classes)

    assert pred1.shape == (1, n_classes) and A1.shape == (n1, n_classes) and ps1 == n1
    assert bool(jnp.all(jnp.isfinite(pred1))) and bool(jnp.all(jnp.isfinite(A1)))
    assert jnp.allclose(jnp.sum(A1, axis=0), 1.0, atol=1e-3)
    assert jnp.allclose(pred1, pred1_ref, atol=3e-2, rtol=3e-2)
    assert jnp.allclose(A1, A1_ref, atol=2e-2, rtol=2e-2)

    # Case 2: multi-tile grid with instance padding (exercises scratch fill + masking).
    n2 = 200
    x2 = jax.random.normal(kx2, (1, n2, IN_DIM), jnp.float32)
    pred2, _, ps2, A2 = milnet_forward(x2, prep, tile_n=64)   # 4 grid steps, 56 padded rows
    jax.block_until_ready((pred2, A2))
    pred2_ref, A2_ref = milnet_reference(x2, params, n_classes=n_classes)

    assert pred2.shape == (1, n_classes) and A2.shape == (n2, n_classes) and ps2 == n2
    assert jnp.allclose(jnp.sum(A2, axis=0), 1.0, atol=1e-3)
    assert jnp.allclose(pred2, pred2_ref, atol=3e-2, rtol=3e-2)
    assert jnp.allclose(A2, A2_ref, atol=2e-2, rtol=2e-2)

    print("KERNEL_OK")
</pallas_src>

<mosaic_0001>
module attributes {stable_mosaic.version = 11 : i64} {
  func.func @_milnet_kernel(%arg0: i32, %arg1: memref<1xi32, #tpu.memory_space<smem>>, %arg2: memref<16x1024xbf16, #tpu.memory_space<vmem>>, %arg3: memref<1024x512xbf16, #tpu.memory_space<vmem>>, %arg4: memref<1x512xf32, #tpu.memory_space<vmem>>, %arg5: memref<512x256xbf16, #tpu.memory_space<vmem>>, %arg6: memref<1x256xf32, #tpu.memory_space<vmem>>, %arg7: memref<2x512x128xf32, #tpu.memory_space<vmem>>, %arg8: memref<1x128xf32, #tpu.memory_space<vmem>>, %arg9: memref<1x128xf32, #tpu.memory_space<vmem>>, %arg10: memref<16x128xf32, #tpu.memory_space<vmem>>, %arg11: memref<16x512xbf16, #tpu.memory_space<vmem>>, %arg12: memref<16x128xbf16, #tpu.memory_space<vmem>>, %arg13: memref<16x128xf32, #tpu.memory_space<vmem>>) attributes {dimension_semantics = [#tpu.dimension_semantics<arbitrary>], iteration_bounds = array<i64: 1>, scalar_prefetch = 1 : i64, scratch_operands = 3 : i64, tpu.core_type = #tpu.core_type<tc>, window_params = [{transform_indices = @transform_0, window_bounds = array<i64: 16, 1024>}, {pipeline_mode = #tpu.pipeline_mode<synchronous>, transform_indices = @transform_1, window_bounds = array<i64: 1024, 512>}, {pipeline_mode = #tpu.pipeline_mode<synchronous>, transform_indices = @transform_2, window_bounds = array<i64: 1, 512>}, {pipeline_mode = #tpu.pipeline_mode<synchronous>, transform_indices = @transform_3, window_bounds = array<i64: 512, 256>}, {pipeline_mode = #tpu.pipeline_mode<synchronous>, transform_indices = @transform_4, window_bounds = array<i64: 1, 256>}, {pipeline_mode = #tpu.pipeline_mode<synchronous>, transform_indices = @transform_5, window_bounds = array<i64: 2, 512, 128>}, {pipeline_mode = #tpu.pipeline_mode<synchronous>, transform_indices = @transform_6, window_bounds = array<i64: 1, 128>}, {pipeline_mode = #tpu.pipeline_mode<synchronous>, transform_indices = @transform_7, window_bounds = array<i64: 1, 128>}, {pipeline_mode = #tpu.pipeline_mode<synchronous>, transform_indices = @transform_8, window_bounds = array<i64: 16, 128>}]} {
    %c16_i32 = arith.constant 16 : i32
    %0 = arith.muli %arg0, %c16_i32 : i32
    %1 = tpu.assume_multiple %0, 16 : i32
    %c0 = arith.constant 0 : index
    %c0_0 = arith.constant 0 : index
    %2 = vector.load %arg2[%c0, %c0_0] : memref<16x1024xbf16, #tpu.memory_space<vmem>>, vector<16x1024xbf16>
    %c0_1 = arith.constant 0 : index
    %c0_2 = arith.constant 0 : index
    %3 = vector.load %arg3[%c0_1, %c0_2] : memref<1024x512xbf16, #tpu.memory_space<vmem>>, vector<1024x512xbf16>
    %cst = arith.constant dense<0.000000e+00> : vector<16x512xf32>
    %4 = tpu.matmul %2, %3, %cst {dimension_numbers = #tpu.dot_dimension_numbers<[1], [0], [0], [1], [0, 0, 1, 1], [], []>} : vector<16x1024xbf16>, vector<1024x512xbf16>, vector<16x512xf32> -> vector<16x512xf32>
    %c0_3 = arith.constant 0 : index
    %c0_4 = arith.constant 0 : index
    %5 = vector.load %arg4[%c0_3, %c0_4] : memref<1x512xf32, #tpu.memory_space<vmem>>, vector<1x512xf32>
    %6 = vector.broadcast %5 : vector<1x512xf32> to vector<16x512xf32>
    %7 = arith.addf %4, %6 : vector<16x512xf32>
    %cst_5 = arith.constant 0.000000e+00 : f32
    %8 = vector.broadcast %cst_5 : f32 to vector<16x512xf32>
    %9 = arith.maximumf %7, %8 : vector<16x512xf32>
    %10 = arith.truncf %9 : vector<16x512xf32> to vector<16x512xbf16>
    %11 = arith.index_cast %1 : i32 to index
    %c0_6 = arith.constant 0 : index
    %12 = vector.load %arg11[%11, %c0_6] : memref<16x512xbf16, #tpu.memory_space<vmem>>, vector<16x512xbf16>
    tpu.vector_store %arg11[%11, %c0_6], %10 {strides = array<i32>} : memref<16x512xbf16, #tpu.memory_space<vmem>>, vector<16x512xbf16>,
    %c0_7 = arith.constant 0 : index
    %c0_8 = arith.constant 0 : index
    %13 = vector.load %arg5[%c0_7, %c0_8] : memref<512x256xbf16, #tpu.memory_space<vmem>>, vector<512x256xbf16>
    %cst_9 = arith.constant dense<0.000000e+00> : vector<16x256xf32>
    %14 = tpu.matmul %10, %13, %cst_9 {dimension_numbers = #tpu.dot_dimension_numbers<[1], [0], [0], [1], [0, 0, 1, 1], [], []>} : vector<16x512xbf16>, vector<512x256xbf16>, vector<16x256xf32> -> vector<16x256xf32>
    %c0_10 = arith.constant 0 : index
    %c0_11 = arith.constant 0 : index
    %15 = vector.load %arg6[%c0_10, %c0_11] : memref<1x256xf32, #tpu.memory_space<vmem>>, vector<1x256xf32>
    %16 = vector.broadcast %15 : vector<1x256xf32> to vector<16x256xf32>
    %17 = arith.addf %14, %16 : vector<16x256xf32>
    %18 = vector.extract_strided_slice %17 {offsets = [0, 0], sizes = [16, 128], strides = [1, 1]} : vector<16x256xf32> to vector<16x128xf32>
    %19 = arith.index_cast %1 : i32 to index
    %c0_12 = arith.constant 0 : index
    %20 = vector.load %arg13[%19, %c0_12] : memref<16x128xf32, #tpu.memory_space<vmem>>, vector<16x128xf32>
    tpu.vector_store %arg13[%19, %c0_12], %18 {strides = array<i32>} : memref<16x128xf32, #tpu.memory_space<vmem>>, vector<16x128xf32>,
    %21 = vector.extract_strided_slice %17 {offsets = [0, 128], sizes = [16, 128], strides = [1, 1]} : vector<16x256xf32> to vector<16x128xf32>
    %22 = arith.truncf %21 : vector<16x128xf32> to vector<16x128xbf16>
    %23 = arith.index_cast %1 : i32 to index
    %c0_13 = arith.constant 0 : index
    %24 = vector.load %arg12[%23, %c0_13] : memref<16x128xbf16, #tpu.memory_space<vmem>>, vector<16x128xbf16>
    tpu.vector_store %arg12[%23, %c0_13], %22 {strides = array<i32>} : memref<16x128xbf16, #tpu.memory_space<vmem>>, vector<16x128xbf16>,
    %c0_i32 = arith.constant 0 : i32
    %25 = arith.cmpi eq, %arg0, %c0_i32 : i32
    %26 = arith.extui %25 : i1 to i32
    %c0_i32_14 = arith.constant 0 : i32
    %27 = arith.cmpi ne, %26, %c0_i32_14 : i32
    scf.if %27 {
      %c0_15 = arith.constant 0 : index
      %28 = memref.load %arg1[%c0_15] : memref<1xi32, #tpu.memory_space<smem>>
      %c0_16 = arith.constant 0 : index
      %c0_17 = arith.constant 0 : index
      %29 = vector.load %arg11[%c0_16, %c0_17] : memref<16x512xbf16, #tpu.memory_space<vmem>>, vector<16x512xbf16>
      %c0_18 = arith.constant 0 : index
      %c0_19 = arith.constant 0 : index
      %30 = vector.load %arg12[%c0_18, %c0_19] : memref<16x128xbf16, #tpu.memory_space<vmem>>, vector<16x128xbf16>
      %c0_20 = arith.constant 0 : index
      %c0_21 = arith.constant 0 : index
      %31 = vector.load %arg13[%c0_20, %c0_21] : memref<16x128xf32, #tpu.memory_space<vmem>>, vector<16x128xf32>
      %32 = tpu.iota {dimensions = array<i32: 0>} : vector<16x1xi32>
      %33 = vector.broadcast %28 : i32 to vector<16x1xi32>
      %34 = arith.cmpi slt, %32, %33 : vector<16x1xi32>
      %35 = arith.sitofp %32 : vector<16x1xi32> to vector<16x1xf32>
      %cst_22 = arith.constant -1.000000e+30 : f32
      %36 = vector.shape_cast %34 : vector<16x1xi1> to vector<16x1xi1>
      %37 = vector.broadcast %36 : vector<16x1xi1> to vector<16x128xi1>
      %38 = vector.broadcast %cst_22 : f32 to vector<16x128xf32>
      %39 = arith.select %37, %31, %38 : vector<16x128xi1>, vector<16x128xf32>
      %cst_23 = arith.constant dense<0xFF800000> : vector<128xf32>
      %40 = vector.multi_reduction <maximumf>, %39, %cst_23 [0] : vector<16x128xf32> to vector<128xf32>
      %41 = vector.shape_cast %40 : vector<128xf32> to vector<1x128xf32>
      %42 = vector.broadcast %41 : vector<1x128xf32> to vector<16x128xf32>
      %43 = arith.cmpf oeq, %39, %42 : vector<16x128xf32>
      %cst_24 = arith.constant 1.600000e+01 : f32
      %44 = vector.shape_cast %35 : vector<16x1xf32> to vector<16x1xf32>
      %45 = vector.broadcast %44 : vector<16x1xf32> to vector<16x128xf32>
      %46 = vector.broadcast %cst_24 : f32 to vector<16x128xf32>
      %47 = arith.select %43, %45, %46 : vector<16x128xi1>, vector<16x128xf32>
      %cst_25 = arith.constant dense<0x7F800000> : vector<128xf32>
      %48 = vector.multi_reduction <minimumf>, %47, %cst_25 [0] : vector<16x128xf32> to vector<128xf32>
      %49 = vector.shape_cast %48 : vector<128xf32> to vector<1x128xf32>
      %50 = vector.broadcast %35 : vector<16x1xf32> to vector<16x128xf32>
      %51 = vector.broadcast %49 : vector<1x128xf32> to vector<16x128xf32>
      %52 = arith.cmpf oeq, %50, %51 : vector<16x128xf32>
      %cst_26 = arith.constant 1.000000e+00 : f32
      %cst_27 = arith.constant 0.000000e+00 : f32
      %53 = vector.broadcast %cst_26 : f32 to vector<16x128xf32>
      %54 = vector.broadcast %cst_27 : f32 to vector<16x128xf32>
      %55 = arith.select %52, %53, %54 : vector<16x128xi1>, vector<16x128xf32>
      %56 = arith.truncf %55 : vector<16x128xf32> to vector<16x128xbf16>
      %cst_28 = arith.constant dense<0.000000e+00> : vector<128x128xf32>
      %57 = tpu.matmul %56, %30, %cst_28 {dimension_numbers = #tpu.dot_dimension_numbers<[0], [0], [1], [1], [0, 1, 1, 1], [], []>} : vector<16x128xbf16>, vector<16x128xbf16>, vector<128x128xf32> -> vector<128x128xf32>
      %58 = arith.truncf %57 : vector<128x128xf32> to vector<128x128xbf16>
      %cst_29 = arith.constant dense<0.000000e+00> : vector<16x128xf32>
      %59 = tpu.matmul %30, %58, %cst_29 {dimension_numbers = #tpu.dot_dimension_numbers<[1], [1], [0], [0], [0, 0, 1, 0], [], []>} : vector<16x128xbf16>, vector<128x128xbf16>, vector<16x128xf32> -> vector<16x128xf32>
      %cst_30 = arith.constant 0.0883883461 : f32
      %60 = vector.broadcast %cst_30 : f32 to vector<16x128xf32>
      %61 = arith.mulf %59, %60 : vector<16x128xf32>
      %cst_31 = arith.constant -1.000000e+30 : f32
      %62 = vector.shape_cast %34 : vector<16x1xi1> to vector<16x1xi1>
      %63 = vector.broadcast %62 : vector<16x1xi1> to vector<16x128xi1>
      %64 = vector.broadcast %cst_31 : f32 to vector<16x128xf32>
      %65 = arith.select %63, %61, %64 : vector<16x128xi1>, vector<16x128xf32>
      %cst_32 = arith.constant dense<0xFF800000> : vector<128xf32>
      %66 = vector.multi_reduction <maximumf>, %65, %cst_32 [0] : vector<16x128xf32> to vector<128xf32>
      %67 = vector.shape_cast %66 : vector<128xf32> to vector<1x128xf32>
      %68 = vector.broadcast %67 : vector<1x128xf32> to vector<16x128xf32>
      %69 = arith.subf %65, %68 : vector<16x128xf32>
      %70 = math.exp %69 : vector<16x128xf32>
      %cst_33 = arith.constant dense<0.000000e+00> : vector<128xf32>
      %71 = vector.multi_reduction <add>, %70, %cst_33 [0] : vector<16x128xf32> to vector<128xf32>
      %72 = vector.shape_cast %71 : vector<128xf32> to vector<1x128xf32>
      %73 = vector.broadcast %72 : vector<1x128xf32> to vector<16x128xf32>
      %74 = arith.divf %70, %73 : vector<16x128xf32>
      %c0_34 = arith.constant 0 : index
      %c0_35 = arith.constant 0 : index
      %75 = vector.load %arg10[%c0_34, %c0_35] : memref<16x128xf32, #tpu.memory_space<vmem>>, vector<16x128xf32>
      tpu.vector_store %arg10[%c0_34, %c0_35], %74 {strides = array<i32>} : memref<16x128xf32, #tpu.memory_space<vmem>>, vector<16x128xf32>,
      %76 = arith.truncf %74 : vector<16x128xf32> to vector<16x128xbf16>
      %cst_36 = arith.constant dense<0.000000e+00> : vector<128x512xf32>
      %77 = tpu.matmul %76, %29, %cst_36 {dimension_numbers = #tpu.dot_dimension_numbers<[0], [0], [1], [1], [0, 1, 1, 1], [], []>} : vector<16x128xbf16>, vector<16x512xbf16>, vector<128x512xf32> -> vector<128x512xf32>
      %c0_37 = arith.constant 0 : index
      %c0_38 = arith.constant 0 : index
      %78 = vector.load %arg8[%c0_37, %c0_38] : memref<1x128xf32, #tpu.memory_space<vmem>>, vector<1x128xf32>
      %79 = vector.extract_strided_slice %77 {offsets = [0, 0], sizes = [1, 512], strides = [1, 1]} : vector<128x512xf32> to vector<1x512xf32>
      %c0_39 = arith.constant 0 : index
      %c0_40 = arith.constant 0 : index
      %c0_41 = arith.constant 0 : index
      %80 = vector.load %arg7[%c0_39, %c0_40, %c0_41] : memref<2x512x128xf32, #tpu.memory_space<vmem>>, vector<1x512x128xf32>
      %81 = vector.shape_cast %80 : vector<1x512x128xf32> to vector<512x128xf32>
      %cst_42 = arith.constant dense<0.000000e+00> : vector<1x128xf32>
      %82 = tpu.matmul %79, %81, %cst_42 {dimension_numbers = #tpu.dot_dimension_numbers<[1], [0], [0], [1], [0, 0, 1, 1], [], []>} : vector<1x512xf32>, vector<512x128xf32>, vector<1x128xf32> -> vector<1x128xf32>
      %83 = arith.addf %78, %82 : vector<1x128xf32>
      %84 = vector.extract_strided_slice %77 {offsets = [1, 0], sizes = [1, 512], strides = [1, 1]} : vector<128x512xf32> to vector<1x512xf32>
      %c1 = arith.constant 1 : index
      %c0_43 = arith.constant 0 : index
      %c0_44 = arith.constant 0 : index
      %85 = vector.load %arg7[%c1, %c0_43, %c0_44] : memref<2x512x128xf32, #tpu.memory_space<vmem>>, vector<1x512x128xf32>
      %86 = vector.shape_cast %85 : vector<1x512x128xf32> to vector<512x128xf32>
      %cst_45 = arith.constant dense<0.000000e+00> : vector<1x128xf32>
      %87 = tpu.matmul %84, %86, %cst_45 {dimension_numbers = #tpu.dot_dimension_numbers<[1], [0], [0], [1], [0, 0, 1, 1], [], []>} : vector<1x512xf32>, vector<512x128xf32>, vector<1x128xf32> -> vector<1x128xf32>
      %88 = arith.addf %83, %87 : vector<1x128xf32>
      %c0_46 = arith.constant 0 : index
      %c0_47 = arith.constant 0 : index
      %89 = vector.load %arg9[%c0_46, %c0_47] : memref<1x128xf32, #tpu.memory_space<vmem>>, vector<1x128xf32>
      tpu.vector_store %arg9[%c0_46, %c0_47], %88 {strides = array<i32>} : memref<1x128xf32, #tpu.memory_space<vmem>>, vector<1x128xf32>,
    } else {
    }
    return
  }
  func.func @transform_0(%arg0: i32, %arg1: memref<1xi32, #tpu.memory_space<smem>>) -> (i32, i32) {
    %c0_i32 = arith.constant 0 : i32
    %c0_i32_0 = arith.constant 0 : i32
    return %arg0, %c0_i32 : i32, i32
  }
  func.func @transform_1(%arg0: i32, %arg1: memref<1xi32, #tpu.memory_space<smem>>) -> (i32, i32) {
    %c0_i32 = arith.constant 0 : i32
    %c0_i32_0 = arith.constant 0 : i32
    %c0_i32_1 = arith.constant 0 : i32
    return %c0_i32, %c0_i32_0 : i32, i32
  }
  func.func @transform_2(%arg0: i32, %arg1: memref<1xi32, #tpu.memory_space<smem>>) -> (i32, i32) {
    %c0_i32 = arith.constant 0 : i32
    %c0_i32_0 = arith.constant 0 : i32
    %c0_i32_1 = arith.constant 0 : i32
    return %c0_i32, %c0_i32_0 : i32, i32
  }
  func.func @transform_3(%arg0: i32, %arg1: memref<1xi32, #tpu.memory_space<smem>>) -> (i32, i32) {
    %c0_i32 = arith.constant 0 : i32
    %c0_i32_0 = arith.constant 0 : i32
    %c0_i32_1 = arith.constant 0 : i32
    return %c0_i32, %c0_i32_0 : i32, i32
  }
  func.func @transform_4(%arg0: i32, %arg1: memref<1xi32, #tpu.memory_space<smem>>) -> (i32, i32) {
    %c0_i32 = arith.constant 0 : i32
    %c0_i32_0 = arith.constant 0 : i32
    %c0_i32_1 = arith.constant 0 : i32
    return %c0_i32, %c0_i32_0 : i32, i32
  }
  func.func @transform_5(%arg0: i32, %arg1: memref<1xi32, #tpu.memory_space<smem>>) -> (i32, i32, i32) {
    %c0_i32 = arith.constant 0 : i32
    %c0_i32_0 = arith.constant 0 : i32
    %c0_i32_1 = arith.constant 0 : i32
    %c0_i32_2 = arith.constant 0 : i32
    return %c0_i32, %c0_i32_0, %c0_i32_1 : i32, i32, i32
  }
  func.func @transform_6(%arg0: i32, %arg1: memref<1xi32, #tpu.memory_space<smem>>) -> (i32, i32) {
    %c0_i32 = arith.constant 0 : i32
    %c0_i32_0 = arith.constant 0 : i32
    %c0_i32_1 = arith.constant 0 : i32
    return %c0_i32, %c0_i32_0 : i32, i32
  }
  func.func @transform_7(%arg0: i32, %arg1: memref<1xi32, #tpu.memory_space<smem>>) -> (i32, i32) {
    %c0_i32 = arith.constant 0 : i32
    %c0_i32_0 = arith.constant 0 : i32
    %c0_i32_1 = arith.constant 0 : i32
    return %c0_i32, %c0_i32_0 : i32, i32
  }
  func.func @transform_8(%arg0: i32, %arg1: memref<1xi32, #tpu.memory_space<smem>>) -> (i32, i32) {
    %c0_i32 = arith.constant 0 : i32
    %c0_i32_0 = arith.constant 0 : i32
    %c0_i32_1 = arith.constant 0 : i32
    return %c0_i32, %c0_i32_0 : i32, i32
  }
}

</mosaic_0001>

<llo_original>
// kernel: tpu_custom_call.1
$region0: #{tpu_custom_call.1}
  #allocation0 [shape = 'u32[]', space=smem, size = 0x4, offset = 0x4, fixed_abs, tag = 'smem constant byte address 0x4 - core index']
  #allocation1 [shape = 'u32[144,128]{1,0:T(1,128)}', space=vmem, size = 0x12000, scoped, tag = 'internal scratch']
  #allocation2 [shape = 'bf16[16,512]{1,0:T(8,128)(2,1)}', space=vmem, size = 0x4000, scoped, tag = 'scratch operand']
  #allocation3 [shape = 'bf16[16,128]{1,0:T(8,128)(2,1)}', space=vmem, size = 0x1000, scoped, tag = 'scratch operand']
  #allocation4 [shape = 'f32[16,128]{1,0:T(8,128)}', space=vmem, size = 0x2000, scoped, tag = 'scratch operand']
  #allocation5 [shape = 's32[1]{0}', space=sflag, size = 0x4, scoped, tag = 'scoped memory for tpu_custom_call.1']
  #allocation6 [shape = 's32[1]{0:T(128)S(6)}', space=smem, size = 0x200, scoped, tag = 'prefetched SMEM operand 0']
  %s0 = inlined_call_operand.<no memory space> [shape: s32[1], index: 0, kind: input, shape index: {}]
  %s1 = inlined_call_operand.hbm [shape: bf16[16,1024], index: 1, kind: input, shape index: {}]
  %s2 = inlined_call_operand.hbm [shape: bf16[1024,512], index: 2, kind: input, shape index: {}]
  %s3 = inlined_call_operand.vmem [shape: f32[1,512], index: 3, kind: input, shape index: {}]
  %s4 = inlined_call_operand.hbm [shape: bf16[512,256], index: 4, kind: input, shape index: {}]
  %s5 = inlined_call_operand.vmem [shape: f32[1,256], index: 5, kind: input, shape index: {}]
  %s6 = inlined_call_operand.hbm [shape: f32[2,512,128], index: 6, kind: input, shape index: {}]
  %s7 = inlined_call_operand.vmem [shape: f32[1,128], index: 7, kind: input, shape index: {}]
  %s8 = inlined_call_operand.hbm [shape: f32[1,128], index: 8, kind: output, shape index: {0}]
  %s9 = inlined_call_operand.hbm [shape: f32[16,128], index: 9, kind: output, shape index: {1}]
  %10 = xla_tuple %s8, %s9
  %s11 = sld [smem:[#allocation0]]
  $region66: #{tpu_custom_call.1} parent=0
    _
  %s13 = ssub.s32 1, %s11
  %s14 = scalar_select 0, %s13, %s11
  %15 = sst [smem:[#allocation6]] %s0
  $region1: #{tpu_custom_call.1} parent=0
    #allocation7 [shape = 'u8[32768]{0}', space=vmem, size = 0x8000, scoped, tag = 'input window, operand 1, single buffered']
    #allocation8 [shape = 's32[1]{0}', space=sflag, size = 0x4, scoped, tag = 'scoped memory for tpu_custom_call.1']
    #allocation9 [shape = 's32[1]{0}', space=sflag, size = 0x4, scoped, tag = 'scoped memory for tpu_custom_call.1']
    #allocation10 [shape = 'u8[1048576]{0}', space=vmem, size = 0x100000, scoped, tag = 'input window, operand 2, single buffered']
    #allocation11 [shape = 's32[1]{0}', space=sflag, size = 0x4, scoped, tag = 'scoped memory for tpu_custom_call.1']
    #allocation12 [shape = 'u8[262144]{0}', space=vmem, size = 0x40000, scoped, tag = 'input window, operand 4, single buffered']
    #allocation13 [shape = 'u8[524288]{0}', space=vmem, size = 0x80000, scoped, tag = 'input window, operand 6, single buffered']
    #allocation14 [shape = 's32[1]{0}', space=sflag, size = 0x4, scoped, tag = 'scoped memory for tpu_custom_call.1']
    #allocation15 [shape = 'u8[512]{0}', space=vmem, size = 0x400, scoped, tag = 'output window, operand 0, single buffered']
    #allocation16 [shape = 'u8[8192]{0}', space=vmem, size = 0x2000, scoped, tag = 'output window, operand 1, single buffered']
    #allocation17 [shape = 's32[1]{0}', space=sflag, size = 0x4, scoped, tag = 'scoped memory for tpu_custom_call.1']
    %16 = vsyncpa [#allocation8], 0
    %17 = vsyncpa [#allocation11], 0
    %18 = vsyncpa [#allocation14], 0
    %19 = vsyncpa [#allocation9], 0
    %20 = vsyncpa [#allocation17], 0
    // Predicated region
    $region2: #{tpu_custom_call.1} parent=1 // pred_check
      _
    $region3: #{tpu_custom_call.1} parent=1 // pred_check_branch
      %22 = sbr.rel (0) target = $region5
    $region4: #{tpu_custom_call.1} parent=1 // pred_region
      %s24 = ssub.s32 1024, 1024
      %25 = vsyncadd [#allocation8], %s24
      %s26 = sshll.u32 [#allocation7], 4
      %s27 = int_to_ptr.vmem [resolvable:$true] %s26
      %32 = dma.hbm_to_vmem [thread:$0]  %s1, 1024, %s27, [#allocation8], 512, 512, 32
    $region5: #{tpu_custom_call.1} parent=1 // pred_fallthru
      _
    // Predicated region
    $region6: #{tpu_custom_call.1} parent=1 // pred_check
      _
    $region7: #{tpu_custom_call.1} parent=1 // pred_check_branch
      %34 = sbr.rel (0) target = $region9
    $region8: #{tpu_custom_call.1} parent=1 // pred_region
      %s36 = ssub.s32 32768, 32768
      %37 = vsyncadd [#allocation11], %s36
      %s38 = sshll.u32 [#allocation10], 4
      %s39 = int_to_ptr.vmem [resolvable:$true] %s38
      %44 = dma.hbm_to_vmem [thread:$0]  %s2, 32768, %s39, [#allocation11], 256, 256, 16
    $region9: #{tpu_custom_call.1} parent=1 // pred_fallthru
      _
    // Predicated region
    $region10: #{tpu_custom_call.1} parent=1 // pred_check
      _
    $region11: #{tpu_custom_call.1} parent=1 // pred_check_branch
      %46 = sbr.rel (0) target = $region13
    $region12: #{tpu_custom_call.1} parent=1 // pred_region
      _
    $region13: #{tpu_custom_call.1} parent=1 // pred_fallthru
      _
    // Predicated region
    $region14: #{tpu_custom_call.1} parent=1 // pred_check
      _
    $region15: #{tpu_custom_call.1} parent=1 // pred_check_branch
      %48 = sbr.rel (0) target = $region17
    $region16: #{tpu_custom_call.1} parent=1 // pred_region
      %s50 = ssub.s32 8192, 8192
      %51 = vsyncadd [#allocation11], %s50
      %s52 = sshll.u32 [#allocation12], 4
      %s53 = int_to_ptr.vmem [resolvable:$true] %s52
      %58 = dma.hbm_to_vmem [thread:$0]  %s4, 8192, %s53, [#allocation11], 128, 128, 8
    $region17: #{tpu_custom_call.1} parent=1 // pred_fallthru
      _
    // Predicated region
    $region18: #{tpu_custom_call.1} parent=1 // pred_check
      _
    $region19: #{tpu_custom_call.1} parent=1 // pred_check_branch
      %60 = sbr.rel (0) target = $region21
    $region20: #{tpu_custom_call.1} parent=1 // pred_region
      _
    $region21: #{tpu_custom_call.1} parent=1 // pred_fallthru
      _
    // Predicated region
    $region22: #{tpu_custom_call.1} parent=1 // pred_check
      _
    $region23: #{tpu_custom_call.1} parent=1 // pred_check_branch
      %62 = sbr.rel (0) target = $region25
    $region24: #{tpu_custom_call.1} parent=1 // pred_region
      %s64 = ssub.s32 16384, 16384
      %65 = vsyncadd [#allocation14], %s64
      %s66 = sshll.u32 [#allocation13], 4
      %s67 = int_to_ptr.vmem [resolvable:$true] %s66
      %72 = dma.hbm_to_vmem [thread:$0]  %s6, 16384, %s67, [#allocation14], 128, 128, 8
    $region25: #{tpu_custom_call.1} parent=1 // pred_fallthru
      _
    // Predicated region
    $region26: #{tpu_custom_call.1} parent=1 // pred_check
      _
    $region27: #{tpu_custom_call.1} parent=1 // pred_check_branch
      %74 = sbr.rel (0) target = $region29
    $region28: #{tpu_custom_call.1} parent=1 // pred_region
      _
    $region29: #{tpu_custom_call.1} parent=1 // pred_fallthru
      _
    // Predicated region
    $region30: #{tpu_custom_call.1} parent=1 // pred_check
      _
    $region31: #{tpu_custom_call.1} parent=1 // pred_check_branch
      %76 = sbr.rel (0) target = $region33
    $region32: #{tpu_custom_call.1} parent=1 // pred_region
      %77 = dma.done [#allocation8], 1024
    $region33: #{tpu_custom_call.1} parent=1 // pred_fallthru
      _
    // Predicated region
    $region34: #{tpu_custom_call.1} parent=1 // pred_check
      _
    $region35: #{tpu_custom_call.1} parent=1 // pred_check_branch
      %79 = sbr.rel (0) target = $region37
    $region36: #{tpu_custom_call.1} parent=1 // pred_region
      %80 = dma.done [#allocation11], 32768
    $region37: #{tpu_custom_call.1} parent=1 // pred_fallthru
      _
    // Predicated region
    $region38: #{tpu_custom_call.1} parent=1 // pred_check
      _
    $region39: #{tpu_custom_call.1} parent=1 // pred_check_branch
      %82 = sbr.rel (0) target = $region41
    $region40: #{tpu_custom_call.1} parent=1 // pred_region
      %83 = dma.done [#allocation11], 8192
    $region41: #{tpu_custom_call.1} parent=1 // pred_fallthru
      _
    // Predicated region
    $region42: #{tpu_custom_call.1} parent=1 // pred_check
      _
    $region43: #{tpu_custom_call.1} parent=1 // pred_check_branch
      %85 = sbr.rel (0) target = $region45
    $region44: #{tpu_custom_call.1} parent=1 // pred_region
      %86 = dma.done [#allocation14], 16384
    $region45: #{tpu_custom_call.1} parent=1 // pred_fallthru
      _
    %s88 = smul.u32 0, 16
    %v89 = vld [vmem:[#allocation7] sm:$0xff]
    %v90 = vld [vmem:[#allocation7 + $0x8] sm:$0xff]
    %v91 = vld [vmem:[#allocation7 + $0x10] sm:$0xff]
    %v92 = vld [vmem:[#allocation7 + $0x18] sm:$0xff]
    %v93 = vld [vmem:[#allocation7 + $0x20] sm:$0xff]
    %v94 = vld [vmem:[#allocation7 + $0x28] sm:$0xff]
    %v95 = vld [vmem:[#allocation7 + $0x30] sm:$0xff]
    %v96 = vld [vmem:[#allocation7 + $0x38] sm:$0xff]
    %v97 = vld [vmem:[#allocation10] sm:$0xff]
    %v98 = vld [vmem:[#allocation10 + $0x8] sm:$0xff]
    %v99 = vld [vmem:[#allocation10 + $0x10] sm:$0xff]
    %v100 = vld [vmem:[#allocation10 + $0x18] sm:$0xff]
    %v101 = vld [vmem:[#allocation10 + $0x20] sm:$0xff]
    %v102 = vld [vmem:[#allocation10 + $0x28] sm:$0xff]
    %v103 = vld [vmem:[#allocation10 + $0x30] sm:$0xff]
    %v104 = vld [vmem:[#allocation10 + $0x38] sm:$0xff]
    %v105 = vld [vmem:[#allocation10 + $0x40] sm:$0xff]
    %v106 = vld [vmem:[#allocation10 + $0x48] sm:$0xff]
    %v107 = vld [vmem:[#allocation10 + $0x50] sm:$0xff]
    %v108 = vld [vmem:[#allocation10 + $0x58] sm:$0xff]
    %v109 = vld [vmem:[#allocation10 + $0x60] sm:$0xff]
    %v110 = vld [vmem:[#allocation10 + $0x68] sm:$0xff]
    %v111 = vld [vmem:[#allocation10 + $0x70] sm:$0xff]
    %v112 = vld [vmem:[#allocation10 + $0x78] sm:$0xff]
    %v113 = vld [vmem:[#allocation10 + $0x80] sm:$0xff]
    %v114 = vld [vmem:[#allocation10 + $0x88] sm:$0xff]
    %v115 = vld [vmem:[#allocation10 + $0x90] sm:$0xff]
    %v116 = vld [vmem:[#allocation10 + $0x98] sm:$0xff]
    %v117 = vld [vmem:[#allocation10 + $0xa0] sm:$0xff]
    %v118 = vld [vmem:[#allocation10 + $0xa8] sm:$0xff]
    %v119 = vld [vmem:[#allocation10 + $0xb0] sm:$0xff]
    %v120 = vld [vmem:[#allocation10 + $0xb8] sm:$0xff]
    %v121 = vld [vmem:[#allocation10 + $0xc0] sm:$0xff]
    %v122 = vld [vmem:[#allocation10 + $0xc8] sm:$0xff]
    %v123 = vld [vmem:[#allocation10 + $0xd0] sm:$0xff]
    %v124 = vld [vmem:[#allocation10 + $0xd8] sm:$0xff]
    %v125 = vld [vmem:[#allocation10 + $0xe0] sm:$0xff]
    %v126 = vld [vmem:[#allocation10 + $0xe8] sm:$0xff]
    %v127 = vld [vmem:[#allocation10 + $0xf0] sm:$0xff]
    %v128 = vld [vmem:[#allocation10 + $0xf8] sm:$0xff]
    %v129 = vld [vmem:[#allocation10 + $0x100] sm:$0xff]
    %v130 = vld [vmem:[#allocation10 + $0x108] sm:$0xff]
    %v131 = vld [vmem:[#allocation10 + $0x110] sm:$0xff]
    %v132 = vld [vmem:[#allocation10 + $0x118] sm:$0xff]
    %v133 = vld [vmem:[#allocation10 + $0x120] sm:$0xff]
    %v134 = vld [vmem:[#allocation10 + $0x128] sm:$0xff]
    %v135 = vld [vmem:[#allocation10 + $0x130] sm:$0xff]
    %v136 = vld [vmem:[#allocation10 + $0x138] sm:$0xff]
    %v137 = vld [vmem:[#allocation10 + $0x140] sm:$0xff]
    %v138 = vld [vmem:[#allocation10 + $0x148] sm:$0xff]
    %v139 = vld [vmem:[#allocation10 + $0x150] sm:$0xff]
    %v140 = vld [vmem:[#allocation10 + $0x158] sm:$0xff]
    %v141 = vld [vmem:[#allocation10 + $0x160] sm:$0xff]
    %v142 = vld [vmem:[#allocation10 + $0x168] sm:$0xff]
    %v143 = vld [vmem:[#allocation10 + $0x170] sm:$0xff]
    %v144 = vld [vmem:[#allocation10 + $0x178] sm:$0xff]
    %v145 = vld [vmem:[#allocation10 + $0x180] sm:$0xff]
    %v146 = vld [vmem:[#allocation10 + $0x188] sm:$0xff]
    %v147 = vld [vmem:[#allocation10 + $0x190] sm:$0xff]
    %v148 = vld [vmem:[#allocation10 + $0x198] sm:$0xff]
    %v149 = vld [vmem:[#allocation10 + $0x1a0] sm:$0xff]
    %v150 = vld [vmem:[#allocation10 + $0x1a8] sm:$0xff]
    %v151 = vld [vmem:[#allocation10 + $0x1b0] sm:$0xff]
    %v152 = vld [vmem:[#allocation10 + $0x1b8] sm:$0xff]
    %v153 = vld [vmem:[#allocation10 + $0x1c0] sm:$0xff]
    %v154 = vld [vmem:[#allocation10 + $0x1c8] sm:$0xff]
    %v155 = vld [vmem:[#allocation10 + $0x1d0] sm:$0xff]
    %v156 = vld [vmem:[#allocation10 + $0x1d8] sm:$0xff]
    %v157 = vld [vmem:[#allocation10 + $0x1e0] sm:$0xff]
    %v158 = vld [vmem:[#allocation10 + $0x1e8] sm:$0xff]
    %v159 = vld [vmem:[#allocation10 + $0x1f0] sm:$0xff]
    %v160 = vld [vmem:[#allocation10 + $0x1f8] sm:$0xff]
    %v161 = vld [vmem:[#allocation10 + $0x200] sm:$0xff]
    %v162 = vld [vmem:[#allocation10 + $0x208] sm:$0xff]
    %v163 = vld [vmem:[#allocation10 + $0x210] sm:$0xff]
    %v164 = vld [vmem:[#allocation10 + $0x218] sm:$0xff]
    %v165 = vld [vmem:[#allocation10 + $0x220] sm:$0xff]
    %v166 = vld [vmem:[#allocation10 + $0x228] sm:$0xff]
    %v167 = vld [vmem:[#allocation10 + $0x230] sm:$0xff]
    %v168 = vld [vmem:[#allocation10 + $0x238] sm:$0xff]
    %v169 = vld [vmem:[#allocation10 + $0x240] sm:$0xff]
    %v170 = vld [vmem:[#allocation10 + $0x248] sm:$0xff]
    %v171 = vld [vmem:[#allocation10 + $0x250] sm:$0xff]
    %v172 = vld [vmem:[#allocation10 + $0x258] sm:$0xff]
    %v173 = vld [vmem:[#allocation10 + $0x260] sm:$0xff]
    %v174 = vld [vmem:[#allocation10 + $0x268] sm:$0xff]
    %v175 = vld [vmem:[#allocation10 + $0x270] sm:$0xff]
    %v176 = vld [vmem:[#allocation10 + $0x278] sm:$0xff]
    %v177 = vld [vmem:[#allocation10 + $0x280] sm:$0xff]
    %v178 = vld [vmem:[#allocation10 + $0x288] sm:$0xff]
    %v179 = vld [vmem:[#allocation10 + $0x290] sm:$0xff]
    %v180 = vld [vmem:[#allocation10 + $0x298] sm:$0xff]
    %v181 = vld [vmem:[#allocation10 + $0x2a0] sm:$0xff]
    %v182 = vld [vmem:[#allocation10 + $0x2a8] sm:$0xff]
    %v183 = vld [vmem:[#allocation10 + $0x2b0] sm:$0xff]
    %v184 = vld [vmem:[#allocation10 + $0x2b8] sm:$0xff]
    %v185 = vld [vmem:[#allocation10 + $0x2c0] sm:$0xff]
    %v186 = vld [vmem:[#allocation10 + $0x2c8] sm:$0xff]
    %v187 = vld [vmem:[#allocation10 + $0x2d0] sm:$0xff]
    %v188 = vld [vmem:[#allocation10 + $0x2d8] sm:$0xff]
    %v189 = vld [vmem:[#allocation10 + $0x2e0] sm:$0xff]
    %v190 = vld [vmem:[#allocation10 + $0x2e8] sm:$0xff]
    %v191 = vld [vmem:[#allocation10 + $0x2f0] sm:$0xff]
    %v192 = vld [vmem:[#allocation10 + $0x2f8] sm:$0xff]
    %v193 = vld [vmem:[#allocation10 + $0x300] sm:$0xff]
    %v194 = vld [vmem:[#allocation10 + $0x308] sm:$0xff]
    %v195 = vld [vmem:[#allocation10 + $0x310] sm:$0xff]
    %v196 = vld [vmem:[#allocation10 + $0x318] sm:$0xff]
    %v197 = vld [vmem:[#allocation10 + $0x320] sm:$0xff]
    %v198 = vld [vmem:[#allocation10 + $0x328] sm:$0xff]
    %v199 = vld [vmem:[#allocation10 + $0x330] sm:$0xff]
    %v200 = vld [vmem:[#allocation10 + $0x338] sm:$0xff]
    %v201 = vld [vmem:[#allocation10 + $0x340] sm:$0xff]
    %v202 = vld [vmem:[#allocation10 + $0x348] sm:$0xff]
    %v203 = vld [vmem:[#allocation10 + $0x350] sm:$0xff]
    %v204 = vld [vmem:[#allocation10 + $0x358] sm:$0xff]
    %v205 = vld [vmem:[#allocation10 + $0x360] sm:$0xff]
    %v206 = vld [vmem:[#allocation10 + $0x368] sm:$0xff]
    %v207 = vld [vmem:[#allocation10 + $0x370] sm:$0xff]
    %v208 = vld [vmem:[#allocation10 + $0x378] sm:$0xff]
    %v209 = vld [vmem:[#allocation10 + $0x380] sm:$0xff]
    %v210 = vld [vmem:[#allocation10 + $0x388] sm:$0xff]
    %v211 = vld [vmem:[#allocation10 + $0x390] sm:$0xff]
    %v212 = vld [vmem:[#allocation10 + $0x398] sm:$0xff]
    %v213 = vld [vmem:[#allocation10 + $0x3a0] sm:$0xff]
    %v214 = vld [vmem:[#allocation10 + $0x3a8] sm:$0xff]
    %v215 = vld [vmem:[#allocation10 + $0x3b0] sm:$0xff]
    %v216 = vld [vmem:[#allocation10 + $0x3b8] sm:$0xff]
    %v217 = vld [vmem:[#allocation10 + $0x3c0] sm:$0xff]
    %v218 = vld [vmem:[#allocation10 + $0x3c8] sm:$0xff]
    %v219 = vld [vmem:[#allocation10 + $0x3d0] sm:$0xff]
    %v220 = vld [vmem:[#allocation10 + $0x3d8] sm:$0xff]
    %v221 = vld [vmem:[#allocation10 + $0x3e0] sm:$0xff]
    %v222 = vld [vmem:[#allocation10 + $0x3e8] sm:$0xff]
    %v223 = vld [vmem:[#allocation10 + $0x3f0] sm:$0xff]
    %v224 = vld [vmem:[#allocation10 + $0x3f8] sm:$0xff]
    %v225 = vld [vmem:[#allocation10 + $0x400] sm:$0xff]
    %v226 = vld [vmem:[#allocation10 + $0x408] sm:$0xff]
    %v227 = vld [vmem:[#allocation10 + $0x410] sm:$0xff]
    %v228 = vld [vmem:[#allocation10 + $0x418] sm:$0xff]
    %v229 = vld [vmem:[#allocation10 + $0x420] sm:$0xff]
    %v230 = vld [vmem:[#allocation10 + $0x428] sm:$0xff]
    %v231 = vld [vmem:[#allocation10 + $0x430] sm:$0xff]
    %v232 = vld [vmem:[#allocation10 + $0x438] sm:$0xff]
    %v233 = vld [vmem:[#allocation10 + $0x440] sm:$0xff]
    %v234 = vld [vmem:[#allocation10 + $0x448] sm:$0xff]
    %v235 = vld [vmem:[#allocation10 + $0x450] sm:$0xff]
    %v236 = vld [vmem:[#allocation10 + $0x458] sm:$0xff]
    %v237 = vld [vmem:[#allocation10 + $0x460] sm:$0xff]
    %v238 = vld [vmem:[#allocation10 + $0x468] sm:$0xff]
    %v239 = vld [vmem:[#allocation10 + $0x470] sm:$0xff]
    %v240 = vld [vmem:[#allocation10 + $0x478] sm:$0xff]
    %v241 = vld [vmem:[#allocation10 + $0x480] sm:$0xff]
    %v242 = vld [vmem:[#allocation10 + $0x488] sm:$0xff]
    %v243 = vld [vmem:[#allocation10 + $0x490] sm:$0xff]
    %v244 = vld [vmem:[#allocation10 + $0x498] sm:$0xff]
    %v245 = vld [vmem:[#allocation10 + $0x4a0] sm:$0xff]
    %v246 = vld [vmem:[#allocation10 + $0x4a8] sm:$0xff]
    %v247 = vld [vmem:[#allocation10 + $0x4b0] sm:$0xff]
    %v248 = vld [vmem:[#allocation10 + $0x4b8] sm:$0xff]
    %v249 = vld [vmem:[#allocation10 + $0x4c0] sm:$0xff]
    %v250 = vld [vmem:[#allocation10 + $0x4c8] sm:$0xff]
    %v251 = vld [vmem:[#allocation10 + $0x4d0] sm:$0xff]
    %v252 = vld [vmem:[#allocation10 + $0x4d8] sm:$0xff]
    %v253 = vld [vmem:[#allocation10 + $0x4e0] sm:$0xff]
    %v254 = vld [vmem:[#allocation10 + $0x4e8] sm:$0xff]
    %v255 = vld [vmem:[#allocation10 + $0x4f0] sm:$0xff]
    %v256 = vld [vmem:[#allocation10 + $0x4f8] sm:$0xff]
    %v257 = vld [vmem:[#allocation10 + $0x500] sm:$0xff]
    %v258 = vld [vmem:[#allocation10 + $0x508] sm:$0xff]
    %v259 = vld [vmem:[#allocation10 + $0x510] sm:$0xff]
    %v260 = vld [vmem:[#allocation10 + $0x518] sm:$0xff]
    %v261 = vld [vmem:[#allocation10 + $0x520] sm:$0xff]
    %v262 = vld [vmem:[#allocation10 + $0x528] sm:$0xff]
    %v263 = vld [vmem:[#allocation10 + $0x530] sm:$0xff]
    %v264 = vld [vmem:[#allocation10 + $0x538] sm:$0xff]
    %v265 = vld [vmem:[#allocation10 + $0x540] sm:$0xff]
    %v266 = vld [vmem:[#allocation10 + $0x548] sm:$0xff]
    %v267 = vld [vmem:[#allocation10 + $0x550] sm:$0xff]
    %v268 = vld [vmem:[#allocation10 + $0x558] sm:$0xff]
    %v269 = vld [vmem:[#allocation10 + $0x560] sm:$0xff]
    %v270 = vld [vmem:[#allocation10 + $0x568] sm:$0xff]
    %v271 = vld [vmem:[#allocation10 + $0x570] sm:$0xff]
    %v272 = vld [vmem:[#allocation10 + $0x578] sm:$0xff]
    %v273 = vld [vmem:[#allocation10 + $0x580] sm:$0xff]
    %v274 = vld [vmem:[#allocation10 + $0x588] sm:$0xff]
    %v275 = vld [vmem:[#allocation10 + $0x590] sm:$0xff]
    %v276 = vld [vmem:[#allocation10 + $0x598] sm:$0xff]
    %v277 = vld [vmem:[#allocation10 + $0x5a0] sm:$0xff]
    %v278 = vld [vmem:[#allocation10 + $0x5a8] sm:$0xff]
    %v279 = vld [vmem:[#allocation10 + $0x5b0] sm:$0xff]
    %v280 = vld [vmem:[#allocation10 + $0x5b8] sm:$0xff]
    %v281 = vld [vmem:[#allocation10 + $0x5c0] sm:$0xff]
    %v282 = vld [vmem:[#allocation10 + $0x5c8] sm:$0xff]
    %v283 = vld [vmem:[#allocation10 + $0x5d0] sm:$0xff]
    %v284 = vld [vmem:[#allocation10 + $0x5d8] sm:$0xff]
    %v285 = vld [vmem:[#allocation10 + $0x5e0] sm:$0xff]
    %v286 = vld [vmem:[#allocation10 + $0x5e8] sm:$0xff]
    %v287 = vld [vmem:[#allocation10 + $0x5f0] sm:$0xff]
    %v288 = vld [vmem:[#allocation10 + $0x5f8] sm:$0xff]
    %v289 = vld [vmem:[#allocation10 + $0x600] sm:$0xff]
    %v290 = vld [vmem:[#allocation10 + $0x608] sm:$0xff]
    %v291 = vld [vmem:[#allocation10 + $0x610] sm:$0xff]
    %v292 = vld [vmem:[#allocation10 + $0x618] sm:$0xff]
    %v293 = vld [vmem:[#allocation10 + $0x620] sm:$0xff]
    %v294 = vld [vmem:[#allocation10 + $0x628] sm:$0xff]
    %v295 = vld [vmem:[#allocation10 + $0x630] sm:$0xff]
    %v296 = vld [vmem:[#allocation10 + $0x638] sm:$0xff]
    %v297 = vld [vmem:[#allocation10 + $0x640] sm:$0xff]
    %v298 = vld [vmem:[#allocation10 + $0x648] sm:$0xff]
    %v299 = vld [vmem:[#allocation10 + $0x650] sm:$0xff]
    %v300 = vld [vmem:[#allocation10 + $0x658] sm:$0xff]
    %v301 = vld [vmem:[#allocation10 + $0x660] sm:$0xff]
    %v302 = vld [vmem:[#allocation10 + $0x668] sm:$0xff]
    %v303 = vld [vmem:[#allocation10 + $0x670] sm:$0xff]
    %v304 = vld [vmem:[#allocation10 + $0x678] sm:$0xff]
    %v305 = vld [vmem:[#allocation10 + $0x680] sm:$0xff]
    %v306 = vld [vmem:[#allocation10 + $0x688] sm:$0xff]
    %v307 = vld [vmem:[#allocation10 + $0x690] sm:$0xff]
    %v308 = vld [vmem:[#allocation10 + $0x698] sm:$0xff]
    %v309 = vld [vmem:[#allocation10 + $0x6a0] sm:$0xff]
    %v310 = vld [vmem:[#allocation10 + $0x6a8] sm:$0xff]
    %v311 = vld [vmem:[#allocation10 + $0x6b0] sm:$0xff]
    %v312 = vld [vmem:[#allocation10 + $0x6b8] sm:$0xff]
    %v313 = vld [vmem:[#allocation10 + $0x6c0] sm:$0xff]
    %v314 = vld [vmem:[#allocation10 + $0x6c8] sm:$0xff]
    %v315 = vld [vmem:[#allocation10 + $0x6d0] sm:$0xff]
    %v316 = vld [vmem:[#allocation10 + $0x6d8] sm:$0xff]
    %v317 = vld [vmem:[#allocation10 + $0x6e0] sm:$0xff]
    %v318 = vld [vmem:[#allocation10 + $0x6e8] sm:$0xff]
    %v319 = vld [vmem:[#allocation10 + $0x6f0] sm:$0xff]
    %v320 = vld [vmem:[#allocation10 + $0x6f8] sm:$0xff]
    %v321 = vld [vmem:[#allocation10 + $0x700] sm:$0xff]
    %v322 = vld [vmem:[#allocation10 + $0x708] sm:$0xff]
    %v323 = vld [vmem:[#allocation10 + $0x710] sm:$0xff]
    %v324 = vld [vmem:[#allocation10 + $0x718] sm:$0xff]
    %v325 = vld [vmem:[#allocation10 + $0x720] sm:$0xff]
    %v326 = vld [vmem:[#allocation10 + $0x728] sm:$0xff]
    %v327 = vld [vmem:[#allocation10 + $0x730] sm:$0xff]
    %v328 = vld [vmem:[#allocation10 + $0x738] sm:$0xff]
    %v329 = vld [vmem:[#allocation10 + $0x740] sm:$0xff]
    %v330 = vld [vmem:[#allocation10 + $0x748] sm:$0xff]
    %v331 = vld [vmem:[#allocation10 + $0x750] sm:$0xff]
    %v332 = vld [vmem:[#allocation10 + $0x758] sm:$0xff]
    %v333 = vld [vmem:[#allocation10 + $0x760] sm:$0xff]
    %v334 = vld [vmem:[#allocation10 + $0x768] sm:$0xff]
    %v335 = vld [vmem:[#allocation10 + $0x770] sm:$0xff]
    %v336 = vld [vmem:[#allocation10 + $0x778] sm:$0xff]
    %v337 = vld [vmem:[#allocation10 + $0x780] sm:$0xff]
    %v338 = vld [vmem:[#allocation10 + $0x788] sm:$0xff]
    %v339 = vld [vmem:[#allocation10 + $0x790] sm:$0xff]
    %v340 = vld [vmem:[#allocation10 + $0x798] sm:$0xff]
    %v341 = vld [vmem:[#allocation10 + $0x7a0] sm:$0xff]
    %v342 = vld [vmem:[#allocation10 + $0x7a8] sm:$0xff]
    %v343 = vld [vmem:[#allocation10 + $0x7b0] sm:$0xff]
    %v344 = vld [vmem:[#allocation10 + $0x7b8] sm:$0xff]
    %v345 = vld [vmem:[#allocation10 + $0x7c0] sm:$0xff]
    %v346 = vld [vmem:[#allocation10 + $0x7c8] sm:$0xff]
    %v347 = vld [vmem:[#allocation10 + $0x7d0] sm:$0xff]
    %v348 = vld [vmem:[#allocation10 + $0x7d8] sm:$0xff]
    %v349 = vld [vmem:[#allocation10 + $0x7e0] sm:$0xff]
    %v350 = vld [vmem:[#allocation10 + $0x7e8] sm:$0xff]
    %v351 = vld [vmem:[#allocation10 + $0x7f0] sm:$0xff]
    %v352 = vld [vmem:[#allocation10 + $0x7f8] sm:$0xff]
    %v353 = vld [vmem:[%s3] sm:$0xf]
    %v355 = vlaneseq
    %v356 = vshrl.u32 %v355, 7
    %v357 = vsub.s32 0, %v356
    %v358 = vrot.slane %v353, %v357
    %v359 = vlaneseq
    %v360 = vshrl.u32 %v359, 7
    %v361 = vsub.s32 1, %v360
    %v362 = vrot.slane %v353, %v361
    %v363 = vlaneseq
    %v364 = vshrl.u32 %v363, 7
    %v365 = vsub.s32 2, %v364
    %v366 = vrot.slane %v353, %v365
    %v367 = vlaneseq
    %v368 = vshrl.u32 %v367, 7
    %v369 = vsub.s32 3, %v368
    %v370 = vrot.slane %v353, %v369
    %v383 = vunpack.c.l.b16 %v89
    %v384 = vunpack.c.h.b16 %v89
    %v385 = vunpack.c.l.b16 %v90
    %v386 = vunpack.c.h.b16 %v90
    %v387 = vunpack.c.l.b16 %v91
    %v388 = vunpack.c.h.b16 %v91
    %v389 = vunpack.c.l.b16 %v92
    %v390 = vunpack.c.h.b16 %v92
    %v391 = vunpack.c.l.b16 %v93
    %v392 = vunpack.c.h.b16 %v93
    %v393 = vunpack.c.l.b16 %v94
    %v394 = vunpack.c.h.b16 %v94
    %v395 = vunpack.c.l.b16 %v95
    %v396 = vunpack.c.h.b16 %v95
    %v397 = vunpack.c.l.b16 %v96
    %v398 = vunpack.c.h.b16 %v96
    %v399 = vpack.c.b16 %v391, %v383
    %v400 = vpack.c.b16 %v392, %v384
    %v401 = vpack.c.b16 %v393, %v385
    %v402 = vpack.c.b16 %v394, %v386
    %v403 = vpack.c.b16 %v395, %v387
    %v404 = vpack.c.b16 %v396, %v388
    %v405 = vpack.c.b16 %v397, %v389
    %v406 = vpack.c.b16 %v398, %v390
    %v671 = vunpack.c.l.b16 %v97
    %v672 = vunpack.c.h.b16 %v97
    %v673 = vunpack.c.l.b16 %v98
    %v674 = vunpack.c.h.b16 %v98
    %v675 = vunpack.c.l.b16 %v99
    %v676 = vunpack.c.h.b16 %v99
    %v677 = vunpack.c.l.b16 %v100
    %v678 = vunpack.c.h.b16 %v100
    %v679 = vunpack.c.l.b16 %v101
    %v680 = vunpack.c.h.b16 %v101
    %v681 = vunpack.c.l.b16 %v102
    %v682 = vunpack.c.h.b16 %v102
    %v683 = vunpack.c.l.b16 %v103
    %v684 = vunpack.c.h.b16 %v103
    %v685 = vunpack.c.l.b16 %v104
    %v686 = vunpack.c.h.b16 %v104
    %v687 = vunpack.c.l.b16 %v105
    %v688 = vunpack.c.h.b16 %v105
    %v689 = vunpack.c.l.b16 %v106
    %v690 = vunpack.c.h.b16 %v106
    %v691 = vunpack.c.l.b16 %v107
    %v692 = vunpack.c.h.b16 %v107
    %v693 = vunpack.c.l.b16 %v108
    %v694 = vunpack.c.h.b16 %v108
    %v695 = vunpack.c.l.b16 %v109
    %v696 = vunpack.c.h.b16 %v109
    %v697 = vunpack.c.l.b16 %v110
    %v698 = vunpack.c.h.b16 %v110
    %v699 = vunpack.c.l.b16 %v111
    %v700 = vunpack.c.h.b16 %v111
    %v701 = vunpack.c.l.b16 %v112
    %v702 = vunpack.c.h.b16 %v112
    %v703 = vunpack.c.l.b16 %v113
    %v704 = vunpack.c.h.b16 %v113
    %v705 = vunpack.c.l.b16 %v114
    %v706 = vunpack.c.h.b16 %v114
    %v707 = vunpack.c.l.b16 %v115
    %v708 = vunpack.c.h.b16 %v115
    %v709 = vunpack.c.l.b16 %v116
    %v710 = vunpack.c.h.b16 %v116
    %v711 = vunpack.c.l.b16 %v117
    %v712 = vunpack.c.h.b16 %v117
    %v713 = vunpack.c.l.b16 %v118
    %v714 = vunpack.c.h.b16 %v118
    %v715 = vunpack.c.l.b16 %v119
    %v716 = vunpack.c.h.b16 %v119
    %v717 = vunpack.c.l.b16 %v120
    %v718 = vunpack.c.h.b16 %v120
    %v719 = vunpack.c.l.b16 %v121
    %v720 = vunpack.c.h.b16 %v121
    %v721 = vunpack.c.l.b16 %v122
    %v722 = vunpack.c.h.b16 %v122
    %v723 = vunpack.c.l.b16 %v123
    %v724 = vunpack.c.h.b16 %v123
    %v725 = vunpack.c.l.b16 %v124
    %v726 = vunpack.c.h.b16 %v124
    %v727 = vunpack.c.l.b16 %v125
    %v728 = vunpack.c.h.b16 %v125
    %v729 = vunpack.c.l.b16 %v126
    %v730 = vunpack.c.h.b16 %v126
    %v731 = vunpack.c.l.b16 %v127
    %v732 = vunpack.c.h.b16 %v127
    %v733 = vunpack.c.l.b16 %v128
    %v734 = vunpack.c.h.b16 %v128
    %v735 = vunpack.c.l.b16 %v129
    %v736 = vunpack.c.h.b16 %v129
    %v737 = vunpack.c.l.b16 %v130
    %v738 = vunpack.c.h.b16 %v130
    %v739 = vunpack.c.l.b16 %v131
    %v740 = vunpack.c.h.b16 %v131
    %v741 = vunpack.c.l.b16 %v132
    %v742 = vunpack.c.h.b16 %v132
    %v743 = vunpack.c.l.b16 %v133
    %v744 = vunpack.c.h.b16 %v133
    %v745 = vunpack.c.l.b16 %v134
    %v746 = vunpack.c.h.b16 %v134
    %v747 = vunpack.c.l.b16 %v135
    %v748 = vunpack.c.h.b16 %v135
    %v749 = vunpack.c.l.b16 %v136
    %v750 = vunpack.c.h.b16 %v136
    %v751 = vunpack.c.l.b16 %v137
    %v752 = vunpack.c.h.b16 %v137
    %v753 = vunpack.c.l.b16 %v138
    %v754 = vunpack.c.h.b16 %v138
    %v755 = vunpack.c.l.b16 %v139
    %v756 = vunpack.c.h.b16 %v139
    %v757 = vunpack.c.l.b16 %v140
    %v758 = vunpack.c.h.b16 %v140
    %v759 = vunpack.c.l.b16 %v141
    %v760 = vunpack.c.h.b16 %v141
    %v761 = vunpack.c.l.b16 %v142
    %v762 = vunpack.c.h.b16 %v142
    %v763 = vunpack.c.l.b16 %v143
    %v764 = vunpack.c.h.b16 %v143
    %v765 = vunpack.c.l.b16 %v144
    %v766 = vunpack.c.h.b16 %v144
    %v767 = vunpack.c.l.b16 %v145
    %v768 = vunpack.c.h.b16 %v145
    %v769 = vunpack.c.l.b16 %v146
    %v770 = vunpack.c.h.b16 %v146
    %v771 = vunpack.c.l.b16 %v147
    %v772 = vunpack.c.h.b16 %v147
    %v773 = vunpack.c.l.b16 %v148
    %v774 = vunpack.c.h.b16 %v148
    %v775 = vunpack.c.l.b16 %v149
    %v776 = vunpack.c.h.b16 %v149
    %v777 = vunpack.c.l.b16 %v150
    %v778 = vunpack.c.h.b16 %v150
    %v779 = vunpack.c.l.b16 %v151
    %v780 = vunpack.c.h.b16 %v151
    %v781 = vunpack.c.l.b16 %v152
    %v782 = vunpack.c.h.b16 %v152
    %v783 = vunpack.c.l.b16 %v153
    %v784 = vunpack.c.h.b16 %v153
    %v785 = vunpack.c.l.b16 %v154
    %v786 = vunpack.c.h.b16 %v154
    %v787 = vunpack.c.l.b16 %v155
    %v788 = vunpack.c.h.b16 %v155
    %v789 = vunpack.c.l.b16 %v156
    %v790 = vunpack.c.h.b16 %v156
    %v791 = vunpack.c.l.b16 %v157
    %v792 = vunpack.c.h.b16 %v157
    %v793 = vunpack.c.l.b16 %v158
    %v794 = vunpack.c.h.b16 %v158
    %v795 = vunpack.c.l.b16 %v159
    %v796 = vunpack.c.h.b16 %v159
    %v797 = vunpack.c.l.b16 %v160
    %v798 = vunpack.c.h.b16 %v160
    %v799 = vunpack.c.l.b16 %v161
    %v800 = vunpack.c.h.b16 %v161
    %v801 = vunpack.c.l.b16 %v162
    %v802 = vunpack.c.h.b16 %v162
    %v803 = vunpack.c.l.b16 %v163
    %v804 = vunpack.c.h.b16 %v163
    %v805 = vunpack.c.l.b16 %v164
    %v806 = vunpack.c.h.b16 %v164
    %v807 = vunpack.c.l.b16 %v165
    %v808 = vunpack.c.h.b16 %v165
    %v809 = vunpack.c.l.b16 %v166
    %v810 = vunpack.c.h.b16 %v166
    %v811 = vunpack.c.l.b16 %v167
    %v812 = vunpack.c.h.b16 %v167
    %v813 = vunpack.c.l.b16 %v168
    %v814 = vunpack.c.h.b16 %v168
    %v815 = vunpack.c.l.b16 %v169
    %v816 = vunpack.c.h.b16 %v169
    %v817 = vunpack.c.l.b16 %v170
    %v818 = vunpack.c.h.b16 %v170
    %v819 = vunpack.c.l.b16 %v171
    %v820 = vunpack.c.h.b16 %v171
    %v821 = vunpack.c.l.b16 %v172
    %v822 = vunpack.c.h.b16 %v172
    %v823 = vunpack.c.l.b16 %v173
    %v824 = vunpack.c.h.b16 %v173
    %v825 = vunpack.c.l.b16 %v174
    %v826 = vunpack.c.h.b16 %v174
    %v827 = vunpack.c.l.b16 %v175
    %v828 = vunpack.c.h.b16 %v175
    %v829 = vunpack.c.l.b16 %v176
    %v830 = vunpack.c.h.b16 %v176
    %v831 = vunpack.c.l.b16 %v177
    %v832 = vunpack.c.h.b16 %v177
    %v833 = vunpack.c.l.b16 %v178
    %v834 = vunpack.c.h.b16 %v178
    %v835 = vunpack.c.l.b16 %v179
    %v836 = vunpack.c.h.b16 %v179
    %v837 = vunpack.c.l.b16 %v180
    %v838 = vunpack.c.h.b16 %v180
    %v839 = vunpack.c.l.b16 %v181
    %v840 = vunpack.c.h.b16 %v181
    %v841 = vunpack.c.l.b16 %v182
    %v842 = vunpack.c.h.b16 %v182
    %v843 = vunpack.c.l.b16 %v183
    %v844 = vunpack.c.h.b16 %v183
    %v845 = vunpack.c.l.b16 %v184
    %v846 = vunpack.c.h.b16 %v184
    %v847 = vunpack.c.l.b16 %v185
    %v848 = vunpack.c.h.b16 %v185
    %v849 = vunpack.c.l.b16 %v186
    %v850 = vunpack.c.h.b16 %v186
    %v851 = vunpack.c.l.b16 %v187
    %v852 = vunpack.c.h.b16 %v187
    %v853 = vunpack.c.l.b16 %v188
    %v854 = vunpack.c.h.b16 %v188
    %v855 = vunpack.c.l.b16 %v189
    %v856 = vunpack.c.h.b16 %v189
    %v857 = vunpack.c.l.b16 %v190
    %v858 = vunpack.c.h.b16 %v190
    %v859 = vunpack.c.l.b16 %v191
    %v860 = vunpack.c.h.b16 %v191
    %v861 = vunpack.c.l.b16 %v192
    %v862 = vunpack.c.h.b16 %v192
    %v863 = vunpack.c.l.b16 %v193
    %v864 = vunpack.c.h.b16 %v193
    %v865 = vunpack.c.l.b16 %v194
    %v866 = vunpack.c.h.b16 %v194
    %v867 = vunpack.c.l.b16 %v195
    %v868 = vunpack.c.h.b16 %v195
    %v869 = vunpack.c.l.b16 %v196
    %v870 = vunpack.c.h.b16 %v196
    %v871 = vunpack.c.l.b16 %v197
    %v872 = vunpack.c.h.b16 %v197
    %v873 = vunpack.c.l.b16 %v198
    %v874 = vunpack.c.h.b16 %v198
    %v875 = vunpack.c.l.b16 %v199
    %v876 = vunpack.c.h.b16 %v199
    %v877 = vunpack.c.l.b16 %v200
    %v878 = vunpack.c.h.b16 %v200
    %v879 = vunpack.c.l.b16 %v201
    %v880 = vunpack.c.h.b16 %v201
    %v881 = vunpack.c.l.b16 %v202
    %v882 = vunpack.c.h.b16 %v202
    %v883 = vunpack.c.l.b16 %v203
    %v884 = vunpack.c.h.b16 %v203
    %v885 = vunpack.c.l.b16 %v204
    %v886 = vunpack.c.h.b16 %v204
    %v887 = vunpack.c.l.b16 %v205
    %v888 = vunpack.c.h.b16 %v205
    %v889 = vunpack.c.l.b16 %v206
    %v890 = vunpack.c.h.b16 %v206
    %v891 = vunpack.c.l.b16 %v207
    %v892 = vunpack.c.h.b16 %v207
    %v893 = vunpack.c.l.b16 %v208
    %v894 = vunpack.c.h.b16 %v208
    %v895 = vunpack.c.l.b16 %v209
    %v896 = vunpack.c.h.b16 %v209
    %v897 = vunpack.c.l.b16 %v210
    %v898 = vunpack.c.h.b16 %v210
    %v899 = vunpack.c.l.b16 %v211
    %v900 = vunpack.c.h.b16 %v211
    %v901 = vunpack.c.l.b16 %v212
    %v902 = vunpack.c.h.b16 %v212
    %v903 = vunpack.c.l.b16 %v213
    %v904 = vunpack.c.h.b16 %v213
    %v905 = vunpack.c.l.b16 %v214
    %v906 = vunpack.c.h.b16 %v214
    %v907 = vunpack.c.l.b16 %v215
    %v908 = vunpack.c.h.b16 %v215
    %v909 = vunpack.c.l.b16 %v216
    %v910 = vunpack.c.h.b16 %v216
    %v911 = vunpack.c.l.b16 %v217
    %v912 = vunpack.c.h.b16 %v217
    %v913 = vunpack.c.l.b16 %v218
    %v914 = vunpack.c.h.b16 %v218
    %v915 = vunpack.c.l.b16 %v219
    %v916 = vunpack.c.h.b16 %v219
    %v917 = vunpack.c.l.b16 %v220
    %v918 = vunpack.c.h.b16 %v220
    %v919 = vunpack.c.l.b16 %v221
    %v920 = vunpack.c.h.b16 %v221
    %v921 = vunpack.c.l.b16 %v222
    %v922 = vunpack.c.h.b16 %v222
    %v923 = vunpack.c.l.b16 %v223
    %v924 = vunpack.c.h.b16 %v223
    %v925 = vunpack.c.l.b16 %v224
    %v926 = vunpack.c.h.b16 %v224
    %v927 = vunpack.c.l.b16 %v225
    %v928 = vunpack.c.h.b16 %v225
    %v929 = vunpack.c.l.b16 %v226
    %v930 = vunpack.c.h.b16 %v226
    %v931 = vunpack.c.l.b16 %v227
    %v932 = vunpack.c.h.b16 %v227
    %v933 = vunpack.c.l.b16 %v228
    %v934 = vunpack.c.h.b16 %v228
    %v935 = vunpack.c.l.b16 %v229
    %v936 = vunpack.c.h.b16 %v229
    %v937 = vunpack.c.l.b16 %v230
    %v938 = vunpack.c.h.b16 %v230
    %v939 = vunpack.c.l.b16 %v231
    %v940 = vunpack.c.h.b16 %v231
    %v941 = vunpack.c.l.b16 %v232
    %v942 = vunpack.c.h.b16 %v232
    %v943 = vunpack.c.l.b16 %v233
    %v944 = vunpack.c.h.b16 %v233
    %v945 = vunpack.c.l.b16 %v234
    %v946 = vunpack.c.h.b16 %v234
    %v947 = vunpack.c.l.b16 %v235
    %v948 = vunpack.c.h.b16 %v235
    %v949 = vunpack.c.l.b16 %v236
    %v950 = vunpack.c.h.b16 %v236
    %v951 = vunpack.c.l.b16 %v237
    %v952 = vunpack.c.h.b16 %v237
    %v953 = vunpack.c.l.b16 %v238
    %v954 = vunpack.c.h.b16 %v238
    %v955 = vunpack.c.l.b16 %v239
    %v956 = vunpack.c.h.b16 %v239
    %v957 = vunpack.c.l.b16 %v240
    %v958 = vunpack.c.h.b16 %v240
    %v959 = vunpack.c.l.b16 %v241
    %v960 = vunpack.c.h.b16 %v241
    %v961 = vunpack.c.l.b16 %v242
    %v962 = vunpack.c.h.b16 %v242
    %v963 = vunpack.c.l.b16 %v243
    %v964 = vunpack.c.h.b16 %v243
    %v965 = vunpack.c.l.b16 %v244
    %v966 = vunpack.c.h.b16 %v244
    %v967 = vunpack.c.l.b16 %v245
    %v968 = vunpack.c.h.b16 %v245
    %v969 = vunpack.c.l.b16 %v246
    %v970 = vunpack.c.h.b16 %v246
    %v971 = vunpack.c.l.b16 %v247
    %v972 = vunpack.c.h.b16 %v247
    %v973 = vunpack.c.l.b16 %v248
    %v974 = vunpack.c.h.b16 %v248
    %v975 = vunpack.c.l.b16 %v249
    %v976 = vunpack.c.h.b16 %v249
    %v977 = vunpack.c.l.b16 %v250
    %v978 = vunpack.c.h.b16 %v250
    %v979 = vunpack.c.l.b16 %v251
    %v980 = vunpack.c.h.b16 %v251
    %v981 = vunpack.c.l.b16 %v252
    %v982 = vunpack.c.h.b16 %v252
    %v983 = vunpack.c.l.b16 %v253
    %v984 = vunpack.c.h.b16 %v253
    %v985 = vunpack.c.l.b16 %v254
    %v986 = vunpack.c.h.b16 %v254
    %v987 = vunpack.c.l.b16 %v255
    %v988 = vunpack.c.h.b16 %v255
    %v989 = vunpack.c.l.b16 %v256
    %v990 = vunpack.c.h.b16 %v256
    %v991 = vunpack.c.l.b16 %v257
    %v992 = vunpack.c.h.b16 %v257
    %v993 = vunpack.c.l.b16 %v258
    %v994 = vunpack.c.h.b16 %v258
    %v995 = vunpack.c.l.b16 %v259
    %v996 = vunpack.c.h.b16 %v259
    %v997 = vunpack.c.l.b16 %v260
    %v998 = vunpack.c.h.b16 %v260
    %v999 = vunpack.c.l.b16 %v261
    %v1000 = vunpack.c.h.b16 %v261
    %v1001 = vunpack.c.l.b16 %v262
    %v1002 = vunpack.c.h.b16 %v262
    %v1003 = vunpack.c.l.b16 %v263
    %v1004 = vunpack.c.h.b16 %v263
    %v1005 = vunpack.c.l.b16 %v264
    %v1006 = vunpack.c.h.b16 %v264
    %v1007 = vunpack.c.l.b16 %v265
    %v1008 = vunpack.c.h.b16 %v265
    %v1009 = vunpack.c.l.b16 %v266
    %v1010 = vunpack.c.h.b16 %v266
    %v1011 = vunpack.c.l.b16 %v267
    %v1012 = vunpack.c.h.b16 %v267
    %v1013 = vunpack.c.l.b16 %v268
    %v1014 = vunpack.c.h.b16 %v268
    %v1015 = vunpack.c.l.b16 %v269
    %v1016 = vunpack.c.h.b16 %v269
    %v1017 = vunpack.c.l.b16 %v270
    %v1018 = vunpack.c.h.b16 %v270
    %v1019 = vunpack.c.l.b16 %v271
    %v1020 = vunpack.c.h.b16 %v271
    %v1021 = vunpack.c.l.b16 %v272
    %v1022 = vunpack.c.h.b16 %v272
    %v1023 = vunpack.c.l.b16 %v273
    %v1024 = vunpack.c.h.b16 %v273
    %v1025 = vunpack.c.l.b16 %v274
    %v1026 = vunpack.c.h.b16 %v274
    %v1027 = vunpack.c.l.b16 %v275
    %v1028 = vunpack.c.h.b16 %v275
    %v1029 = vunpack.c.l.b16 %v276
    %v1030 = vunpack.c.h.b16 %v276
    %v1031 = vunpack.c.l.b16 %v277
    %v1032 = vunpack.c.h.b16 %v277
    %v1033 = vunpack.c.l.b16 %v278
    %v1034 = vunpack.c.h.b16 %v278
    %v1035 = vunpack.c.l.b16 %v279
    %v1036 = vunpack.c.h.b16 %v279
    %v1037 = vunpack.c.l.b16 %v280
    %v1038 = vunpack.c.h.b16 %v280
    %v1039 = vunpack.c.l.b16 %v281
    %v1040 = vunpack.c.h.b16 %v281
    %v1041 = vunpack.c.l.b16 %v282
    %v1042 = vunpack.c.h.b16 %v282
    %v1043 = vunpack.c.l.b16 %v283
    %v1044 = vunpack.c.h.b16 %v283
    %v1045 = vunpack.c.l.b16 %v284
    %v1046 = vunpack.c.h.b16 %v284
    %v1047 = vunpack.c.l.b16 %v285
    %v1048 = vunpack.c.h.b16 %v285
    %v1049 = vunpack.c.l.b16 %v286
    %v1050 = vunpack.c.h.b16 %v286
    %v1051 = vunpack.c.l.b16 %v287
    %v1052 = vunpack.c.h.b16 %v287
    %v1053 = vunpack.c.l.b16 %v288
    %v1054 = vunpack.c.h.b16 %v288
    %v1055 = vunpack.c.l.b16 %v289
    %v1056 = vunpack.c.h.b16 %v289
    %v1057 = vunpack.c.l.b16 %v290
    %v1058 = vunpack.c.h.b16 %v290
    %v1059 = vunpack.c.l.b16 %v291
    %v1060 = vunpack.c.h.b16 %v291
    %v1061 = vunpack.c.l.b16 %v292
    %v1062 = vunpack.c.h.b16 %v292
    %v1063 = vunpack.c.l.b16 %v293
    %v1064 = vunpack.c.h.b16 %v293
    %v1065 = vunpack.c.l.b16 %v294
    %v1066 = vunpack.c.h.b16 %v294
    %v1067 = vunpack.c.l.b16 %v295
    %v1068 = vunpack.c.h.b16 %v295
    %v1069 = vunpack.c.l.b16 %v296
    %v1070 = vunpack.c.h.b16 %v296
    %v1071 = vunpack.c.l.b16 %v297
    %v1072 = vunpack.c.h.b16 %v297
    %v1073 = vunpack.c.l.b16 %v298
    %v1074 = vunpack.c.h.b16 %v298
    %v1075 = vunpack.c.l.b16 %v299
    %v1076 = vunpack.c.h.b16 %v299
    %v1077 = vunpack.c.l.b16 %v300
    %v1078 = vunpack.c.h.b16 %v300
    %v1079 = vunpack.c.l.b16 %v301
    %v1080 = vunpack.c.h.b16 %v301
    %v1081 = vunpack.c.l.b16 %v302
    %v1082 = vunpack.c.h.b16 %v302
    %v1083 = vunpack.c.l.b16 %v303
    %v1084 = vunpack.c.h.b16 %v303
    %v1085 = vunpack.c.l.b16 %v304
    %v1086 = vunpack.c.h.b16 %v304
    %v1087 = vunpack.c.l.b16 %v305
    %v1088 = vunpack.c.h.b16 %v305
    %v1089 = vunpack.c.l.b16 %v306
    %v1090 = vunpack.c.h.b16 %v306
    %v1091 = vunpack.c.l.b16 %v307
    %v1092 = vunpack.c.h.b16 %v307
    %v1093 = vunpack.c.l.b16 %v308
    %v1094 = vunpack.c.h.b16 %v308
    %v1095 = vunpack.c.l.b16 %v309
    %v1096 = vunpack.c.h.b16 %v309
    %v1097 = vunpack.c.l.b16 %v310
    %v1098 = vunpack.c.h.b16 %v310
    %v1099 = vunpack.c.l.b16 %v311
    %v1100 = vunpack.c.h.b16 %v311
    %v1101 = vunpack.c.l.b16 %v312
    %v1102 = vunpack.c.h.b16 %v312
    %v1103 = vunpack.c.l.b16 %v313
    %v1104 = vunpack.c.h.b16 %v313
    %v1105 = vunpack.c.l.b16 %v314
    %v1106 = vunpack.c.h.b16 %v314
    %v1107 = vunpack.c.l.b16 %v315
    %v1108 = vunpack.c.h.b16 %v315
    %v1109 = vunpack.c.l.b16 %v316
    %v1110 = vunpack.c.h.b16 %v316
    %v1111 = vunpack.c.l.b16 %v317
    %v1112 = vunpack.c.h.b16 %v317
    %v1113 = vunpack.c.l.b16 %v318
    %v1114 = vunpack.c.h.b16 %v318
    %v1115 = vunpack.c.l.b16 %v319
    %v1116 = vunpack.c.h.b16 %v319
    %v1117 = vunpack.c.l.b16 %v320
    %v1118 = vunpack.c.h.b16 %v320
    %v1119 = vunpack.c.l.b16 %v321
    %v1120 = vunpack.c.h.b16 %v321
    %v1121 = vunpack.c.l.b16 %v322
    %v1122 = vunpack.c.h.b16 %v322
    %v1123 = vunpack.c.l.b16 %v323
    %v1124 = vunpack.c.h.b16 %v323
    %v1125 = vunpack.c.l.b16 %v324
    %v1126 = vunpack.c.h.b16 %v324
    %v1127 = vunpack.c.l.b16 %v325
    %v1128 = vunpack.c.h.b16 %v325
    %v1129 = vunpack.c.l.b16 %v326
    %v1130 = vunpack.c.h.b16 %v326
    %v1131 = vunpack.c.l.b16 %v327
    %v1132 = vunpack.c.h.b16 %v327
    %v1133 = vunpack.c.l.b16 %v328
    %v1134 = vunpack.c.h.b16 %v328
    %v1135 = vunpack.c.l.b16 %v329
    %v1136 = vunpack.c.h.b16 %v329
    %v1137 = vunpack.c.l.b16 %v330
    %v1138 = vunpack.c.h.b16 %v330
    %v1139 = vunpack.c.l.b16 %v331
    %v1140 = vunpack.c.h.b16 %v331
    %v1141 = vunpack.c.l.b16 %v332
    %v1142 = vunpack.c.h.b16 %v332
    %v1143 = vunpack.c.l.b16 %v333
    %v1144 = vunpack.c.h.b16 %v333
    %v1145 = vunpack.c.l.b16 %v334
    %v1146 = vunpack.c.h.b16 %v334
    %v1147 = vunpack.c.l.b16 %v335
    %v1148 = vunpack.c.h.b16 %v335
    %v1149 = vunpack.c.l.b16 %v336
    %v1150 = vunpack.c.h.b16 %v336
    %v1151 = vunpack.c.l.b16 %v337
    %v1152 = vunpack.c.h.b16 %v337
    %v1153 = vunpack.c.l.b16 %v338
    %v1154 = vunpack.c.h.b16 %v338
    %v1155 = vunpack.c.l.b16 %v339
    %v1156 = vunpack.c.h.b16 %v339
    %v1157 = vunpack.c.l.b16 %v340
    %v1158 = vunpack.c.h.b16 %v340
    %v1159 = vunpack.c.l.b16 %v341
    %v1160 = vunpack.c.h.b16 %v341
    %v1161 = vunpack.c.l.b16 %v342
    %v1162 = vunpack.c.h.b16 %v342
    %v1163 = vunpack.c.l.b16 %v343
    %v1164 = vunpack.c.h.b16 %v343
    %v1165 = vunpack.c.l.b16 %v344
    %v1166 = vunpack.c.h.b16 %v344
    %v1167 = vunpack.c.l.b16 %v345
    %v1168 = vunpack.c.h.b16 %v345
    %v1169 = vunpack.c.l.b16 %v346
    %v1170 = vunpack.c.h.b16 %v346
    %v1171 = vunpack.c.l.b16 %v347
    %v1172 = vunpack.c.h.b16 %v347
    %v1173 = vunpack.c.l.b16 %v348
    %v1174 = vunpack.c.h.b16 %v348
    %v1175 = vunpack.c.l.b16 %v349
    %v1176 = vunpack.c.h.b16 %v349
    %v1177 = vunpack.c.l.b16 %v350
    %v1178 = vunpack.c.h.b16 %v350
    %v1179 = vunpack.c.l.b16 %v351
    %v1180 = vunpack.c.h.b16 %v351
    %v1181 = vunpack.c.l.b16 %v352
    %v1182 = vunpack.c.h.b16 %v352
    %v1183 = vpack.c.b16 %v675, %v671
    %v1184 = vpack.c.b16 %v676, %v672
    %v1185 = vpack.c.b16 %v677, %v673
    %v1186 = vpack.c.b16 %v678, %v674
    %v1187 = vpack.c.b16 %v683, %v679
    %v1188 = vpack.c.b16 %v684, %v680
    %v1189 = vpack.c.b16 %v685, %v681
    %v1190 = vpack.c.b16 %v686, %v682
    %v1191 = vpack.c.b16 %v691, %v687
    %v1192 = vpack.c.b16 %v692, %v688
    %v1193 = vpack.c.b16 %v693, %v689
    %v1194 = vpack.c.b16 %v694, %v690
    %v1195 = vpack.c.b16 %v699, %v695
    %v1196 = vpack.c.b16 %v700, %v696
    %v1197 = vpack.c.b16 %v701, %v697
    %v1198 = vpack.c.b16 %v702, %v698
    %v1199 = vpack.c.b16 %v707, %v703
    %v1200 = vpack.c.b16 %v708, %v704
    %v1201 = vpack.c.b16 %v709, %v705
    %v1202 = vpack.c.b16 %v710, %v706
    %v1203 = vpack.c.b16 %v715, %v711
    %v1204 = vpack.c.b16 %v716, %v712
    %v1205 = vpack.c.b16 %v717, %v713
    %v1206 = vpack.c.b16 %v718, %v714
    %v1207 = vpack.c.b16 %v723, %v719
    %v1208 = vpack.c.b16 %v724, %v720
    %v1209 = vpack.c.b16 %v725, %v721
    %v1210 = vpack.c.b16 %v726, %v722
    %v1211 = vpack.c.b16 %v731, %v727
    %v1212 = vpack.c.b16 %v732, %v728
    %v1213 = vpack.c.b16 %v733, %v729
    %v1214 = vpack.c.b16 %v734, %v730
    %v1215 = vpack.c.b16 %v739, %v735
    %v1216 = vpack.c.b16 %v740, %v736
    %v1217 = vpack.c.b16 %v741, %v737
    %v1218 = vpack.c.b16 %v742, %v738
    %v1219 = vpack.c.b16 %v747, %v743
    %v1220 = vpack.c.b16 %v748, %v744
    %v1221 = vpack.c.b16 %v749, %v745
    %v1222 = vpack.c.b16 %v750, %v746
    %v1223 = vpack.c.b16 %v755, %v751
    %v1224 = vpack.c.b16 %v756, %v752
    %v1225 = vpack.c.b16 %v757, %v753
    %v1226 = vpack.c.b16 %v758, %v754
    %v1227 = vpack.c.b16 %v763, %v759
    %v1228 = vpack.c.b16 %v764, %v760
    %v1229 = vpack.c.b16 %v765, %v761
    %v1230 = vpack.c.b16 %v766, %v762
    %v1231 = vpack.c.b16 %v771, %v767
    %v1232 = vpack.c.b16 %v772, %v768
    %v1233 = vpack.c.b16 %v773, %v769
    %v1234 = vpack.c.b16 %v774, %v770
    %v1235 = vpack.c.b16 %v779, %v775
    %v1236 = vpack.c.b16 %v780, %v776
    %v1237 = vpack.c.b16 %v781, %v777
    %v1238 = vpack.c.b16 %v782, %v778
    %v1239 = vpack.c.b16 %v787, %v783
    %v1240 = vpack.c.b16 %v788, %v784
    %v1241 = vpack.c.b16 %v789, %v785
    %v1242 = vpack.c.b16 %v790, %v786
    %v1243 = vpack.c.b16 %v795, %v791
    %v1244 = vpack.c.b16 %v796, %v792
    %v1245 = vpack.c.b16 %v797, %v793
    %v1246 = vpack.c.b16 %v798, %v794
    %v1247 = vpack.c.b16 %v803, %v799
    %v1248 = vpack.c.b16 %v804, %v800
    %v1249 = vpack.c.b16 %v805, %v801
    %v1250 = vpack.c.b16 %v806, %v802
    %v1251 = vpack.c.b16 %v811, %v807
    %v1252 = vpack.c.b16 %v812, %v808
    %v1253 = vpack.c.b16 %v813, %v809
    %v1254 = vpack.c.b16 %v814, %v810
    %v1255 = vpack.c.b16 %v819, %v815
    %v1256 = vpack.c.b16 %v820, %v816
    %v1257 = vpack.c.b16 %v821, %v817
    %v1258 = vpack.c.b16 %v822, %v818
    %v1259 = vpack.c.b16 %v827, %v823
    %v1260 = vpack.c.b16 %v828, %v824
    %v1261 = vpack.c.b16 %v829, %v825
    %v1262 = vpack.c.b16 %v830, %v826
    %v1263 = vpack.c.b16 %v835, %v831
    %v1264 = vpack.c.b16 %v836, %v832
    %v1265 = vpack.c.b16 %v837, %v833
    %v1266 = vpack.c.b16 %v838, %v834
    %v1267 = vpack.c.b16 %v843, %v839
    %v1268 = vpack.c.b16 %v844, %v840
    %v1269 = vpack.c.b16 %v845, %v841
    %v1270 = vpack.c.b16 %v846, %v842
    %v1271 = vpack.c.b16 %v851, %v847
    %v1272 = vpack.c.b16 %v852, %v848
    %v1273 = vpack.c.b16 %v853, %v849
    %v1274 = vpack.c.b16 %v854, %v850
    %v1275 = vpack.c.b16 %v859, %v855
    %v1276 = vpack.c.b16 %v860, %v856
    %v1277 = vpack.c.b16 %v861, %v857
    %v1278 = vpack.c.b16 %v862, %v858
    %v1279 = vpack.c.b16 %v867, %v863
    %v1280 = vpack.c.b16 %v868, %v864
    %v1281 = vpack.c.b16 %v869, %v865
    %v1282 = vpack.c.b16 %v870, %v866
    %v1283 = vpack.c.b16 %v875, %v871
    %v1284 = vpack.c.b16 %v876, %v872
    %v1285 = vpack.c.b16 %v877, %v873
    %v1286 = vpack.c.b16 %v878, %v874
    %v1287 = vpack.c.b16 %v883, %v879
    %v1288 = vpack.c.b16 %v884, %v880
    %v1289 = vpack.c.b16 %v885, %v881
    %v1290 = vpack.c.b16 %v886, %v882
    %v1291 = vpack.c.b16 %v891, %v887
    %v1292 = vpack.c.b16 %v892, %v888
    %v1293 = vpack.c.b16 %v893, %v889
    %v1294 = vpack.c.b16 %v894, %v890
    %v1295 = vpack.c.b16 %v899, %v895
    %v1296 = vpack.c.b16 %v900, %v896
    %v1297 = vpack.c.b16 %v901, %v897
    %v1298 = vpack.c.b16 %v902, %v898
    %v1299 = vpack.c.b16 %v907, %v903
    %v1300 = vpack.c.b16 %v908, %v904
    %v1301 = vpack.c.b16 %v909, %v905
    %v1302 = vpack.c.b16 %v910, %v906
    %v1303 = vpack.c.b16 %v915, %v911
    %v1304 = vpack.c.b16 %v916, %v912
    %v1305 = vpack.c.b16 %v917, %v913
    %v1306 = vpack.c.b16 %v918, %v914
    %v1307 = vpack.c.b16 %v923, %v919
    %v1308 = vpack.c.b16 %v924, %v920
    %v1309 = vpack.c.b16 %v925, %v921
    %v1310 = vpack.c.b16 %v926, %v922
    %v1311 = vpack.c.b16 %v931, %v927
    %v1312 = vpack.c.b16 %v932, %v928
    %v1313 = vpack.c.b16 %v933, %v929
    %v1314 = vpack.c.b16 %v934, %v930
    %v1315 = vpack.c.b16 %v939, %v935
    %v1316 = vpack.c.b16 %v940, %v936
    %v1317 = vpack.c.b16 %v941, %v937
    %v1318 = vpack.c.b16 %v942, %v938
    %v1319 = vpack.c.b16 %v947, %v943
    %v1320 = vpack.c.b16 %v948, %v944
    %v1321 = vpack.c.b16 %v949, %v945
    %v1322 = vpack.c.b16 %v950, %v946
    %v1323 = vpack.c.b16 %v955, %v951
    %v1324 = vpack.c.b16 %v956, %v952
    %v1325 = vpack.c.b16 %v957, %v953
    %v1326 = vpack.c.b16 %v958, %v954
    %v1327 = vpack.c.b16 %v963, %v959
    %v1328 = vpack.c.b16 %v964, %v960
    %v1329 = vpack.c.b16 %v965, %v961
    %v1330 = vpack.c.b16 %v966, %v962
    %v1331 = vpack.c.b16 %v971, %v967
    %v1332 = vpack.c.b16 %v972, %v968
    %v1333 = vpack.c.b16 %v973, %v969
    %v1334 = vpack.c.b16 %v974, %v970
    %v1335 = vpack.c.b16 %v979, %v975
    %v1336 = vpack.c.b16 %v980, %v976
    %v1337 = vpack.c.b16 %v981, %v977
    %v1338 = vpack.c.b16 %v982, %v978
    %v1339 = vpack.c.b16 %v987, %v983
    %v1340 = vpack.c.b16 %v988, %v984
    %v1341 = vpack.c.b16 %v989, %v985
    %v1342 = vpack.c.b16 %v990, %v986
    %v1343 = vpack.c.b16 %v995, %v991
    %v1344 = vpack.c.b16 %v996, %v992
    %v1345 = vpack.c.b16 %v997, %v993
    %v1346 = vpack.c.b16 %v998, %v994
    %v1347 = vpack.c.b16 %v1003, %v999
    %v1348 = vpack.c.b16 %v1004, %v1000
    %v1349 = vpack.c.b16 %v1005, %v1001
    %v1350 = vpack.c.b16 %v1006, %v1002
    %v1351 = vpack.c.b16 %v1011, %v1007
    %v1352 = vpack.c.b16 %v1012, %v1008
    %v1353 = vpack.c.b16 %v1013, %v1009
    %v1354 = vpack.c.b16 %v1014, %v1010
    %v1355 = vpack.c.b16 %v1019, %v1015
    %v1356 = vpack.c.b16 %v1020, %v1016
    %v1357 = vpack.c.b16 %v1021, %v1017
    %v1358 = vpack.c.b16 %v1022, %v1018
    %v1359 = vpack.c.b16 %v1027, %v1023
    %v1360 = vpack.c.b16 %v1028, %v1024
    %v1361 = vpack.c.b16 %v1029, %v1025
    %v1362 = vpack.c.b16 %v1030, %v1026
    %v1363 = vpack.c.b16 %v1035, %v1031
    %v1364 = vpack.c.b16 %v1036, %v1032
    %v1365 = vpack.c.b16 %v1037, %v1033
    %v1366 = vpack.c.b16 %v1038, %v1034
    %v1367 = vpack.c.b16 %v1043, %v1039
    %v1368 = vpack.c.b16 %v1044, %v1040
    %v1369 = vpack.c.b16 %v1045, %v1041
    %v1370 = vpack.c.b16 %v1046, %v1042
    %v1371 = vpack.c.b16 %v1051, %v1047
    %v1372 = vpack.c.b16 %v1052, %v1048
    %v1373 = vpack.c.b16 %v1053, %v1049
    %v1374 = vpack.c.b16 %v1054, %v1050
    %v1375 = vpack.c.b16 %v1059, %v1055
    %v1376 = vpack.c.b16 %v1060, %v1056
    %v1377 = vpack.c.b16 %v1061, %v1057
    %v1378 = vpack.c.b16 %v1062, %v1058
    %v1379 = vpack.c.b16 %v1067, %v1063
    %v1380 = vpack.c.b16 %v1068, %v1064
    %v1381 = vpack.c.b16 %v1069, %v1065
    %v1382 = vpack.c.b16 %v1070, %v1066
    %v1383 = vpack.c.b16 %v1075, %v1071
    %v1384 = vpack.c.b16 %v1076, %v1072
    %v1385 = vpack.c.b16 %v1077, %v1073
    %v1386 = vpack.c.b16 %v1078, %v1074
    %v1387 = vpack.c.b16 %v1083, %v1079
    %v1388 = vpack.c.b16 %v1084, %v1080
    %v1389 = vpack.c.b16 %v1085, %v1081
    %v1390 = vpack.c.b16 %v1086, %v1082
    %v1391 = vpack.c.b16 %v1091, %v1087
    %v1392 = vpack.c.b16 %v1092, %v1088
    %v1393 = vpack.c.b16 %v1093, %v1089
    %v1394 = vpack.c.b16 %v1094, %v1090
    %v1395 = vpack.c.b16 %v1099, %v1095
    %v1396 = vpack.c.b16 %v1100, %v1096
    %v1397 = vpack.c.b16 %v1101, %v1097
    %v1398 = vpack.c.b16 %v1102, %v1098
    %v1399 = vpack.c.b16 %v1107, %v1103
    %v1400 = vpack.c.b16 %v1108, %v1104
    %v1401 = vpack.c.b16 %v1109, %v1105
    %v1402 = vpack.c.b16 %v1110, %v1106
    %v1403 = vpack.c.b16 %v1115, %v1111
    %v1404 = vpack.c.b16 %v1116, %v1112
    %v1405 = vpack.c.b16 %v1117, %v1113
    %v1406 = vpack.c.b16 %v1118, %v1114
    %v1407 = vpack.c.b16 %v1123, %v1119
    %v1408 = vpack.c.b16 %v1124, %v1120
    %v1409 = vpack.c.b16 %v1125, %v1121
    %v1410 = vpack.c.b16 %v1126, %v1122
    %v1411 = vpack.c.b16 %v1131, %v1127
    %v1412 = vpack.c.b16 %v1132, %v1128
    %v1413 = vpack.c.b16 %v1133, %v1129
    %v1414 = vpack.c.b16 %v1134, %v1130
    %v1415 = vpack.c.b16 %v1139, %v1135
    %v1416 = vpack.c.b16 %v1140, %v1136
    %v1417 = vpack.c.b16 %v1141, %v1137
    %v1418 = vpack.c.b16 %v1142, %v1138
    %v1419 = vpack.c.b16 %v1147, %v1143
    %v1420 = vpack.c.b16 %v1148, %v1144
    %v1421 = vpack.c.b16 %v1149, %v1145
    %v1422 = vpack.c.b16 %v1150, %v1146
    %v1423 = vpack.c.b16 %v1155, %v1151
    %v1424 = vpack.c.b16 %v1156, %v1152
    %v1425 = vpack.c.b16 %v1157, %v1153
    %v1426 = vpack.c.b16 %v1158, %v1154
    %v1427 = vpack.c.b16 %v1163, %v1159
    %v1428 = vpack.c.b16 %v1164, %v1160
    %v1429 = vpack.c.b16 %v1165, %v1161
    %v1430 = vpack.c.b16 %v1166, %v1162
    %v1431 = vpack.c.b16 %v1171, %v1167
    %v1432 = vpack.c.b16 %v1172, %v1168
    %v1433 = vpack.c.b16 %v1173, %v1169
    %v1434 = vpack.c.b16 %v1174, %v1170
    %v1435 = vpack.c.b16 %v1179, %v1175
    %v1436 = vpack.c.b16 %v1180, %v1176
    %v1437 = vpack.c.b16 %v1181, %v1177
    %v1438 = vpack.c.b16 %v1182, %v1178
    %1695 = vmatprep.subr.bf16.mxu0 %v1212
    %1696 = vmatpush1.bf16.msra.mxu0 %v1211
    %1697 = vmatprep.subr.bf16.mxu0 %v1208
    %1698 = vmatpush1.bf16.msra.mxu0 %v1207
    %1699 = vmatprep.subr.bf16.mxu0 %v1204
    %1700 = vmatpush1.bf16.msra.mxu0 %v1203
    %1701 = vmatprep.subr.bf16.mxu0 %v1200
    %1702 = vmatpush1.bf16.msra.mxu0 %v1199
    %1703 = vmatprep.subr.bf16.mxu0 %v1196
    %1704 = vmatpush1.bf16.msra.mxu0 %v1195
    %1705 = vmatprep.subr.bf16.mxu0 %v1192
    %1706 = vmatpush1.bf16.msra.mxu0 %v1191
    %1707 = vmatprep.subr.bf16.mxu0 %v1188
    %1708 = vmatpush1.bf16.msra.mxu0 %v1187
    %1709 = vmatprep.subr.bf16.mxu0 %v1184
    %1710 = vmatpush1.bf16.msra.mxu0 %v1183
    %1711 = vmatprep.subr.bf16.mxu0 %v1244
    %1712 = vmatpush2.bf16.msra.mxu0 %v1243
    %1713 = vmatprep.subr.bf16.mxu0 %v1240
    %1714 = vmatpush2.bf16.msra.mxu0 %v1239
    %1715 = vmatprep.subr.bf16.mxu0 %v1236
    %1716 = vmatpush2.bf16.msra.mxu0 %v1235
    %1717 = vmatprep.subr.bf16.mxu0 %v1232
    %1718 = vmatpush2.bf16.msra.mxu0 %v1231
    %1719 = vmatprep.subr.bf16.mxu0 %v1228
    %1720 = vmatpush2.bf16.msra.mxu0 %v1227
    %1721 = vmatprep.subr.bf16.mxu0 %v1224
    %1722 = vmatpush2.bf16.msra.mxu0 %v1223
    %1723 = vmatprep.subr.bf16.mxu0 %v1220
    %1724 = vmatpush2.bf16.msra.mxu0 %v1219
    %1725 = vmatprep.subr.bf16.mxu0 %v1216
    %1726 = vmatpush2.bf16.msra.mxu0 %v1215
    %1727 = vmatprep.mubr.bf16.mxu0 %v400
    %1728 = vmatmul.mubr.bf16.gmra.mxu0 %v399
    %v1729 = vpop.f32.mrf.mxu0
    %v1730 = vadd.f32 %v358, %v1729
    %v1731 = vpop.f32.mrf.mxu0
    %v1732 = vadd.f32 %v362, %v1731
    %v1733 = vpop.f32.mrf.mxu0
    %v1734 = vadd.f32 %v358, %v1733
    %v1735 = vpop.f32.mrf.mxu0
    %v1736 = vadd.f32 %v362, %v1735
    %1737 = vdwg.mxu0
    %1738 = vmatprep.subr.bf16.mxu0 %v1276
    %1739 = vmatpush1.bf16.msra.mxu0 %v1275
    %1740 = vmatprep.subr.bf16.mxu0 %v1272
    %1741 = vmatpush1.bf16.msra.mxu0 %v1271
    %1742 = vmatprep.subr.bf16.mxu0 %v1268
    %1743 = vmatpush1.bf16.msra.mxu0 %v1267
    %1744 = vmatprep.subr.bf16.mxu0 %v1264
    %1745 = vmatpush1.bf16.msra.mxu0 %v1263
    %1746 = vmatprep.subr.bf16.mxu0 %v1260
    %1747 = vmatpush1.bf16.msra.mxu0 %v1259
    %1748 = vmatprep.subr.bf16.mxu0 %v1256
    %1749 = vmatpush1.bf16.msra.mxu0 %v1255
    %1750 = vmatprep.subr.bf16.mxu0 %v1252
    %1751 = vmatpush1.bf16.msra.mxu0 %v1251
    %1752 = vmatprep.subr.bf16.mxu0 %v1248
    %1753 = vmatpush1.bf16.msra.mxu0 %v1247
    %1754 = vmatprep.subr.bf16.mxu0 %v1308
    %1755 = vmatpush2.bf16.msra.mxu0 %v1307
    %1756 = vmatprep.subr.bf16.mxu0 %v1304
    %1757 = vmatpush2.bf16.msra.mxu0 %v1303
    %1758 = vmatprep.subr.bf16.mxu0 %v1300
    %1759 = vmatpush2.bf16.msra.mxu0 %v1299
    %1760 = vmatprep.subr.bf16.mxu0 %v1296
    %1761 = vmatpush2.bf16.msra.mxu0 %v1295
    %1762 = vmatprep.subr.bf16.mxu0 %v1292
    %1763 = vmatpush2.bf16.msra.mxu0 %v1291
    %1764 = vmatprep.subr.bf16.mxu0 %v1288
    %1765 = vmatpush2.bf16.msra.mxu0 %v1287
    %1766 = vmatprep.subr.bf16.mxu0 %v1284
    %1767 = vmatpush2.bf16.msra.mxu0 %v1283
    %1768 = vmatprep.subr.bf16.mxu0 %v1280
    %1769 = vmatpush2.bf16.msra.mxu0 %v1279
    %1770 = vmatprep.mubr.bf16.mxu0 %v402
    %1771 = vmatmul.mubr.bf16.gmra.mxu0 %v401
    %v1772 = vpop.f32.mrf.mxu0
    %v1773 = vadd.f32 %v1730, %v1772
    %v1774 = vpop.f32.mrf.mxu0
    %v1775 = vadd.f32 %v1732, %v1774
    %v1776 = vpop.f32.mrf.mxu0
    %v1777 = vadd.f32 %v1734, %v1776
    %v1778 = vpop.f32.mrf.mxu0
    %v1779 = vadd.f32 %v1736, %v1778
    %1780 = vdwg.mxu0
    %1781 = vmatprep.subr.bf16.mxu0 %v1340
    %1782 = vmatpush1.bf16.msra.mxu0 %v1339
    %1783 = vmatprep.subr.bf16.mxu0 %v1336
    %1784 = vmatpush1.bf16.msra.mxu0 %v1335
    %1785 = vmatprep.subr.bf16.mxu0 %v1332
    %1786 = vmatpush1.bf16.msra.mxu0 %v1331
    %1787 = vmatprep.subr.bf16.mxu0 %v1328
    %1788 = vmatpush1.bf16.msra.mxu0 %v1327
    %1789 = vmatprep.subr.bf16.mxu0 %v1324
    %1790 = vmatpush1.bf16.msra.mxu0 %v1323
    %1791 = vmatprep.subr.bf16.mxu0 %v1320
    %1792 = vmatpush1.bf16.msra.mxu0 %v1319
    %1793 = vmatprep.subr.bf16.mxu0 %v1316
    %1794 = vmatpush1.bf16.msra.mxu0 %v1315
    %1795 = vmatprep.subr.bf16.mxu0 %v1312
    %1796 = vmatpush1.bf16.msra.mxu0 %v1311
    %1797 = vmatprep.subr.bf16.mxu0 %v1372
    %1798 = vmatpush2.bf16.msra.mxu0 %v1371
    %1799 = vmatprep.subr.bf16.mxu0 %v1368
    %1800 = vmatpush2.bf16.msra.mxu0 %v1367
    %1801 = vmatprep.subr.bf16.mxu0 %v1364
    %1802 = vmatpush2.bf16.msra.mxu0 %v1363
    %1803 = vmatprep.subr.bf16.mxu0 %v1360
    %1804 = vmatpush2.bf16.msra.mxu0 %v1359
    %1805 = vmatprep.subr.bf16.mxu0 %v1356
    %1806 = vmatpush2.bf16.msra.mxu0 %v1355
    %1807 = vmatprep.subr.bf16.mxu0 %v1352
    %1808 = vmatpush2.bf16.msra.mxu0 %v1351
    %1809 = vmatprep.subr.bf16.mxu0 %v1348
    %1810 = vmatpush2.bf16.msra.mxu0 %v1347
    %1811 = vmatprep.subr.bf16.mxu0 %v1344
    %1812 = vmatpush2.bf16.msra.mxu0 %v1343
    %1813 = vmatprep.mubr.bf16.mxu0 %v404
    %1814 = vmatmul.mubr.bf16.gmra.mxu0 %v403
    %v1815 = vpop.f32.mrf.mxu0
    %v1816 = vadd.f32 %v1773, %v1815
    %v1817 = vpop.f32.mrf.mxu0
    %v1818 = vadd.f32 %v1775, %v1817
    %v1819 = vpop.f32.mrf.mxu0
    %v1820 = vadd.f32 %v1777, %v1819
    %v1821 = vpop.f32.mrf.mxu0
    %v1822 = vadd.f32 %v1779, %v1821
    %1823 = vdwg.mxu0
    %1824 = vmatprep.subr.bf16.mxu0 %v1404
    %1825 = vmatpush1.bf16.msra.mxu0 %v1403
    %1826 = vmatprep.subr.bf16.mxu0 %v1400
    %1827 = vmatpush1.bf16.msra.mxu0 %v1399
    %1828 = vmatprep.subr.bf16.mxu0 %v1396
    %1829 = vmatpush1.bf16.msra.mxu0 %v1395
    %1830 = vmatprep.subr.bf16.mxu0 %v1392
    %1831 = vmatpush1.bf16.msra.mxu0 %v1391
    %1832 = vmatprep.subr.bf16.mxu0 %v1388
    %1833 = vmatpush1.bf16.msra.mxu0 %v1387
    %1834 = vmatprep.subr.bf16.mxu0 %v1384
    %1835 = vmatpush1.bf16.msra.mxu0 %v1383
    %1836 = vmatprep.subr.bf16.mxu0 %v1380
    %1837 = vmatpush1.bf16.msra.mxu0 %v1379
    %1838 = vmatprep.subr.bf16.mxu0 %v1376
    %1839 = vmatpush1.bf16.msra.mxu0 %v1375
    %1840 = vmatprep.subr.bf16.mxu0 %v1436
    %1841 = vmatpush2.bf16.msra.mxu0 %v1435
    %1842 = vmatprep.subr.bf16.mxu0 %v1432
    %1843 = vmatpush2.bf16.msra.mxu0 %v1431
    %1844 = vmatprep.subr.bf16.mxu0 %v1428
    %1845 = vmatpush2.bf16.msra.mxu0 %v1427
    %1846 = vmatprep.subr.bf16.mxu0 %v1424
    %1847 = vmatpush2.bf16.msra.mxu0 %v1423
    %1848 = vmatprep.subr.bf16.mxu0 %v1420
    %1849 = vmatpush2.bf16.msra.mxu0 %v1419
    %1850 = vmatprep.subr.bf16.mxu0 %v1416
    %1851 = vmatpush2.bf16.msra.mxu0 %v1415
    %1852 = vmatprep.subr.bf16.mxu0 %v1412
    %1853 = vmatpush2.bf16.msra.mxu0 %v1411
    %1854 = vmatprep.subr.bf16.mxu0 %v1408
    %1855 = vmatpush2.bf16.msra.mxu0 %v1407
    %1856 = vmatprep.mubr.bf16.mxu0 %v406
    %1857 = vmatmul.mubr.bf16.gmra.mxu0 %v405
    %v1858 = vpop.f32.mrf.mxu0
    %v1859 = vadd.f32 %v1816, %v1858
    %v1860 = vpop.f32.mrf.mxu0
    %v1861 = vadd.f32 %v1818, %v1860
    %v1862 = vpop.f32.mrf.mxu0
    %v1863 = vadd.f32 %v1820, %v1862
    %v1864 = vpop.f32.mrf.mxu0
    %v1865 = vadd.f32 %v1822, %v1864
    %1866 = vdwg.mxu0
    %1867 = vmatprep.subr.bf16.mxu0 %v1214
    %1868 = vmatpush1.bf16.msra.mxu0 %v1213
    %1869 = vmatprep.subr.bf16.mxu0 %v1210
    %1870 = vmatpush1.bf16.msra.mxu0 %v1209
    %1871 = vmatprep.subr.bf16.mxu0 %v1206
    %1872 = vmatpush1.bf16.msra.mxu0 %v1205
    %1873 = vmatprep.subr.bf16.mxu0 %v1202
    %1874 = vmatpush1.bf16.msra.mxu0 %v1201
    %1875 = vmatprep.subr.bf16.mxu0 %v1198
    %1876 = vmatpush1.bf16.msra.mxu0 %v1197
    %1877 = vmatprep.subr.bf16.mxu0 %v1194
    %1878 = vmatpush1.bf16.msra.mxu0 %v1193
    %1879 = vmatprep.subr.bf16.mxu0 %v1190
    %1880 = vmatpush1.bf16.msra.mxu0 %v1189
    %1881 = vmatprep.subr.bf16.mxu0 %v1186
    %1882 = vmatpush1.bf16.msra.mxu0 %v1185
    %1883 = vmatprep.subr.bf16.mxu0 %v1246
    %1884 = vmatpush2.bf16.msra.mxu0 %v1245
    %1885 = vmatprep.subr.bf16.mxu0 %v1242
    %1886 = vmatpush2.bf16.msra.mxu0 %v1241
    %1887 = vmatprep.subr.bf16.mxu0 %v1238
    %1888 = vmatpush2.bf16.msra.mxu0 %v1237
    %1889 = vmatprep.subr.bf16.mxu0 %v1234
    %1890 = vmatpush2.bf16.msra.mxu0 %v1233
    %1891 = vmatprep.subr.bf16.mxu0 %v1230
    %1892 = vmatpush2.bf16.msra.mxu0 %v1229
    %1893 = vmatprep.subr.bf16.mxu0 %v1226
    %1894 = vmatpush2.bf16.msra.mxu0 %v1225
    %1895 = vmatprep.subr.bf16.mxu0 %v1222
    %1896 = vmatpush2.bf16.msra.mxu0 %v1221
    %1897 = vmatprep.subr.bf16.mxu0 %v1218
    %1898 = vmatpush2.bf16.msra.mxu0 %v1217
    %1899 = vmatprep.mubr.bf16.mxu0 %v400
    %1900 = vmatmul.mubr.bf16.gmra.mxu0 %v399
    %v1901 = vpop.f32.mrf.mxu0
    %v1902 = vadd.f32 %v366, %v1901
    %v1903 = vpop.f32.mrf.mxu0
    %v1904 = vadd.f32 %v370, %v1903
    %v1905 = vpop.f32.mrf.mxu0
    %v1906 = vadd.f32 %v366, %v1905
    %v1907 = vpop.f32.mrf.mxu0
    %v1908 = vadd.f32 %v370, %v1907
    %1909 = vdwg.mxu0
    %1910 = vmatprep.subr.bf16.mxu0 %v1278
    %1911 = vmatpush1.bf16.msra.mxu0 %v1277
    %1912 = vmatprep.subr.bf16.mxu0 %v1274
    %1913 = vmatpush1.bf16.msra.mxu0 %v1273
    %1914 = vmatprep.subr.bf16.mxu0 %v1270
    %1915 = vmatpush1.bf16.msra.mxu0 %v1269
    %1916 = vmatprep.subr.bf16.mxu0 %v1266
    %1917 = vmatpush1.bf16.msra.mxu0 %v1265
    %1918 = vmatprep.subr.bf16.mxu0 %v1262
    %1919 = vmatpush1.bf16.msra.mxu0 %v1261
    %1920 = vmatprep.subr.bf16.mxu0 %v1258
    %1921 = vmatpush1.bf16.msra.mxu0 %v1257
    %1922 = vmatprep.subr.bf16.mxu0 %v1254
    %1923 = vmatpush1.bf16.msra.mxu0 %v1253
    %1924 = vmatprep.subr.bf16.mxu0 %v1250
    %1925 = vmatpush1.bf16.msra.mxu0 %v1249
    %1926 = vmatprep.subr.bf16.mxu0 %v1310
    %1927 = vmatpush2.bf16.msra.mxu0 %v1309
    %1928 = vmatprep.subr.bf16.mxu0 %v1306
    %1929 = vmatpush2.bf16.msra.mxu0 %v1305
    %1930 = vmatprep.subr.bf16.mxu0 %v1302
    %1931 = vmatpush2.bf16.msra.mxu0 %v1301
    %1932 = vmatprep.subr.bf16.mxu0 %v1298
    %1933 = vmatpush2.bf16.msra.mxu0 %v1297
    %1934 = vmatprep.subr.bf16.mxu0 %v1294
    %1935 = vmatpush2.bf16.msra.mxu0 %v1293
    %1936 = vmatprep.subr.bf16.mxu0 %v1290
    %1937 = vmatpush2.bf16.msra.mxu0 %v1289
    %1938 = vmatprep.subr.bf16.mxu0 %v1286
    %1939 = vmatpush2.bf16.msra.mxu0 %v1285
    %1940 = vmatprep.subr.bf16.mxu0 %v1282
    %1941 = vmatpush2.bf16.msra.mxu0 %v1281
    %1942 = vmatprep.mubr.bf16.mxu0 %v402
    %1943 = vmatmul.mubr.bf16.gmra.mxu0 %v401
    %v1944 = vpop.f32.mrf.mxu0
    %v1945 = vadd.f32 %v1902, %v1944
    %v1946 = vpop.f32.mrf.mxu0
    %v1947 = vadd.f32 %v1904, %v1946
    %v1948 = vpop.f32.mrf.mxu0
    %v1949 = vadd.f32 %v1906, %v1948
    %v1950 = vpop.f32.mrf.mxu0
    %v1951 = vadd.f32 %v1908, %v1950
    %1952 = vdwg.mxu0
    %1953 = vmatprep.subr.bf16.mxu0 %v1342
    %1954 = vmatpush1.bf16.msra.mxu0 %v1341
    %1955 = vmatprep.subr.bf16.mxu0 %v1338
    %1956 = vmatpush1.bf16.msra.mxu0 %v1337
    %1957 = vmatprep.subr.bf16.mxu0 %v1334
    %1958 = vmatpush1.bf16.msra.mxu0 %v1333
    %1959 = vmatprep.subr.bf16.mxu0 %v1330
    %1960 = vmatpush1.bf16.msra.mxu0 %v1329
    %1961 = vmatprep.subr.bf16.mxu0 %v1326
    %1962 = vmatpush1.bf16.msra.mxu0 %v1325
    %1963 = vmatprep.subr.bf16.mxu0 %v1322
    %1964 = vmatpush1.bf16.msra.mxu0 %v1321
    %1965 = vmatprep.subr.bf16.mxu0 %v1318
    %1966 = vmatpush1.bf16.msra.mxu0 %v1317
    %1967 = vmatprep.subr.bf16.mxu0 %v1314
    %1968 = vmatpush1.bf16.msra.mxu0 %v1313
    %1969 = vmatprep.subr.bf16.mxu0 %v1374
    %1970 = vmatpush2.bf16.msra.mxu0 %v1373
    %1971 = vmatprep.subr.bf16.mxu0 %v1370
    %1972 = vmatpush2.bf16.msra.mxu0 %v1369
    %1973 = vmatprep.subr.bf16.mxu0 %v1366
    %1974 = vmatpush2.bf16.msra.mxu0 %v1365
    %1975 = vmatprep.subr.bf16.mxu0 %v1362
    %1976 = vmatpush2.bf16.msra.mxu0 %v1361
    %1977 = vmatprep.subr.bf16.mxu0 %v1358
    %1978 = vmatpush2.bf16.msra.mxu0 %v1357
    %1979 = vmatprep.subr.bf16.mxu0 %v1354
    %1980 = vmatpush2.bf16.msra.mxu0 %v1353
    %1981 = vmatprep.subr.bf16.mxu0 %v1350
    %1982 = vmatpush2.bf16.msra.mxu0 %v1349
    %1983 = vmatprep.subr.bf16.mxu0 %v1346
    %1984 = vmatpush2.bf16.msra.mxu0 %v1345
    %1985 = vmatprep.mubr.bf16.mxu0 %v404
    %1986 = vmatmul.mubr.bf16.gmra.mxu0 %v403
    %v1987 = vpop.f32.mrf.mxu0
    %v1988 = vadd.f32 %v1945, %v1987
    %v1989 = vpop.f32.mrf.mxu0
    %v1990 = vadd.f32 %v1947, %v1989
    %v1991 = vpop.f32.mrf.mxu0
    %v1992 = vadd.f32 %v1949, %v1991
    %v1993 = vpop.f32.mrf.mxu0
    %v1994 = vadd.f32 %v1951, %v1993
    %1995 = vdwg.mxu0
    %1996 = vmatprep.subr.bf16.mxu0 %v1406
    %1997 = vmatpush1.bf16.msra.mxu0 %v1405
    %1998 = vmatprep.subr.bf16.mxu0 %v1402
    %1999 = vmatpush1.bf16.msra.mxu0 %v1401
    %2000 = vmatprep.subr.bf16.mxu0 %v1398
    %2001 = vmatpush1.bf16.msra.mxu0 %v1397
    %2002 = vmatprep.subr.bf16.mxu0 %v1394
    %2003 = vmatpush1.bf16.msra.mxu0 %v1393
    %2004 = vmatprep.subr.bf16.mxu0 %v1390
    %2005 = vmatpush1.bf16.msra.mxu0 %v1389
    %2006 = vmatprep.subr.bf16.mxu0 %v1386
    %2007 = vmatpush1.bf16.msra.mxu0 %v1385
    %2008 = vmatprep.subr.bf16.mxu0 %v1382
    %2009 = vmatpush1.bf16.msra.mxu0 %v1381
    %2010 = vmatprep.subr.bf16.mxu0 %v1378
    %2011 = vmatpush1.bf16.msra.mxu0 %v1377
    %2012 = vmatprep.subr.bf16.mxu0 %v1438
    %2013 = vmatpush2.bf16.msra.mxu0 %v1437
    %2014 = vmatprep.subr.bf16.mxu0 %v1434
    %2015 = vmatpush2.bf16.msra.mxu0 %v1433
    %2016 = vmatprep.subr.bf16.mxu0 %v1430
    %2017 = vmatpush2.bf16.msra.mxu0 %v1429
    %2018 = vmatprep.subr.bf16.mxu0 %v1426
    %2019 = vmatpush2.bf16.msra.mxu0 %v1425
    %2020 = vmatprep.subr.bf16.mxu0 %v1422
    %2021 = vmatpush2.bf16.msra.mxu0 %v1421
    %2022 = vmatprep.subr.bf16.mxu0 %v1418
    %2023 = vmatpush2.bf16.msra.mxu0 %v1417
    %2024 = vmatprep.subr.bf16.mxu0 %v1414
    %2025 = vmatpush2.bf16.msra.mxu0 %v1413
    %2026 = vmatprep.subr.bf16.mxu0 %v1410
    %2027 = vmatpush2.bf16.msra.mxu0 %v1409
    %2028 = vmatprep.mubr.bf16.mxu0 %v406
    %2029 = vmatmul.mubr.bf16.gmra.mxu0 %v405
    %v2030 = vpop.f32.mrf.mxu0
    %v2031 = vadd.f32 %v1988, %v2030
    %v2032 = vpop.f32.mrf.mxu0
    %v2033 = vadd.f32 %v1990, %v2032
    %v2034 = vpop.f32.mrf.mxu0
    %v2035 = vadd.f32 %v1992, %v2034
    %v2036 = vpop.f32.mrf.mxu0
    %v2037 = vadd.f32 %v1994, %v2036
    %2038 = vdwg.mxu0
    %v2039 = vmax.f32 %v1859, 0.0
    %v2040 = vmax.f32 %v1861, 0.0
    %v2041 = vmax.f32 %v2031, 0.0
    %v2042 = vmax.f32 %v2033, 0.0
    %v2043 = vmax.f32 %v1863, 0.0
    %v2044 = vmax.f32 %v1865, 0.0
    %v2045 = vmax.f32 %v2035, 0.0
    %v2046 = vmax.f32 %v2037, 0.0
    %v2047 = vpack.c.bf16 %v2043, %v2039
    %v2048 = vpack.c.bf16 %v2044, %v2040
    %v2049 = vpack.c.bf16 %v2045, %v2041
    %v2050 = vpack.c.bf16 %v2046, %v2042
    %v2055 = vunpack.c.l.b16 %v2047
    %v2056 = vunpack.c.l.b16 %v2048
    %v2057 = vunpack.c.l.b16 %v2049
    %v2058 = vunpack.c.l.b16 %v2050
    %v2059 = vunpack.c.h.b16 %v2047
    %v2060 = vunpack.c.h.b16 %v2048
    %v2061 = vunpack.c.h.b16 %v2049
    %v2062 = vunpack.c.h.b16 %v2050
    %v2063 = vpack.c.b16 %v2056, %v2055
    %v2064 = vpack.c.b16 %v2058, %v2057
    %v2065 = vpack.c.b16 %v2060, %v2059
    %v2066 = vpack.c.b16 %v2062, %v2061
    %s2071 = sshra.s32 %s88, 3
    %s2072 = sand.u32 %s88, 7
    %s2073 = smul.u32 %s2071, 4
    %s2074 = smul.addr %s2073, 4
    %s2075 = scalar_lea.vmem [#allocation2], %s2074
    %2076 = vst [vmem:[%s2075] sm:$0xff] %v2063
    %2077 = vst [vmem:[%s2075 + $0x8] sm:$0xff] %v2064
    %2078 = vst [vmem:[%s2075 + $0x10] sm:$0xff] %v2065
    %2079 = vst [vmem:[%s2075 + $0x18] sm:$0xff] %v2066
    %v2080 = vld [vmem:[#allocation12] sm:$0xff]
    %v2081 = vld [vmem:[#allocation12 + $0x8] sm:$0xff]
    %v2082 = vld [vmem:[#allocation12 + $0x10] sm:$0xff]
    %v2083 = vld [vmem:[#allocation12 + $0x18] sm:$0xff]
    %v2084 = vld [vmem:[#allocation12 + $0x20] sm:$0xff]
    %v2085 = vld [vmem:[#allocation12 + $0x28] sm:$0xff]
    %v2086 = vld [vmem:[#allocation12 + $0x30] sm:$0xff]
    %v2087 = vld [vmem:[#allocation12 + $0x38] sm:$0xff]
    %v2088 = vld [vmem:[#allocation12 + $0x40] sm:$0xff]
    %v2089 = vld [vmem:[#allocation12 + $0x48] sm:$0xff]
    %v2090 = vld [vmem:[#allocation12 + $0x50] sm:$0xff]
    %v2091 = vld [vmem:[#allocation12 + $0x58] sm:$0xff]
    %v2092 = vld [vmem:[#allocation12 + $0x60] sm:$0xff]
    %v2093 = vld [vmem:[#allocation12 + $0x68] sm:$0xff]
    %v2094 = vld [vmem:[#allocation12 + $0x70] sm:$0xff]
    %v2095 = vld [vmem:[#allocation12 + $0x78] sm:$0xff]
    %v2096 = vld [vmem:[#allocation12 + $0x80] sm:$0xff]
    %v2097 = vld [vmem:[#allocation12 + $0x88] sm:$0xff]
    %v2098 = vld [vmem:[#allocation12 + $0x90] sm:$0xff]
    %v2099 = vld [vmem:[#allocation12 + $0x98] sm:$0xff]
    %v2100 = vld [vmem:[#allocation12 + $0xa0] sm:$0xff]
    %v2101 = vld [vmem:[#allocation12 + $0xa8] sm:$0xff]
    %v2102 = vld [vmem:[#allocation12 + $0xb0] sm:$0xff]
    %v2103 = vld [vmem:[#allocation12 + $0xb8] sm:$0xff]
    %v2104 = vld [vmem:[#allocation12 + $0xc0] sm:$0xff]
    %v2105 = vld [vmem:[#allocation12 + $0xc8] sm:$0xff]
    %v2106 = vld [vmem:[#allocation12 + $0xd0] sm:$0xff]
    %v2107 = vld [vmem:[#allocation12 + $0xd8] sm:$0xff]
    %v2108 = vld [vmem:[#allocation12 + $0xe0] sm:$0xff]
    %v2109 = vld [vmem:[#allocation12 + $0xe8] sm:$0xff]
    %v2110 = vld [vmem:[#allocation12 + $0xf0] sm:$0xff]
    %v2111 = vld [vmem:[#allocation12 + $0xf8] sm:$0xff]
    %v2112 = vld [vmem:[#allocation12 + $0x100] sm:$0xff]
    %v2113 = vld [vmem:[#allocation12 + $0x108] sm:$0xff]
    %v2114 = vld [vmem:[#allocation12 + $0x110] sm:$0xff]
    %v2115 = vld [vmem:[#allocation12 + $0x118] sm:$0xff]
    %v2116 = vld [vmem:[#allocation12 + $0x120] sm:$0xff]
    %v2117 = vld [vmem:[#allocation12 + $0x128] sm:$0xff]
    %v2118 = vld [vmem:[#allocation12 + $0x130] sm:$0xff]
    %v2119 = vld [vmem:[#allocation12 + $0x138] sm:$0xff]
    %v2120 = vld [vmem:[#allocation12 + $0x140] sm:$0xff]
    %v2121 = vld [vmem:[#allocation12 + $0x148] sm:$0xff]
    %v2122 = vld [vmem:[#allocation12 + $0x150] sm:$0xff]
    %v2123 = vld [vmem:[#allocation12 + $0x158] sm:$0xff]
    %v2124 = vld [vmem:[#allocation12 + $0x160] sm:$0xff]
    %v2125 = vld [vmem:[#allocation12 + $0x168] sm:$0xff]
    %v2126 = vld [vmem:[#allocation12 + $0x170] sm:$0xff]
    %v2127 = vld [vmem:[#allocation12 + $0x178] sm:$0xff]
    %v2128 = vld [vmem:[#allocation12 + $0x180] sm:$0xff]
    %v2129 = vld [vmem:[#allocation12 + $0x188] sm:$0xff]
    %v2130 = vld [vmem:[#allocation12 + $0x190] sm:$0xff]
    %v2131 = vld [vmem:[#allocation12 + $0x198] sm:$0xff]
    %v2132 = vld [vmem:[#allocation12 + $0x1a0] sm:$0xff]
    %v2133 = vld [vmem:[#allocation12 + $0x1a8] sm:$0xff]
    %v2134 = vld [vmem:[#allocation12 + $0x1b0] sm:$0xff]
    %v2135 = vld [vmem:[#allocation12 + $0x1b8] sm:$0xff]
    %v2136 = vld [vmem:[#allocation12 + $0x1c0] sm:$0xff]
    %v2137 = vld [vmem:[#allocation12 + $0x1c8] sm:$0xff]
    %v2138 = vld [vmem:[#allocation12 + $0x1d0] sm:$0xff]
    %v2139 = vld [vmem:[#allocation12 + $0x1d8] sm:$0xff]
    %v2140 = vld [vmem:[#allocation12 + $0x1e0] sm:$0xff]
    %v2141 = vld [vmem:[#allocation12 + $0x1e8] sm:$0xff]
    %v2142 = vld [vmem:[#allocation12 + $0x1f0] sm:$0xff]
    %v2143 = vld [vmem:[#allocation12 + $0x1f8] sm:$0xff]
    %v2144 = vld [vmem:[%s5] sm:$0x3]
    %v2146 = vlaneseq
    %v2147 = vshrl.u32 %v2146, 7
    %v2148 = vsub.s32 0, %v2147
    %v2149 = vrot.slane %v2144, %v2148
    %v2150 = vlaneseq
    %v2151 = vshrl.u32 %v2150, 7
    %v2152 = vsub.s32 1, %v2151
    %v2153 = vrot.slane %v2144, %v2152
    %v2220 = vunpack.c.l.b16 %v2080
    %v2221 = vunpack.c.h.b16 %v2080
    %v2222 = vunpack.c.l.b16 %v2081
    %v2223 = vunpack.c.h.b16 %v2081
    %v2224 = vunpack.c.l.b16 %v2082
    %v2225 = vunpack.c.h.b16 %v2082
    %v2226 = vunpack.c.l.b16 %v2083
    %v2227 = vunpack.c.h.b16 %v2083
    %v2228 = vunpack.c.l.b16 %v2084
    %v2229 = vunpack.c.h.b16 %v2084
    %v2230 = vunpack.c.l.b16 %v2085
    %v2231 = vunpack.c.h.b16 %v2085
    %v2232 = vunpack.c.l.b16 %v2086
    %v2233 = vunpack.c.h.b16 %v2086
    %v2234 = vunpack.c.l.b16 %v2087
    %v2235 = vunpack.c.h.b16 %v2087
    %v2236 = vunpack.c.l.b16 %v2088
    %v2237 = vunpack.c.h.b16 %v2088
    %v2238 = vunpack.c.l.b16 %v2089
    %v2239 = vunpack.c.h.b16 %v2089
    %v2240 = vunpack.c.l.b16 %v2090
    %v2241 = vunpack.c.h.b16 %v2090
    %v2242 = vunpack.c.l.b16 %v2091
    %v2243 = vunpack.c.h.b16 %v2091
    %v2244 = vunpack.c.l.b16 %v2092
    %v2245 = vunpack.c.h.b16 %v2092
    %v2246 = vunpack.c.l.b16 %v2093
    %v2247 = vunpack.c.h.b16 %v2093
    %v2248 = vunpack.c.l.b16 %v2094
    %v2249 = vunpack.c.h.b16 %v2094
    %v2250 = vunpack.c.l.b16 %v2095
    %v2251 = vunpack.c.h.b16 %v2095
    %v2252 = vunpack.c.l.b16 %v2096
    %v2253 = vunpack.c.h.b16 %v2096
    %v2254 = vunpack.c.l.b16 %v2097
    %v2255 = vunpack.c.h.b16 %v2097
    %v2256 = vunpack.c.l.b16 %v2098
    %v2257 = vunpack.c.h.b16 %v2098
    %v2258 = vunpack.c.l.b16 %v2099
    %v2259 = vunpack.c.h.b16 %v2099
    %v2260 = vunpack.c.l.b16 %v2100
    %v2261 = vunpack.c.h.b16 %v2100
    %v2262 = vunpack.c.l.b16 %v2101
    %v2263 = vunpack.c.h.b16 %v2101
    %v2264 = vunpack.c.l.b16 %v2102
    %v2265 = vunpack.c.h.b16 %v2102
    %v2266 = vunpack.c.l.b16 %v2103
    %v2267 = vunpack.c.h.b16 %v2103
    %v2268 = vunpack.c.l.b16 %v2104
    %v2269 = vunpack.c.h.b16 %v2104
    %v2270 = vunpack.c.l.b16 %v2105
    %v2271 = vunpack.c.h.b16 %v2105
    %v2272 = vunpack.c.l.b16 %v2106
    %v2273 = vunpack.c.h.b16 %v2106
    %v2274 = vunpack.c.l.b16 %v2107
    %v2275 = vunpack.c.h.b16 %v2107
    %v2276 = vunpack.c.l.b16 %v2108
    %v2277 = vunpack.c.h.b16 %v2108
    %v2278 = vunpack.c.l.b16 %v2109
    %v2279 = vunpack.c.h.b16 %v2109
    %v2280 = vunpack.c.l.b16 %v2110
    %v2281 = vunpack.c.h.b16 %v2110
    %v2282 = vunpack.c.l.b16 %v2111
    %v2283 = vunpack.c.h.b16 %v2111
    %v2284 = vunpack.c.l.b16 %v2112
    %v2285 = vunpack.c.h.b16 %v2112
    %v2286 = vunpack.c.l.b16 %v2113
    %v2287 = vunpack.c.h.b16 %v2113
    %v2288 = vunpack.c.l.b16 %v2114
    %v2289 = vunpack.c.h.b16 %v2114
    %v2290 = vunpack.c.l.b16 %v2115
    %v2291 = vunpack.c.h.b16 %v2115
    %v2292 = vunpack.c.l.b16 %v2116
    %v2293 = vunpack.c.h.b16 %v2116
    %v2294 = vunpack.c.l.b16 %v2117
    %v2295 = vunpack.c.h.b16 %v2117
    %v2296 = vunpack.c.l.b16 %v2118
    %v2297 = vunpack.c.h.b16 %v2118
    %v2298 = vunpack.c.l.b16 %v2119
    %v2299 = vunpack.c.h.b16 %v2119
    %v2300 = vunpack.c.l.b16 %v2120
    %v2301 = vunpack.c.h.b16 %v2120
    %v2302 = vunpack.c.l.b16 %v2121
    %v2303 = vunpack.c.h.b16 %v2121
    %v2304 = vunpack.c.l.b16 %v2122
    %v2305 = vunpack.c.h.b16 %v2122
    %v2306 = vunpack.c.l.b16 %v2123
    %v2307 = vunpack.c.h.b16 %v2123
    %v2308 = vunpack.c.l.b16 %v2124
    %v2309 = vunpack.c.h.b16 %v2124
    %v2310 = vunpack.c.l.b16 %v2125
    %v2311 = vunpack.c.h.b16 %v2125
    %v2312 = vunpack.c.l.b16 %v2126
    %v2313 = vunpack.c.h.b16 %v2126
    %v2314 = vunpack.c.l.b16 %v2127
    %v2315 = vunpack.c.h.b16 %v2127
    %v2316 = vunpack.c.l.b16 %v2128
    %v2317 = vunpack.c.h.b16 %v2128
    %v2318 = vunpack.c.l.b16 %v2129
    %v2319 = vunpack.c.h.b16 %v2129
    %v2320 = vunpack.c.l.b16 %v2130
    %v2321 = vunpack.c.h.b16 %v2130
    %v2322 = vunpack.c.l.b16 %v2131
    %v2323 = vunpack.c.h.b16 %v2131
    %v2324 = vunpack.c.l.b16 %v2132
    %v2325 = vunpack.c.h.b16 %v2132
    %v2326 = vunpack.c.l.b16 %v2133
    %v2327 = vunpack.c.h.b16 %v2133
    %v2328 = vunpack.c.l.b16 %v2134
    %v2329 = vunpack.c.h.b16 %v2134
    %v2330 = vunpack.c.l.b16 %v2135
    %v2331 = vunpack.c.h.b16 %v2135
    %v2332 = vunpack.c.l.b16 %v2136
    %v2333 = vunpack.c.h.b16 %v2136
    %v2334 = vunpack.c.l.b16 %v2137
    %v2335 = vunpack.c.h.b16 %v2137
    %v2336 = vunpack.c.l.b16 %v2138
    %v2337 = vunpack.c.h.b16 %v2138
    %v2338 = vunpack.c.l.b16 %v2139
    %v2339 = vunpack.c.h.b16 %v2139
    %v2340 = vunpack.c.l.b16 %v2140
    %v2341 = vunpack.c.h.b16 %v2140
    %v2342 = vunpack.c.l.b16 %v2141
    %v2343 = vunpack.c.h.b16 %v2141
    %v2344 = vunpack.c.l.b16 %v2142
    %v2345 = vunpack.c.h.b16 %v2142
    %v2346 = vunpack.c.l.b16 %v2143
    %v2347 = vunpack.c.h.b16 %v2143
    %v2348 = vpack.c.b16 %v2222, %v2220
    %v2349 = vpack.c.b16 %v2223, %v2221
    %v2350 = vpack.c.b16 %v2226, %v2224
    %v2351 = vpack.c.b16 %v2227, %v2225
    %v2352 = vpack.c.b16 %v2230, %v2228
    %v2353 = vpack.c.b16 %v2231, %v2229
    %v2354 = vpack.c.b16 %v2234, %v2232
    %v2355 = vpack.c.b16 %v2235, %v2233
    %v2356 = vpack.c.b16 %v2238, %v2236
    %v2357 = vpack.c.b16 %v2239, %v2237
    %v2358 = vpack.c.b16 %v2242, %v2240
    %v2359 = vpack.c.b16 %v2243, %v2241
    %v2360 = vpack.c.b16 %v2246, %v2244
    %v2361 = vpack.c.b16 %v2247, %v2245
    %v2362 = vpack.c.b16 %v2250, %v2248
    %v2363 = vpack.c.b16 %v2251, %v2249
    %v2364 = vpack.c.b16 %v2254, %v2252
    %v2365 = vpack.c.b16 %v2255, %v2253
    %v2366 = vpack.c.b16 %v2258, %v2256
    %v2367 = vpack.c.b16 %v2259, %v2257
    %v2368 = vpack.c.b16 %v2262, %v2260
    %v2369 = vpack.c.b16 %v2263, %v2261
    %v2370 = vpack.c.b16 %v2266, %v2264
    %v2371 = vpack.c.b16 %v2267, %v2265
    %v2372 = vpack.c.b16 %v2270, %v2268
    %v2373 = vpack.c.b16 %v2271, %v2269
    %v2374 = vpack.c.b16 %v2274, %v2272
    %v2375 = vpack.c.b16 %v2275, %v2273
    %v2376 = vpack.c.b16 %v2278, %v2276
    %v2377 = vpack.c.b16 %v2279, %v2277
    %v2378 = vpack.c.b16 %v2282, %v2280
    %v2379 = vpack.c.b16 %v2283, %v2281
    %v2380 = vpack.c.b16 %v2286, %v2284
    %v2381 = vpack.c.b16 %v2287, %v2285
    %v2382 = vpack.c.b16 %v2290, %v2288
    %v2383 = vpack.c.b16 %v2291, %v2289
    %v2384 = vpack.c.b16 %v2294, %v2292
    %v2385 = vpack.c.b16 %v2295, %v2293
    %v2386 = vpack.c.b16 %v2298, %v2296
    %v2387 = vpack.c.b16 %v2299, %v2297
    %v2388 = vpack.c.b16 %v2302, %v2300
    %v2389 = vpack.c.b16 %v2303, %v2301
    %v2390 = vpack.c.b16 %v2306, %v2304
    %v2391 = vpack.c.b16 %v2307, %v2305
    %v2392 = vpack.c.b16 %v2310, %v2308
    %v2393 = vpack.c.b16 %v2311, %v2309
    %v2394 = vpack.c.b16 %v2314, %v2312
    %v2395 = vpack.c.b16 %v2315, %v2313
    %v2396 = vpack.c.b16 %v2318, %v2316
    %v2397 = vpack.c.b16 %v2319, %v2317
    %v2398 = vpack.c.b16 %v2322, %v2320
    %v2399 = vpack.c.b16 %v2323, %v2321
    %v2400 = vpack.c.b16 %v2326, %v2324
    %v2401 = vpack.c.b16 %v2327, %v2325
    %v2402 = vpack.c.b16 %v2330, %v2328
    %v2403 = vpack.c.b16 %v2331, %v2329
    %v2404 = vpack.c.b16 %v2334, %v2332
    %v2405 = vpack.c.b16 %v2335, %v2333
    %v2406 = vpack.c.b16 %v2338, %v2336
    %v2407 = vpack.c.b16 %v2339, %v2337
    %v2408 = vpack.c.b16 %v2342, %v2340
    %v2409 = vpack.c.b16 %v2343, %v2341
    %v2410 = vpack.c.b16 %v2346, %v2344
    %v2411 = vpack.c.b16 %v2347, %v2345
    %2476 = vmatprep.subr.bf16.mxu0 %v2363
    %2477 = vmatpush1.bf16.msra.mxu0 %v2362
    %2478 = vmatprep.subr.bf16.mxu0 %v2361
    %2479 = vmatpush1.bf16.msra.mxu0 %v2360
    %2480 = vmatprep.subr.bf16.mxu0 %v2359
    %2481 = vmatpush1.bf16.msra.mxu0 %v2358
    %2482 = vmatprep.subr.bf16.mxu0 %v2357
    %2483 = vmatpush1.bf16.msra.mxu0 %v2356
    %2484 = vmatprep.subr.bf16.mxu0 %v2355
    %2485 = vmatpush1.bf16.msra.mxu0 %v2354
    %2486 = vmatprep.subr.bf16.mxu0 %v2353
    %2487 = vmatpush1.bf16.msra.mxu0 %v2352
    %2488 = vmatprep.subr.bf16.mxu0 %v2351
    %2489 = vmatpush1.bf16.msra.mxu0 %v2350
    %2490 = vmatprep.subr.bf16.mxu0 %v2349
    %2491 = vmatpush1.bf16.msra.mxu0 %v2348
    %2492 = vmatprep.subr.bf16.mxu0 %v2379
    %2493 = vmatpush2.bf16.msra.mxu0 %v2378
    %2494 = vmatprep.subr.bf16.mxu0 %v2377
    %2495 = vmatpush2.bf16.msra.mxu0 %v2376
    %2496 = vmatprep.subr.bf16.mxu0 %v2375
    %2497 = vmatpush2.bf16.msra.mxu0 %v2374
    %2498 = vmatprep.subr.bf16.mxu0 %v2373
    %2499 = vmatpush2.bf16.msra.mxu0 %v2372
    %2500 = vmatprep.subr.bf16.mxu0 %v2371
    %2501 = vmatpush2.bf16.msra.mxu0 %v2370
    %2502 = vmatprep.subr.bf16.mxu0 %v2369
    %2503 = vmatpush2.bf16.msra.mxu0 %v2368
    %2504 = vmatprep.subr.bf16.mxu0 %v2367
    %2505 = vmatpush2.bf16.msra.mxu0 %v2366
    %2506 = vmatprep.subr.bf16.mxu0 %v2365
    %2507 = vmatpush2.bf16.msra.mxu0 %v2364
    %2508 = vmatprep.mubr.bf16.mxu0 %v2048
    %2509 = vmatmul.mubr.bf16.gmra.mxu0 %v2047
    %v2510 = vpop.f32.mrf.mxu0
    %v2511 = vadd.f32 %v2149, %v2510
    %v2512 = vpop.f32.mrf.mxu0
    %v2513 = vadd.f32 %v2153, %v2512
    %v2514 = vpop.f32.mrf.mxu0
    %v2515 = vadd.f32 %v2149, %v2514
    %v2516 = vpop.f32.mrf.mxu0
    %v2517 = vadd.f32 %v2153, %v2516
    %2518 = vdwg.mxu0
    %2519 = vmatprep.subr.bf16.mxu0 %v2395
    %2520 = vmatpush1.bf16.msra.mxu0 %v2394
    %2521 = vmatprep.subr.bf16.mxu0 %v2393
    %2522 = vmatpush1.bf16.msra.mxu0 %v2392
    %2523 = vmatprep.subr.bf16.mxu0 %v2391
    %2524 = vmatpush1.bf16.msra.mxu0 %v2390
    %2525 = vmatprep.subr.bf16.mxu0 %v2389
    %2526 = vmatpush1.bf16.msra.mxu0 %v2388
    %2527 = vmatprep.subr.bf16.mxu0 %v2387
    %2528 = vmatpush1.bf16.msra.mxu0 %v2386
    %2529 = vmatprep.subr.bf16.mxu0 %v2385
    %2530 = vmatpush1.bf16.msra.mxu0 %v2384
    %2531 = vmatprep.subr.bf16.mxu0 %v2383
    %2532 = vmatpush1.bf16.msra.mxu0 %v2382
    %2533 = vmatprep.subr.bf16.mxu0 %v2381
    %2534 = vmatpush1.bf16.msra.mxu0 %v2380
    %2535 = vmatprep.subr.bf16.mxu0 %v2411
    %2536 = vmatpush2.bf16.msra.mxu0 %v2410
    %2537 = vmatprep.subr.bf16.mxu0 %v2409
    %2538 = vmatpush2.bf16.msra.mxu0 %v2408
    %2539 = vmatprep.subr.bf16.mxu0 %v2407
    %2540 = vmatpush2.bf16.msra.mxu0 %v2406
    %2541 = vmatprep.subr.bf16.mxu0 %v2405
    %2542 = vmatpush2.bf16.msra.mxu0 %v2404
    %2543 = vmatprep.subr.bf16.mxu0 %v2403
    %2544 = vmatpush2.bf16.msra.mxu0 %v2402
    %2545 = vmatprep.subr.bf16.mxu0 %v2401
    %2546 = vmatpush2.bf16.msra.mxu0 %v2400
    %2547 = vmatprep.subr.bf16.mxu0 %v2399
    %2548 = vmatpush2.bf16.msra.mxu0 %v2398
    %2549 = vmatprep.subr.bf16.mxu0 %v2397
    %2550 = vmatpush2.bf16.msra.mxu0 %v2396
    %2551 = vmatprep.mubr.bf16.mxu0 %v2050
    %2552 = vmatmul.mubr.bf16.gmra.mxu0 %v2049
    %v2553 = vpop.f32.mrf.mxu0
    %v2554 = vadd.f32 %v2511, %v2553
    %v2555 = vpop.f32.mrf.mxu0
    %v2556 = vadd.f32 %v2513, %v2555
    %v2557 = vpop.f32.mrf.mxu0
    %v2558 = vadd.f32 %v2515, %v2557
    %v2559 = vpop.f32.mrf.mxu0
    %v2560 = vadd.f32 %v2517, %v2559
    %2561 = vdwg.mxu0
    %s2562 = scalar_lea.vmem [#allocation4], %s88
    %2563 = vst [vmem:[%s2562] sm:$0xff] %v2554
    %2564 = vst [vmem:[%s2562 + $0x8] sm:$0xff] %v2558
    %v2565 = vpack.c.bf16 %v2560, %v2556
    %v2567 = vunpack.c.l.b16 %v2565
    %v2568 = vunpack.c.h.b16 %v2565
    %v2569 = vpack.c.b16 %v2567, %v2567
    %v2570 = vpack.c.b16 %v2568, %v2568
    %s2573 = smul.addr %s2071, 4
    %s2574 = scalar_lea.vmem [#allocation3], %s2573
    %2575 = vst [vmem:[%s2574] sm:$0xf] %v2569
    %2576 = vst [vmem:[%s2574 + $0x4] sm:$0xf] %v2570
    %p2577 = scmp.eq.s32.totalorder 0, 0
    // Predicated region
    $region46: #{tpu_custom_call.1} parent=1 // pred_check
      %p2578 = pneg %p2577
    $region47: #{tpu_custom_call.1} parent=1 // pred_check_branch
      %2580 = sbr.rel (%p2578) target = $region49
    $region48: #{tpu_custom_call.1} parent=1 // pred_region
      %s2581 = sld [smem:[#allocation6]]
      %v2582 = vld [vmem:[#allocation2] sm:$0xff]
      %v2583 = vld [vmem:[#allocation2 + $0x8] sm:$0xff]
      %v2584 = vld [vmem:[#allocation2 + $0x10] sm:$0xff]
      %v2585 = vld [vmem:[#allocation2 + $0x18] sm:$0xff]
      %v2586 = vld [vmem:[#allocation3] sm:$0xf]
      %v2587 = vld [vmem:[#allocation3 + $0x4] sm:$0xf]
      %v2588 = vld [vmem:[#allocation4] sm:$0xff]
      %v2589 = vld [vmem:[#allocation4 + $0x8] sm:$0xff]
      %v2590 = vlaneseq
      %v2591 = vshrl.u32 %v2590, 7
      %v2592 = vadd.s32 %v2591, 8
      %v2593 = vstv %s2581
      %vm2594 = vcmp.lt.s32.totalorder %v2591, %v2593
      %vm2595 = vcmp.lt.s32.totalorder %v2592, %v2593
      %v2596 = vcvt.s32.f32 %v2591
      %v2597 = vcvt.s32.f32 %v2592
      %v2598 = vsel %vm2594, 1, 0
      %v2599 = vsel %vm2595, 1, 0
      %vm2600 = vcmp.eq.s32.totalorder %v2598, 1
      %vm2601 = vcmp.eq.s32.totalorder %v2599, 1
      %v2602 = vsel %vm2600, %v2588, -1e+30
      %v2603 = vsel %vm2601, %v2589, -1e+30
      %v2604 = vmax.f32 %v2602, %v2603
      %v2605 = vrot.slane %v2604, 4
      %v2606 = vmax.f32 %v2604, %v2605
      %v2607 = vrot.slane %v2606, 2
      %v2608 = vmax.f32 %v2606, %v2607
      %v2609 = vrot.slane %v2608, 1
      %v2610 = vmax.f32 %v2608, %v2609
      %vm2611 = vcmp.eq.f32.partialorder %v2602, %v2610
      %vm2612 = vcmp.eq.f32.partialorder %v2603, %v2610
      %v2613 = vsel %vm2611, %v2596, 16.0
      %v2614 = vsel %vm2612, %v2597, 16.0
      %v2615 = vmin.f32 %v2613, %v2614
      %v2616 = vrot.slane %v2615, 4
      %v2617 = vmin.f32 %v2615, %v2616
      %v2618 = vrot.slane %v2617, 2
      %v2619 = vmin.f32 %v2617, %v2618
      %v2620 = vrot.slane %v2619, 1
      %v2621 = vmin.f32 %v2619, %v2620
      %vm2622 = vcmp.eq.f32.partialorder %v2596, %v2621
      %vm2623 = vcmp.eq.f32.partialorder %v2597, %v2621
      %v2624 = vsel %vm2622, 1.0, 0.0
      %v2625 = vsel %vm2623, 1.0, 0.0
      %v2626 = vpack.c.bf16 %v2625, %v2624
      %2627 = vxpose.xlu0.c.b16.start [1/8] %v2626, 128
      %2628 = vxpose.xlu0.c.b16.cont [2/8] 0, 128
      %2629 = vxpose.xlu0.c.b16.cont [3/8] 0, 128
      %2630 = vxpose.xlu0.c.b16.cont [4/8] 0, 128
      %2631 = vxpose.xlu0.c.b16.cont [5/8] 0, 128
      %2632 = vxpose.xlu0.c.b16.cont [6/8] 0, 128
      %2633 = vxpose.xlu0.c.b16.cont [7/8] 0, 128
      %2634 = vxpose.xlu0.c.b16.end [8/8] 0, 128
      %v2635 = vpop.trf.xlu0
      %v2636 = vpop.trf.xlu0
      %v2637 = vpop.trf.xlu0
      %v2638 = vpop.trf.xlu0
      %v2639 = vpop.trf.xlu0
      %v2640 = vpop.trf.xlu0
      %v2641 = vpop.trf.xlu0
      %v2642 = vpop.trf.xlu0
      %v2645 = vunpack.c.l.b16 %v2586
      %v2646 = vunpack.c.l.b16 %v2587
      %v2647 = vpack.c.b16 %v2646, %v2645
      %vm2649 = vcmask 130048
      %v2651 = vsel %vm2649, %v2635, 0
      %v2654 = vsel %vm2649, %v2636, 0
      %v2657 = vsel %vm2649, %v2637, 0
      %v2660 = vsel %vm2649, %v2638, 0
      %v2663 = vsel %vm2649, %v2639, 0
      %v2666 = vsel %vm2649, %v2640, 0
      %v2669 = vsel %vm2649, %v2641, 0
      %v2672 = vsel %vm2649, %v2642, 0
      %2674 = vmatprep.subr.bf16.mxu0 0
      %2675 = vmatpush1.bf16.msra.mxu0 0
      %2676 = vmatprep.subr.bf16.mxu0 0
      %2677 = vmatpush1.bf16.msra.mxu0 0
      %2678 = vmatprep.subr.bf16.mxu0 0
      %2679 = vmatpush1.bf16.msra.mxu0 0
      %2680 = vmatprep.subr.bf16.mxu0 0
      %2681 = vmatpush1.bf16.msra.mxu0 0
      %2682 = vmatprep.subr.bf16.mxu0 0
      %2683 = vmatpush1.bf16.msra.mxu0 0
      %2684 = vmatprep.subr.bf16.mxu0 0
      %2685 = vmatpush1.bf16.msra.mxu0 0
      %2686 = vmatprep.subr.bf16.mxu0 0
      %2687 = vmatpush1.bf16.msra.mxu0 0
      %2688 = vmatprep.subr.bf16.mxu0 0
      %2689 = vmatpush1.bf16.msra.mxu0 %v2647
      %2690 = vmatprep.subr.bf16.mxu0 0
      %2691 = vmatpush2.bf16.msra.mxu0 0
      %2692 = vmatprep.subr.bf16.mxu0 0
      %2693 = vmatpush2.bf16.msra.mxu0 0
      %2694 = vmatprep.subr.bf16.mxu0 0
      %2695 = vmatpush2.bf16.msra.mxu0 0
      %2696 = vmatprep.subr.bf16.mxu0 0
      %2697 = vmatpush2.bf16.msra.mxu0 0
      %2698 = vmatprep.subr.bf16.mxu0 0
      %2699 = vmatpush2.bf16.msra.mxu0 0
      %2700 = vmatprep.subr.bf16.mxu0 0
      %2701 = vmatpush2.bf16.msra.mxu0 0
      %2702 = vmatprep.subr.bf16.mxu0 0
      %2703 = vmatpush2.bf16.msra.mxu0 0
      %2704 = vmatprep.subr.bf16.mxu0 0
      %2705 = vmatpush2.bf16.msra.mxu0 0
      %2706 = vmatprep.mubr.bf16.mxu0 0
      %2707 = vmatmul.mubr.bf16.gmra.mxu0 %v2651
      %v2708 = vpop.f32.mrf.mxu0
      %v2709 = vadd.f32 0.0, %v2708
      %v2710 = vpop.f32.mrf.mxu0
      %v2711 = vpop.f32.mrf.mxu0
      %v2712 = vadd.f32 0.0, %v2711
      %v2713 = vpop.f32.mrf.mxu0
      %2714 = vmatprep.mubr.bf16.mxu0 0
      %2715 = vmatmul.mubr.bf16.gmra.mxu0 %v2654
      %v2716 = vpop.f32.mrf.mxu0
      %v2717 = vadd.f32 0.0, %v2716
      %v2718 = vpop.f32.mrf.mxu0
      %v2719 = vpop.f32.mrf.mxu0
      %v2720 = vadd.f32 0.0, %v2719
      %v2721 = vpop.f32.mrf.mxu0
      %2722 = vmatprep.mubr.bf16.mxu0 0
      %2723 = vmatmul.mubr.bf16.gmra.mxu0 %v2657
      %v2724 = vpop.f32.mrf.mxu0
      %v2725 = vadd.f32 0.0, %v2724
      %v2726 = vpop.f32.mrf.mxu0
      %v2727 = vpop.f32.mrf.mxu0
      %v2728 = vadd.f32 0.0, %v2727
      %v2729 = vpop.f32.mrf.mxu0
      %2730 = vmatprep.mubr.bf16.mxu0 0
      %2731 = vmatmul.mubr.bf16.gmra.mxu0 %v2660
      %v2732 = vpop.f32.mrf.mxu0
      %v2733 = vadd.f32 0.0, %v2732
      %v2734 = vpop.f32.mrf.mxu0
      %v2735 = vpop.f32.mrf.mxu0
      %v2736 = vadd.f32 0.0, %v2735
      %v2737 = vpop.f32.mrf.mxu0
      %2738 = vmatprep.mubr.bf16.mxu0 0
      %2739 = vmatmul.mubr.bf16.gmra.mxu0 %v2663
      %v2740 = vpop.f32.mrf.mxu0
      %v2741 = vadd.f32 0.0, %v2740
      %v2742 = vpop.f32.mrf.mxu0
      %v2743 = vpop.f32.mrf.mxu0
      %v2744 = vadd.f32 0.0, %v2743
      %v2745 = vpop.f32.mrf.mxu0
      %2746 = vmatprep.mubr.bf16.mxu0 0
      %2747 = vmatmul.mubr.bf16.gmra.mxu0 %v2666
      %v2748 = vpop.f32.mrf.mxu0
      %v2749 = vadd.f32 0.0, %v2748
      %v2750 = vpop.f32.mrf.mxu0
      %v2751 = vpop.f32.mrf.mxu0
      %v2752 = vadd.f32 0.0, %v2751
      %v2753 = vpop.f32.mrf.mxu0
      %2754 = vmatprep.mubr.bf16.mxu0 0
      %2755 = vmatmul.mubr.bf16.gmra.mxu0 %v2669
      %v2756 = vpop.f32.mrf.mxu0
      %v2757 = vadd.f32 0.0, %v2756
      %v2758 = vpop.f32.mrf.mxu0
      %v2759 = vpop.f32.mrf.mxu0
      %v2760 = vadd.f32 0.0, %v2759
      %v2761 = vpop.f32.mrf.mxu0
      %2762 = vmatprep.mubr.bf16.mxu0 0
      %2763 = vmatmul.mubr.bf16.gmra.mxu0 %v2672
      %v2764 = vpop.f32.mrf.mxu0
      %v2765 = vadd.f32 0.0, %v2764
      %v2766 = vpop.f32.mrf.mxu0
      %v2767 = vpop.f32.mrf.mxu0
      %v2768 = vadd.f32 0.0, %v2767
      %v2769 = vpop.f32.mrf.mxu0
      %2770 = vdwg.mxu0
      %v2771 = vpack.c.bf16 %v2712, %v2709
      %v2772 = vpack.c.bf16 %v2720, %v2717
      %v2773 = vpack.c.bf16 %v2728, %v2725
      %v2774 = vpack.c.bf16 %v2736, %v2733
      %v2775 = vpack.c.bf16 %v2744, %v2741
      %v2776 = vpack.c.bf16 %v2752, %v2749
      %v2777 = vpack.c.bf16 %v2760, %v2757
      %v2778 = vpack.c.bf16 %v2768, %v2765
      %2779 = vmatprep.subr.bf16.mxu0 0
      %2780 = vmatpush1.bf16.xpose.msra.mxu0 %v2778
      %2781 = vmatprep.subr.bf16.mxu0 0
      %2782 = vmatpush1.bf16.xpose.msra.mxu0 %v2777
      %2783 = vmatprep.subr.bf16.mxu0 0
      %2784 = vmatpush1.bf16.xpose.msra.mxu0 %v2776
      %2785 = vmatprep.subr.bf16.mxu0 0
      %2786 = vmatpush1.bf16.xpose.msra.mxu0 %v2775
      %2787 = vmatprep.subr.bf16.mxu0 0
      %2788 = vmatpush1.bf16.xpose.msra.mxu0 %v2774
      %2789 = vmatprep.subr.bf16.mxu0 0
      %2790 = vmatpush1.bf16.xpose.msra.mxu0 %v2773
      %2791 = vmatprep.subr.bf16.mxu0 0
      %2792 = vmatpush1.bf16.xpose.msra.mxu0 %v2772
      %2793 = vmatprep.subr.bf16.mxu0 0
      %2794 = vmatpush1.bf16.xpose.msra.mxu0 %v2771
      %2795 = vmatprep.subr.bf16.mxu0 0
      %2796 = vmatpush2.bf16.xpose.msra.mxu0 0
      %2797 = vmatprep.subr.bf16.mxu0 0
      %2798 = vmatpush2.bf16.xpose.msra.mxu0 0
      %2799 = vmatprep.subr.bf16.mxu0 0
      %2800 = vmatpush2.bf16.xpose.msra.mxu0 0
      %2801 = vmatprep.subr.bf16.mxu0 0
      %2802 = vmatpush2.bf16.xpose.msra.mxu0 0
      %2803 = vmatprep.subr.bf16.mxu0 0
      %2804 = vmatpush2.bf16.xpose.msra.mxu0 0
      %2805 = vmatprep.subr.bf16.mxu0 0
      %2806 = vmatpush2.bf16.xpose.msra.mxu0 0
      %2807 = vmatprep.subr.bf16.mxu0 0
      %2808 = vmatpush2.bf16.xpose.msra.mxu0 0
      %2809 = vmatprep.subr.bf16.mxu0 0
      %2810 = vmatpush2.bf16.xpose.msra.mxu0 0
      %2811 = vmatprep.mubr.bf16.mxu0 0
      %2812 = vmatmul.mubr.bf16.gmra.mxu0 %v2647
      %v2813 = vpop.f32.mrf.mxu0
      %v2814 = vadd.f32 0.0, %v2813
      %v2815 = vpop.f32.mrf.mxu0
      %v2816 = vpop.f32.mrf.mxu0
      %v2817 = vadd.f32 0.0, %v2816
      %v2818 = vpop.f32.mrf.mxu0
      %2819 = vdwg.mxu0
      %v2820 = vmul.f32 %v2814, 0.088388346
      %v2821 = vmul.f32 %v2817, 0.088388346
      %v2822 = vsel %vm2600, %v2820, -1e+30
      %v2823 = vsel %vm2601, %v2821, -1e+30
      %v2824 = vmax.f32 %v2822, %v2823
      %v2825 = vrot.slane %v2824, 4
      %v2826 = vmax.f32 %v2824, %v2825
      %v2827 = vrot.slane %v2826, 2
      %v2828 = vmax.f32 %v2826, %v2827
      %v2829 = vrot.slane %v2828, 1
      %v2830 = vmax.f32 %v2828, %v2829
      %v2831 = vsub.f32 %v2822, %v2830
      %v2832 = vsub.f32 %v2823, %v2830
      %v2833 = vmul.f32 %v2831, 1.442695
      %v2834 = vpow.pop %v2833
      %v2835 = vmul.f32 %v2832, 1.442695
      %v2836 = vpow.pop %v2835
      %v2837 = vadd.f32 %v2834, %v2836
      %v2838 = vrot.slane %v2837, 4
      %v2839 = vadd.f32 %v2837, %v2838
      %v2840 = vrot.slane %v2839, 2
      %v2841 = vadd.f32 %v2839, %v2840
      %v2842 = vrot.slane %v2841, 1
      %v2843 = vadd.f32 %v2841, %v2842
      %v2844 = vrcp.pop %v2843
      %v2845 = vmul.f32 %v2834, %v2844
      %v2846 = vmul.f32 %v2836, %v2844
      %2847 = vst [vmem:[#allocation16] sm:$0xff] %v2845
      %2848 = vst [vmem:[#allocation16 + $0x8] sm:$0xff] %v2846
      %v2849 = vpack.c.bf16 %v2846, %v2845
      %2850 = vxpose.xlu0.c.b16.start [1/8] %v2849, 128
      %2851 = vxpose.xlu0.c.b16.cont [2/8] 0, 128
      %2852 = vxpose.xlu0.c.b16.cont [3/8] 0, 128
      %2853 = vxpose.xlu0.c.b16.cont [4/8] 0, 128
      %2854 = vxpose.xlu0.c.b16.cont [5/8] 0, 128
      %2855 = vxpose.xlu0.c.b16.cont [6/8] 0, 128
      %2856 = vxpose.xlu0.c.b16.cont [7/8] 0, 128
      %2857 = vxpose.xlu0.c.b16.end [8/8] 0, 128
      %v2858 = vpop.trf.xlu0
      %v2859 = vpop.trf.xlu0
      %v2860 = vpop.trf.xlu0
      %v2861 = vpop.trf.xlu0
      %v2862 = vpop.trf.xlu0
      %v2863 = vpop.trf.xlu0
      %v2864 = vpop.trf.xlu0
      %v2865 = vpop.trf.xlu0
      %v2870 = vunpack.c.l.b16 %v2582
      %v2871 = vunpack.c.h.b16 %v2582
      %v2872 = vunpack.c.l.b16 %v2583
      %v2873 = vunpack.c.h.b16 %v2583
      %v2874 = vunpack.c.l.b16 %v2584
      %v2875 = vunpack.c.h.b16 %v2584
      %v2876 = vunpack.c.l.b16 %v2585
      %v2877 = vunpack.c.h.b16 %v2585
      %v2878 = vpack.c.b16 %v2874, %v2870
      %v2879 = vpack.c.b16 %v2875, %v2871
      %v2880 = vpack.c.b16 %v2876, %v2872
      %v2881 = vpack.c.b16 %v2877, %v2873
      %v2887 = vsel %vm2649, %v2858, 0
      %v2890 = vsel %vm2649, %v2859, 0
      %v2893 = vsel %vm2649, %v2860, 0
      %v2896 = vsel %vm2649, %v2861, 0
      %v2899 = vsel %vm2649, %v2862, 0
      %v2902 = vsel %vm2649, %v2863, 0
      %v2905 = vsel %vm2649, %v2864, 0
      %v2908 = vsel %vm2649, %v2865, 0
      %2910 = vmatprep.subr.bf16.mxu0 0
      %2911 = vmatpush1.bf16.msra.mxu0 0
      %2912 = vmatprep.subr.bf16.mxu0 0
      %2913 = vmatpush1.bf16.msra.mxu0 0
      %2914 = vmatprep.subr.bf16.mxu0 0
      %2915 = vmatpush1.bf16.msra.mxu0 0
      %2916 = vmatprep.subr.bf16.mxu0 0
      %2917 = vmatpush1.bf16.msra.mxu0 0
      %2918 = vmatprep.subr.bf16.mxu0 0
      %2919 = vmatpush1.bf16.msra.mxu0 0
      %2920 = vmatprep.subr.bf16.mxu0 0
      %2921 = vmatpush1.bf16.msra.mxu0 0
      %2922 = vmatprep.subr.bf16.mxu0 0
      %2923 = vmatpush1.bf16.msra.mxu0 0
      %2924 = vmatprep.subr.bf16.mxu0 %v2879
      %2925 = vmatpush1.bf16.msra.mxu0 %v2878
      %2926 = vmatprep.subr.bf16.mxu0 0
      %2927 = vmatpush2.bf16.msra.mxu0 0
      %2928 = vmatprep.subr.bf16.mxu0 0
      %2929 = vmatpush2.bf16.msra.mxu0 0
      %2930 = vmatprep.subr.bf16.mxu0 0
      %2931 = vmatpush2.bf16.msra.mxu0 0
      %2932 = vmatprep.subr.bf16.mxu0 0
      %2933 = vmatpush2.bf16.msra.mxu0 0
      %2934 = vmatprep.subr.bf16.mxu0 0
      %2935 = vmatpush2.bf16.msra.mxu0 0
      %2936 = vmatprep.subr.bf16.mxu0 0
      %2937 = vmatpush2.bf16.msra.mxu0 0
      %2938 = vmatprep.subr.bf16.mxu0 0
      %2939 = vmatpush2.bf16.msra.mxu0 0
      %2940 = vmatprep.subr.bf16.mxu0 0
      %2941 = vmatpush2.bf16.msra.mxu0 0
      %2942 = vmatprep.mubr.bf16.mxu0 0
      %2943 = vmatmul.mubr.bf16.gmra.mxu0 %v2887
      %v2944 = vpop.f32.mrf.mxu0
      %v2945 = vadd.f32 0.0, %v2944
      %v2946 = vpop.f32.mrf.mxu0
      %v2947 = vadd.f32 0.0, %v2946
      %v2948 = vpop.f32.mrf.mxu0
      %v2949 = vpop.f32.mrf.mxu0
      %2950 = vmatprep.mubr.bf16.mxu0 0
      %2951 = vmatmul.mubr.bf16.gmra.mxu0 %v2890
      %v2952 = vpop.f32.mrf.mxu0
      %v2953 = vpop.f32.mrf.mxu0
      %v2954 = vpop.f32.mrf.mxu0
      %v2955 = vpop.f32.mrf.mxu0
      %2956 = vmatprep.mubr.bf16.mxu0 0
      %2957 = vmatmul.mubr.bf16.gmra.mxu0 %v2893
      %v2958 = vpop.f32.mrf.mxu0
      %v2959 = vpop.f32.mrf.mxu0
      %v2960 = vpop.f32.mrf.mxu0
      %v2961 = vpop.f32.mrf.mxu0
      %2962 = vmatprep.mubr.bf16.mxu0 0
      %2963 = vmatmul.mubr.bf16.gmra.mxu0 %v2896
      %v2964 = vpop.f32.mrf.mxu0
      %v2965 = vpop.f32.mrf.mxu0
      %v2966 = vpop.f32.mrf.mxu0
      %v2967 = vpop.f32.mrf.mxu0
      %2968 = vmatprep.mubr.bf16.mxu0 0
      %2969 = vmatmul.mubr.bf16.gmra.mxu0 %v2899
      %v2970 = vpop.f32.mrf.mxu0
      %v2971 = vpop.f32.mrf.mxu0
      %v2972 = vpop.f32.mrf.mxu0
      %v2973 = vpop.f32.mrf.mxu0
      %2974 = vmatprep.mubr.bf16.mxu0 0
      %2975 = vmatmul.mubr.bf16.gmra.mxu0 %v2902
      %v2976 = vpop.f32.mrf.mxu0
      %v2977 = vpop.f32.mrf.mxu0
      %v2978 = vpop.f32.mrf.mxu0
      %v2979 = vpop.f32.mrf.mxu0
      %2980 = vmatprep.mubr.bf16.mxu0 0
      %2981 = vmatmul.mubr.bf16.gmra.mxu0 %v2905
      %v2982 = vpop.f32.mrf.mxu0
      %v2983 = vpop.f32.mrf.mxu0
      %v2984 = vpop.f32.mrf.mxu0
      %v2985 = vpop.f32.mrf.mxu0
      %2986 = vmatprep.mubr.bf16.mxu0 0
      %2987 = vmatmul.mubr.bf16.gmra.mxu0 %v2908
      %v2988 = vpop.f32.mrf.mxu0
      %v2989 = vpop.f32.mrf.mxu0
      %v2990 = vpop.f32.mrf.mxu0
      %v2991 = vpop.f32.mrf.mxu0
      %2992 = vdwg.mxu0
      %2993 = vmatprep.subr.bf16.mxu0 0
      %2994 = vmatpush1.bf16.msra.mxu0 0
      %2995 = vmatprep.subr.bf16.mxu0 0
      %2996 = vmatpush1.bf16.msra.mxu0 0
      %2997 = vmatprep.subr.bf16.mxu0 0
      %2998 = vmatpush1.bf16.msra.mxu0 0
      %2999 = vmatprep.subr.bf16.mxu0 0
      %3000 = vmatpush1.bf16.msra.mxu0 0
      %3001 = vmatprep.subr.bf16.mxu0 0
      %3002 = vmatpush1.bf16.msra.mxu0 0
      %3003 = vmatprep.subr.bf16.mxu0 0
      %3004 = vmatpush1.bf16.msra.mxu0 0
      %3005 = vmatprep.subr.bf16.mxu0 0
      %3006 = vmatpush1.bf16.msra.mxu0 0
      %3007 = vmatprep.subr.bf16.mxu0 %v2881
      %3008 = vmatpush1.bf16.msra.mxu0 %v2880
      %3009 = vmatprep.subr.bf16.mxu0 0
      %3010 = vmatpush2.bf16.msra.mxu0 0
      %3011 = vmatprep.subr.bf16.mxu0 0
      %3012 = vmatpush2.bf16.msra.mxu0 0
      %3013 = vmatprep.subr.bf16.mxu0 0
      %3014 = vmatpush2.bf16.msra.mxu0 0
      %3015 = vmatprep.subr.bf16.mxu0 0
      %3016 = vmatpush2.bf16.msra.mxu0 0
      %3017 = vmatprep.subr.bf16.mxu0 0
      %3018 = vmatpush2.bf16.msra.mxu0 0
      %3019 = vmatprep.subr.bf16.mxu0 0
      %3020 = vmatpush2.bf16.msra.mxu0 0
      %3021 = vmatprep.subr.bf16.mxu0 0
      %3022 = vmatpush2.bf16.msra.mxu0 0
      %3023 = vmatprep.subr.bf16.mxu0 0
      %3024 = vmatpush2.bf16.msra.mxu0 0
      %3025 = vmatprep.mubr.bf16.mxu0 0
      %3026 = vmatmul.mubr.bf16.gmra.mxu0 %v2887
      %v3027 = vpop.f32.mrf.mxu0
      %v3028 = vadd.f32 0.0, %v3027
      %v3029 = vpop.f32.mrf.mxu0
      %v3030 = vadd.f32 0.0, %v3029
      %v3031 = vpop.f32.mrf.mxu0
      %v3032 = vpop.f32.mrf.mxu0
      %3033 = vmatprep.mubr.bf16.mxu0 0
      %3034 = vmatmul.mubr.bf16.gmra.mxu0 %v2890
      %v3035 = vpop.f32.mrf.mxu0
      %v3036 = vpop.f32.mrf.mxu0
      %v3037 = vpop.f32.mrf.mxu0
      %v3038 = vpop.f32.mrf.mxu0
      %3039 = vmatprep.mubr.bf16.mxu0 0
      %3040 = vmatmul.mubr.bf16.gmra.mxu0 %v2893
      %v3041 = vpop.f32.mrf.mxu0
      %v3042 = vpop.f32.mrf.mxu0
      %v3043 = vpop.f32.mrf.mxu0
      %v3044 = vpop.f32.mrf.mxu0
      %3045 = vmatprep.mubr.bf16.mxu0 0
      %3046 = vmatmul.mubr.bf16.gmra.mxu0 %v2896
      %v3047 = vpop.f32.mrf.mxu0
      %v3048 = vpop.f32.mrf.mxu0
      %v3049 = vpop.f32.mrf.mxu0
      %v3050 = vpop.f32.mrf.mxu0
      %3051 = vmatprep.mubr.bf16.mxu0 0
      %3052 = vmatmul.mubr.bf16.gmra.mxu0 %v2899
      %v3053 = vpop.f32.mrf.mxu0
      %v3054 = vpop.f32.mrf.mxu0
      %v3055 = vpop.f32.mrf.mxu0
      %v3056 = vpop.f32.mrf.mxu0
      %3057 = vmatprep.mubr.bf16.mxu0 0
      %3058 = vmatmul.mubr.bf16.gmra.mxu0 %v2902
      %v3059 = vpop.f32.mrf.mxu0
      %v3060 = vpop.f32.mrf.mxu0
      %v3061 = vpop.f32.mrf.mxu0
      %v3062 = vpop.f32.mrf.mxu0
      %3063 = vmatprep.mubr.bf16.mxu0 0
      %3064 = vmatmul.mubr.bf16.gmra.mxu0 %v2905
      %v3065 = vpop.f32.mrf.mxu0
      %v3066 = vpop.f32.mrf.mxu0
      %v3067 = vpop.f32.mrf.mxu0
      %v3068 = vpop.f32.mrf.mxu0
      %3069 = vmatprep.mubr.bf16.mxu0 0
      %3070 = vmatmul.mubr.bf16.gmra.mxu0 %v2908
      %v3071 = vpop.f32.mrf.mxu0
      %v3072 = vpop.f32.mrf.mxu0
      %v3073 = vpop.f32.mrf.mxu0
      %v3074 = vpop.f32.mrf.mxu0
      %3075 = vdwg.mxu0
      %v3076 = vld [vmem:[%s7] sm:$0x1]
      %v3077 = vld [vmem:[#allocation13] sm:$0xff]
      %v3078 = vld [vmem:[#allocation13 + $0x8] sm:$0xff]
      %v3079 = vld [vmem:[#allocation13 + $0x10] sm:$0xff]
      %v3080 = vld [vmem:[#allocation13 + $0x18] sm:$0xff]
      %v3081 = vld [vmem:[#allocation13 + $0x20] sm:$0xff]
      %v3082 = vld [vmem:[#allocation13 + $0x28] sm:$0xff]
      %v3083 = vld [vmem:[#allocation13 + $0x30] sm:$0xff]
      %v3084 = vld [vmem:[#allocation13 + $0x38] sm:$0xff]
      %v3085 = vld [vmem:[#allocation13 + $0x40] sm:$0xff]
      %v3086 = vld [vmem:[#allocation13 + $0x48] sm:$0xff]
      %v3087 = vld [vmem:[#allocation13 + $0x50] sm:$0xff]
      %v3088 = vld [vmem:[#allocation13 + $0x58] sm:$0xff]
      %v3089 = vld [vmem:[#allocation13 + $0x60] sm:$0xff]
      %v3090 = vld [vmem:[#allocation13 + $0x68] sm:$0xff]
      %v3091 = vld [vmem:[#allocation13 + $0x70] sm:$0xff]
      %v3092 = vld [vmem:[#allocation13 + $0x78] sm:$0xff]
      %v3093 = vld [vmem:[#allocation13 + $0x80] sm:$0xff]
      %v3094 = vld [vmem:[#allocation13 + $0x88] sm:$0xff]
      %v3095 = vld [vmem:[#allocation13 + $0x90] sm:$0xff]
      %v3096 = vld [vmem:[#allocation13 + $0x98] sm:$0xff]
      %v3097 = vld [vmem:[#allocation13 + $0xa0] sm:$0xff]
      %v3098 = vld [vmem:[#allocation13 + $0xa8] sm:$0xff]
      %v3099 = vld [vmem:[#allocation13 + $0xb0] sm:$0xff]
      %v3100 = vld [vmem:[#allocation13 + $0xb8] sm:$0xff]
      %v3101 = vld [vmem:[#allocation13 + $0xc0] sm:$0xff]
      %v3102 = vld [vmem:[#allocation13 + $0xc8] sm:$0xff]
      %v3103 = vld [vmem:[#allocation13 + $0xd0] sm:$0xff]
      %v3104 = vld [vmem:[#allocation13 + $0xd8] sm:$0xff]
      %v3105 = vld [vmem:[#allocation13 + $0xe0] sm:$0xff]
      %v3106 = vld [vmem:[#allocation13 + $0xe8] sm:$0xff]
      %v3107 = vld [vmem:[#allocation13 + $0xf0] sm:$0xff]
      %v3108 = vld [vmem:[#allocation13 + $0xf8] sm:$0xff]
      %v3109 = vld [vmem:[#allocation13 + $0x100] sm:$0xff]
      %v3110 = vld [vmem:[#allocation13 + $0x108] sm:$0xff]
      %v3111 = vld [vmem:[#allocation13 + $0x110] sm:$0xff]
      %v3112 = vld [vmem:[#allocation13 + $0x118] sm:$0xff]
      %v3113 = vld [vmem:[#allocation13 + $0x120] sm:$0xff]
      %v3114 = vld [vmem:[#allocation13 + $0x128] sm:$0xff]
      %v3115 = vld [vmem:[#allocation13 + $0x130] sm:$0xff]
      %v3116 = vld [vmem:[#allocation13 + $0x138] sm:$0xff]
      %v3117 = vld [vmem:[#allocation13 + $0x140] sm:$0xff]
      %v3118 = vld [vmem:[#allocation13 + $0x148] sm:$0xff]
      %v3119 = vld [vmem:[#allocation13 + $0x150] sm:$0xff]
      %v3120 = vld [vmem:[#allocation13 + $0x158] sm:$0xff]
      %v3121 = vld [vmem:[#allocation13 + $0x160] sm:$0xff]
      %v3122 = vld [vmem:[#allocation13 + $0x168] sm:$0xff]
      %v3123 = vld [vmem:[#allocation13 + $0x170] sm:$0xff]
      %v3124 = vld [vmem:[#allocation13 + $0x178] sm:$0xff]
      %v3125 = vld [vmem:[#allocation13 + $0x180] sm:$0xff]
      %v3126 = vld [vmem:[#allocation13 + $0x188] sm:$0xff]
      %v3127 = vld [vmem:[#allocation13 + $0x190] sm:$0xff]
      %v3128 = vld [vmem:[#allocation13 + $0x198] sm:$0xff]
      %v3129 = vld [vmem:[#allocation13 + $0x1a0] sm:$0xff]
      %v3130 = vld [vmem:[#allocation13 + $0x1a8] sm:$0xff]
      %v3131 = vld [vmem:[#allocation13 + $0x1b0] sm:$0xff]
      %v3132 = vld [vmem:[#allocation13 + $0x1b8] sm:$0xff]
      %v3133 = vld [vmem:[#allocation13 + $0x1c0] sm:$0xff]
      %v3134 = vld [vmem:[#allocation13 + $0x1c8] sm:$0xff]
      %v3135 = vld [vmem:[#allocation13 + $0x1d0] sm:$0xff]
      %v3136 = vld [vmem:[#allocation13 + $0x1d8] sm:$0xff]
      %v3137 = vld [vmem:[#allocation13 + $0x1e0] sm:$0xff]
      %v3138 = vld [vmem:[#allocation13 + $0x1e8] sm:$0xff]
      %v3139 = vld [vmem:[#allocation13 + $0x1f0] sm:$0xff]
      %v3140 = vld [vmem:[#allocation13 + $0x1f8] sm:$0xff]
      %3141 = vmatprep.subr.mxu0 0.0
      %3142 = vmatpush1.msra.mxu0 %v3092
      %3143 = vmatprep.subr.mxu0 0.0
      %3144 = vmatpush1.msra.mxu0 %v3091
      %3145 = vmatprep.subr.mxu0 0.0
      %3146 = vmatpush1.msra.mxu0 %v3090
      %3147 = vmatprep.subr.mxu0 0.0
      %3148 = vmatpush1.msra.mxu0 %v3089
      %3149 = vmatprep.subr.mxu0 0.0
      %3150 = vmatpush1.msra.mxu0 %v3088
      %3151 = vmatprep.subr.mxu0 0.0
      %3152 = vmatpush1.msra.mxu0 %v3087
      %3153 = vmatprep.subr.mxu0 0.0
      %3154 = vmatpush1.msra.mxu0 %v3086
      %3155 = vmatprep.subr.mxu0 0.0
      %3156 = vmatpush1.msra.mxu0 %v3085
      %3157 = vmatprep.subr.mxu0 0.0
      %3158 = vmatpush1.msra.mxu0 %v3084
      %3159 = vmatprep.subr.mxu0 0.0
      %3160 = vmatpush1.msra.mxu0 %v3083
      %3161 = vmatprep.subr.mxu0 0.0
      %3162 = vmatpush1.msra.mxu0 %v3082
      %3163 = vmatprep.subr.mxu0 0.0
      %3164 = vmatpush1.msra.mxu0 %v3081
      %3165 = vmatprep.subr.mxu0 0.0
      %3166 = vmatpush1.msra.mxu0 %v3080
      %3167 = vmatprep.subr.mxu0 0.0
      %3168 = vmatpush1.msra.mxu0 %v3079
      %3169 = vmatprep.subr.mxu0 0.0
      %3170 = vmatpush1.msra.mxu0 %v3078
      %3171 = vmatprep.subr.mxu0 0.0
      %3172 = vmatpush1.msra.mxu0 %v3077
      %3173 = vmatprep.subr.mxu0 0.0
      %3174 = vmatpush2.msra.mxu0 %v3108
      %3175 = vmatprep.subr.mxu0 0.0
      %3176 = vmatpush2.msra.mxu0 %v3107
      %3177 = vmatprep.subr.mxu0 0.0
      %3178 = vmatpush2.msra.mxu0 %v3106
      %3179 = vmatprep.subr.mxu0 0.0
      %3180 = vmatpush2.msra.mxu0 %v3105
      %3181 = vmatprep.subr.mxu0 0.0
      %3182 = vmatpush2.msra.mxu0 %v3104
      %3183 = vmatprep.subr.mxu0 0.0
      %3184 = vmatpush2.msra.mxu0 %v3103
      %3185 = vmatprep.subr.mxu0 0.0
      %3186 = vmatpush2.msra.mxu0 %v3102
      %3187 = vmatprep.subr.mxu0 0.0
      %3188 = vmatpush2.msra.mxu0 %v3101
      %3189 = vmatprep.subr.mxu0 0.0
      %3190 = vmatpush2.msra.mxu0 %v3100
      %3191 = vmatprep.subr.mxu0 0.0
      %3192 = vmatpush2.msra.mxu0 %v3099
      %3193 = vmatprep.subr.mxu0 0.0
      %3194 = vmatpush2.msra.mxu0 %v3098
      %3195 = vmatprep.subr.mxu0 0.0
      %3196 = vmatpush2.msra.mxu0 %v3097
      %3197 = vmatprep.subr.mxu0 0.0
      %3198 = vmatpush2.msra.mxu0 %v3096
      %3199 = vmatprep.subr.mxu0 0.0
      %3200 = vmatpush2.msra.mxu0 %v3095
      %3201 = vmatprep.subr.mxu0 0.0
      %3202 = vmatpush2.msra.mxu0 %v3094
      %3203 = vmatprep.subr.mxu0 0.0
      %3204 = vmatpush2.msra.mxu0 %v3093
      %3205 = vmatprep.mubr.f32.mxu0 %v2947
      %3206 = vmatmul.mubr.f32.gmra.mxu0 %v2945
      %v3207 = vpop.f32.mrf.mxu0
      %v3208 = vadd.f32 0.0, %v3207
      %v3209 = vpop.f32.mrf.mxu0
      %3210 = vdwg.mxu0
      %3211 = vmatprep.subr.mxu0 0.0
      %3212 = vmatpush1.msra.mxu0 %v3124
      %3213 = vmatprep.subr.mxu0 0.0
      %3214 = vmatpush1.msra.mxu0 %v3123
      %3215 = vmatprep.subr.mxu0 0.0
      %3216 = vmatpush1.msra.mxu0 %v3122
      %3217 = vmatprep.subr.mxu0 0.0
      %3218 = vmatpush1.msra.mxu0 %v3121
      %3219 = vmatprep.subr.mxu0 0.0
      %3220 = vmatpush1.msra.mxu0 %v3120
      %3221 = vmatprep.subr.mxu0 0.0
      %3222 = vmatpush1.msra.mxu0 %v3119
      %3223 = vmatprep.subr.mxu0 0.0
      %3224 = vmatpush1.msra.mxu0 %v3118
      %3225 = vmatprep.subr.mxu0 0.0
      %3226 = vmatpush1.msra.mxu0 %v3117
      %3227 = vmatprep.subr.mxu0 0.0
      %3228 = vmatpush1.msra.mxu0 %v3116
      %3229 = vmatprep.subr.mxu0 0.0
      %3230 = vmatpush1.msra.mxu0 %v3115
      %3231 = vmatprep.subr.mxu0 0.0
      %3232 = vmatpush1.msra.mxu0 %v3114
      %3233 = vmatprep.subr.mxu0 0.0
      %3234 = vmatpush1.msra.mxu0 %v3113
      %3235 = vmatprep.subr.mxu0 0.0
      %3236 = vmatpush1.msra.mxu0 %v3112
      %3237 = vmatprep.subr.mxu0 0.0
      %3238 = vmatpush1.msra.mxu0 %v3111
      %3239 = vmatprep.subr.mxu0 0.0
      %3240 = vmatpush1.msra.mxu0 %v3110
      %3241 = vmatprep.subr.mxu0 0.0
      %3242 = vmatpush1.msra.mxu0 %v3109
      %3243 = vmatprep.subr.mxu0 0.0
      %3244 = vmatpush2.msra.mxu0 %v3140
      %3245 = vmatprep.subr.mxu0 0.0
      %3246 = vmatpush2.msra.mxu0 %v3139
      %3247 = vmatprep.subr.mxu0 0.0
      %3248 = vmatpush2.msra.mxu0 %v3138
      %3249 = vmatprep.subr.mxu0 0.0
      %3250 = vmatpush2.msra.mxu0 %v3137
      %3251 = vmatprep.subr.mxu0 0.0
      %3252 = vmatpush2.msra.mxu0 %v3136
      %3253 = vmatprep.subr.mxu0 0.0
      %3254 = vmatpush2.msra.mxu0 %v3135
      %3255 = vmatprep.subr.mxu0 0.0
      %3256 = vmatpush2.msra.mxu0 %v3134
      %3257 = vmatprep.subr.mxu0 0.0
      %3258 = vmatpush2.msra.mxu0 %v3133
      %3259 = vmatprep.subr.mxu0 0.0
      %3260 = vmatpush2.msra.mxu0 %v3132
      %3261 = vmatprep.subr.mxu0 0.0
      %3262 = vmatpush2.msra.mxu0 %v3131
      %3263 = vmatprep.subr.mxu0 0.0
      %3264 = vmatpush2.msra.mxu0 %v3130
      %3265 = vmatprep.subr.mxu0 0.0
      %3266 = vmatpush2.msra.mxu0 %v3129
      %3267 = vmatprep.subr.mxu0 0.0
      %3268 = vmatpush2.msra.mxu0 %v3128
      %3269 = vmatprep.subr.mxu0 0.0
      %3270 = vmatpush2.msra.mxu0 %v3127
      %3271 = vmatprep.subr.mxu0 0.0
      %3272 = vmatpush2.msra.mxu0 %v3126
      %3273 = vmatprep.subr.mxu0 0.0
      %3274 = vmatpush2.msra.mxu0 %v3125
      %3275 = vmatprep.mubr.f32.mxu0 %v3030
      %3276 = vmatmul.mubr.f32.gmra.mxu0 %v3028
      %v3277 = vpop.f32.mrf.mxu0
      %v3278 = vadd.f32 %v3208, %v3277
      %v3279 = vpop.f32.mrf.mxu0
      %3280 = vdwg.mxu0
      %v3281 = vadd.f32 %v3076, %v3278
      %s3282 = scalar_lea.vmem [#allocation13], 512
      %v3283 = vld [vmem:[%s3282] sm:$0xff]
      %v3284 = vld [vmem:[%s3282 + $0x8] sm:$0xff]
      %v3285 = vld [vmem:[%s3282 + $0x10] sm:$0xff]
      %v3286 = vld [vmem:[%s3282 + $0x18] sm:$0xff]
      %v3287 = vld [vmem:[%s3282 + $0x20] sm:$0xff]
      %v3288 = vld [vmem:[%s3282 + $0x28] sm:$0xff]
      %v3289 = vld [vmem:[%s3282 + $0x30] sm:$0xff]
      %v3290 = vld [vmem:[%s3282 + $0x38] sm:$0xff]
      %v3291 = vld [vmem:[%s3282 + $0x40] sm:$0xff]
      %v3292 = vld [vmem:[%s3282 + $0x48] sm:$0xff]
      %v3293 = vld [vmem:[%s3282 + $0x50] sm:$0xff]
      %v3294 = vld [vmem:[%s3282 + $0x58] sm:$0xff]
      %v3295 = vld [vmem:[%s3282 + $0x60] sm:$0xff]
      %v3296 = vld [vmem:[%s3282 + $0x68] sm:$0xff]
      %v3297 = vld [vmem:[%s3282 + $0x70] sm:$0xff]
      %v3298 = vld [vmem:[%s3282 + $0x78] sm:$0xff]
      %v3299 = vld [vmem:[%s3282 + $0x80] sm:$0xff]
      %v3300 = vld [vmem:[%s3282 + $0x88] sm:$0xff]
      %v3301 = vld [vmem:[%s3282 + $0x90] sm:$0xff]
      %v3302 = vld [vmem:[%s3282 + $0x98] sm:$0xff]
      %v3303 = vld [vmem:[%s3282 + $0xa0] sm:$0xff]
      %v3304 = vld [vmem:[%s3282 + $0xa8] sm:$0xff]
      %v3305 = vld [vmem:[%s3282 + $0xb0] sm:$0xff]
      %v3306 = vld [vmem:[%s3282 + $0xb8] sm:$0xff]
      %v3307 = vld [vmem:[%s3282 + $0xc0] sm:$0xff]
      %v3308 = vld [vmem:[%s3282 + $0xc8] sm:$0xff]
      %v3309 = vld [vmem:[%s3282 + $0xd0] sm:$0xff]
      %v3310 = vld [vmem:[%s3282 + $0xd8] sm:$0xff]
      %v3311 = vld [vmem:[%s3282 + $0xe0] sm:$0xff]
      %v3312 = vld [vmem:[%s3282 + $0xe8] sm:$0xff]
      %v3313 = vld [vmem:[%s3282 + $0xf0] sm:$0xff]
      %v3314 = vld [vmem:[%s3282 + $0xf8] sm:$0xff]
      %v3315 = vld [vmem:[%s3282 + $0x100] sm:$0xff]
      %v3316 = vld [vmem:[%s3282 + $0x108] sm:$0xff]
      %v3317 = vld [vmem:[%s3282 + $0x110] sm:$0xff]
      %v3318 = vld [vmem:[%s3282 + $0x118] sm:$0xff]
      %v3319 = vld [vmem:[%s3282 + $0x120] sm:$0xff]
      %v3320 = vld [vmem:[%s3282 + $0x128] sm:$0xff]
      %v3321 = vld [vmem:[%s3282 + $0x130] sm:$0xff]
      %v3322 = vld [vmem:[%s3282 + $0x138] sm:$0xff]
      %v3323 = vld [vmem:[%s3282 + $0x140] sm:$0xff]
      %v3324 = vld [vmem:[%s3282 + $0x148] sm:$0xff]
      %v3325 = vld [vmem:[%s3282 + $0x150] sm:$0xff]
      %v3326 = vld [vmem:[%s3282 + $0x158] sm:$0xff]
      %v3327 = vld [vmem:[%s3282 + $0x160] sm:$0xff]
      %v3328 = vld [vmem:[%s3282 + $0x168] sm:$0xff]
      %v3329 = vld [vmem:[%s3282 + $0x170] sm:$0xff]
      %v3330 = vld [vmem:[%s3282 + $0x178] sm:$0xff]
      %v3331 = vld [vmem:[%s3282 + $0x180] sm:$0xff]
      %v3332 = vld [vmem:[%s3282 + $0x188] sm:$0xff]
      %v3333 = vld [vmem:[%s3282 + $0x190] sm:$0xff]
      %v3334 = vld [vmem:[%s3282 + $0x198] sm:$0xff]
      %v3335 = vld [vmem:[%s3282 + $0x1a0] sm:$0xff]
      %v3336 = vld [vmem:[%s3282 + $0x1a8] sm:$0xff]
      %v3337 = vld [vmem:[%s3282 + $0x1b0] sm:$0xff]
      %v3338 = vld [vmem:[%s3282 + $0x1b8] sm:$0xff]
      %v3339 = vld [vmem:[%s3282 + $0x1c0] sm:$0xff]
      %v3340 = vld [vmem:[%s3282 + $0x1c8] sm:$0xff]
      %v3341 = vld [vmem:[%s3282 + $0x1d0] sm:$0xff]
      %v3342 = vld [vmem:[%s3282 + $0x1d8] sm:$0xff]
      %v3343 = vld [vmem:[%s3282 + $0x1e0] sm:$0xff]
      %v3344 = vld [vmem:[%s3282 + $0x1e8] sm:$0xff]
      %v3345 = vld [vmem:[%s3282 + $0x1f0] sm:$0xff]
      %v3346 = vld [vmem:[%s3282 + $0x1f8] sm:$0xff]
      %v3351 = vrot.slane %v2945, 1
      %v3352 = vrot.slane %v2947, 1
      %v3353 = vrot.slane %v3028, 1
      %v3354 = vrot.slane %v3030, 1
      %3359 = vmatprep.subr.mxu0 0.0
      %3360 = vmatpush1.msra.mxu0 %v3298
      %3361 = vmatprep.subr.mxu0 0.0
      %3362 = vmatpush1.msra.mxu0 %v3297
      %3363 = vmatprep.subr.mxu0 0.0
      %3364 = vmatpush1.msra.mxu0 %v3296
      %3365 = vmatprep.subr.mxu0 0.0
      %3366 = vmatpush1.msra.mxu0 %v3295
      %3367 = vmatprep.subr.mxu0 0.0
      %3368 = vmatpush1.msra.mxu0 %v3294
      %3369 = vmatprep.subr.mxu0 0.0
      %3370 = vmatpush1.msra.mxu0 %v3293
      %3371 = vmatprep.subr.mxu0 0.0
      %3372 = vmatpush1.msra.mxu0 %v3292
      %3373 = vmatprep.subr.mxu0 0.0
      %3374 = vmatpush1.msra.mxu0 %v3291
      %3375 = vmatprep.subr.mxu0 0.0
      %3376 = vmatpush1.msra.mxu0 %v3290
      %3377 = vmatprep.subr.mxu0 0.0
      %3378 = vmatpush1.msra.mxu0 %v3289
      %3379 = vmatprep.subr.mxu0 0.0
      %3380 = vmatpush1.msra.mxu0 %v3288
      %3381 = vmatprep.subr.mxu0 0.0
      %3382 = vmatpush1.msra.mxu0 %v3287
      %3383 = vmatprep.subr.mxu0 0.0
      %3384 = vmatpush1.msra.mxu0 %v3286
      %3385 = vmatprep.subr.mxu0 0.0
      %3386 = vmatpush1.msra.mxu0 %v3285
      %3387 = vmatprep.subr.mxu0 0.0
      %3388 = vmatpush1.msra.mxu0 %v3284
      %3389 = vmatprep.subr.mxu0 0.0
      %3390 = vmatpush1.msra.mxu0 %v3283
      %3391 = vmatprep.subr.mxu0 0.0
      %3392 = vmatpush2.msra.mxu0 %v3314
      %3393 = vmatprep.subr.mxu0 0.0
      %3394 = vmatpush2.msra.mxu0 %v3313
      %3395 = vmatprep.subr.mxu0 0.0
      %3396 = vmatpush2.msra.mxu0 %v3312
      %3397 = vmatprep.subr.mxu0 0.0
      %3398 = vmatpush2.msra.mxu0 %v3311
      %3399 = vmatprep.subr.mxu0 0.0
      %3400 = vmatpush2.msra.mxu0 %v3310
      %3401 = vmatprep.subr.mxu0 0.0
      %3402 = vmatpush2.msra.mxu0 %v3309
      %3403 = vmatprep.subr.mxu0 0.0
      %3404 = vmatpush2.msra.mxu0 %v3308
      %3405 = vmatprep.subr.mxu0 0.0
      %3406 = vmatpush2.msra.mxu0 %v3307
      %3407 = vmatprep.subr.mxu0 0.0
      %3408 = vmatpush2.msra.mxu0 %v3306
      %3409 = vmatprep.subr.mxu0 0.0
      %3410 = vmatpush2.msra.mxu0 %v3305
      %3411 = vmatprep.subr.mxu0 0.0
      %3412 = vmatpush2.msra.mxu0 %v3304
      %3413 = vmatprep.subr.mxu0 0.0
      %3414 = vmatpush2.msra.mxu0 %v3303
      %3415 = vmatprep.subr.mxu0 0.0
      %3416 = vmatpush2.msra.mxu0 %v3302
      %3417 = vmatprep.subr.mxu0 0.0
      %3418 = vmatpush2.msra.mxu0 %v3301
      %3419 = vmatprep.subr.mxu0 0.0
      %3420 = vmatpush2.msra.mxu0 %v3300
      %3421 = vmatprep.subr.mxu0 0.0
      %3422 = vmatpush2.msra.mxu0 %v3299
      %3423 = vmatprep.mubr.f32.mxu0 %v3352
      %3424 = vmatmul.mubr.f32.gmra.mxu0 %v3351
      %v3425 = vpop.f32.mrf.mxu0
      %v3426 = vadd.f32 0.0, %v3425
      %v3427 = vpop.f32.mrf.mxu0
      %3428 = vdwg.mxu0
      %3429 = vmatprep.subr.mxu0 0.0
      %3430 = vmatpush1.msra.mxu0 %v3330
      %3431 = vmatprep.subr.mxu0 0.0
      %3432 = vmatpush1.msra.mxu0 %v3329
      %3433 = vmatprep.subr.mxu0 0.0
      %3434 = vmatpush1.msra.mxu0 %v3328
      %3435 = vmatprep.subr.mxu0 0.0
      %3436 = vmatpush1.msra.mxu0 %v3327
      %3437 = vmatprep.subr.mxu0 0.0
      %3438 = vmatpush1.msra.mxu0 %v3326
      %3439 = vmatprep.subr.mxu0 0.0
      %3440 = vmatpush1.msra.mxu0 %v3325
      %3441 = vmatprep.subr.mxu0 0.0
      %3442 = vmatpush1.msra.mxu0 %v3324
      %3443 = vmatprep.subr.mxu0 0.0
      %3444 = vmatpush1.msra.mxu0 %v3323
      %3445 = vmatprep.subr.mxu0 0.0
      %3446 = vmatpush1.msra.mxu0 %v3322
      %3447 = vmatprep.subr.mxu0 0.0
      %3448 = vmatpush1.msra.mxu0 %v3321
      %3449 = vmatprep.subr.mxu0 0.0
      %3450 = vmatpush1.msra.mxu0 %v3320
      %3451 = vmatprep.subr.mxu0 0.0
      %3452 = vmatpush1.msra.mxu0 %v3319
      %3453 = vmatprep.subr.mxu0 0.0
      %3454 = vmatpush1.msra.mxu0 %v3318
      %3455 = vmatprep.subr.mxu0 0.0
      %3456 = vmatpush1.msra.mxu0 %v3317
      %3457 = vmatprep.subr.mxu0 0.0
      %3458 = vmatpush1.msra.mxu0 %v3316
      %3459 = vmatprep.subr.mxu0 0.0
      %3460 = vmatpush1.msra.mxu0 %v3315
      %3461 = vmatprep.subr.mxu0 0.0
      %3462 = vmatpush2.msra.mxu0 %v3346
      %3463 = vmatprep.subr.mxu0 0.0
      %3464 = vmatpush2.msra.mxu0 %v3345
      %3465 = vmatprep.subr.mxu0 0.0
      %3466 = vmatpush2.msra.mxu0 %v3344
      %3467 = vmatprep.subr.mxu0 0.0
      %3468 = vmatpush2.msra.mxu0 %v3343
      %3469 = vmatprep.subr.mxu0 0.0
      %3470 = vmatpush2.msra.mxu0 %v3342
      %3471 = vmatprep.subr.mxu0 0.0
      %3472 = vmatpush2.msra.mxu0 %v3341
      %3473 = vmatprep.subr.mxu0 0.0
      %3474 = vmatpush2.msra.mxu0 %v3340
      %3475 = vmatprep.subr.mxu0 0.0
      %3476 = vmatpush2.msra.mxu0 %v3339
      %3477 = vmatprep.subr.mxu0 0.0
      %3478 = vmatpush2.msra.mxu0 %v3338
      %3479 = vmatprep.subr.mxu0 0.0
      %3480 = vmatpush2.msra.mxu0 %v3337
      %3481 = vmatprep.subr.mxu0 0.0
      %3482 = vmatpush2.msra.mxu0 %v3336
      %3483 = vmatprep.subr.mxu0 0.0
      %3484 = vmatpush2.msra.mxu0 %v3335
      %3485 = vmatprep.subr.mxu0 0.0
      %3486 = vmatpush2.msra.mxu0 %v3334
      %3487 = vmatprep.subr.mxu0 0.0
      %3488 = vmatpush2.msra.mxu0 %v3333
      %3489 = vmatprep.subr.mxu0 0.0
      %3490 = vmatpush2.msra.mxu0 %v3332
      %3491 = vmatprep.subr.mxu0 0.0
      %3492 = vmatpush2.msra.mxu0 %v3331
      %3493 = vmatprep.mubr.f32.mxu0 %v3354
      %3494 = vmatmul.mubr.f32.gmra.mxu0 %v3353
      %v3495 = vpop.f32.mrf.mxu0
      %v3496 = vadd.f32 %v3426, %v3495
      %v3497 = vpop.f32.mrf.mxu0
      %3498 = vdwg.mxu0
      %v3499 = vadd.f32 %v3281, %v3496
      %3500 = vst [vmem:[#allocation15] sm:$0x1] %v3499
    $region49: #{tpu_custom_call.1} parent=1 // pred_fallthru
      _
    // Predicated region
    $region50: #{tpu_custom_call.1} parent=1 // pred_check
      _
    $region51: #{tpu_custom_call.1} parent=1 // pred_check_branch
      %3502 = sbr.rel (0) target = $region53
    $region52: #{tpu_custom_call.1} parent=1 // pred_region
      %s3504 = ssub.s32 16, 16
      %3505 = vsyncadd [#allocation9], %s3504
      %s3507 = sshll.u32 [#allocation15], 4
      %s3508 = int_to_ptr.vmem [resolvable:$true] %s3507
      %3510 = dma.vmem_to_hbm [thread:$0]  %s3508, 16, %s8, [#allocation9]
    $region53: #{tpu_custom_call.1} parent=1 // pred_fallthru
      _
    // Predicated region
    $region54: #{tpu_custom_call.1} parent=1 // pred_check
      _
    $region55: #{tpu_custom_call.1} parent=1 // pred_check_branch
      %3512 = sbr.rel (0) target = $region57
    $region56: #{tpu_custom_call.1} parent=1 // pred_region
      %s3514 = ssub.s32 256, 256
      %3515 = vsyncadd [#allocation17], %s3514
      %s3516 = sshll.u32 [#allocation16], 4
      %s3517 = int_to_ptr.vmem [resolvable:$true] %s3516
      %3522 = dma.vmem_to_hbm [thread:$0]  %s3517, 256, %s9, [#allocation17], 128, 128, 8
    $region57: #{tpu_custom_call.1} parent=1 // pred_fallthru
      _
    // Predicated region
    $region58: #{tpu_custom_call.1} parent=1 // pred_check
      _
    $region59: #{tpu_custom_call.1} parent=1 // pred_check_branch
      %3524 = sbr.rel (0) target = $region61
    $region60: #{tpu_custom_call.1} parent=1 // pred_region
      %3525 = dma.done [#allocation9], 16
    $region61: #{tpu_custom_call.1} parent=1 // pred_fallthru
      _
    // Predicated region
    $region62: #{tpu_custom_call.1} parent=1 // pred_check
      _
    $region63: #{tpu_custom_call.1} parent=1 // pred_check_branch
      %3527 = sbr.rel (0) target = $region65
    $region64: #{tpu_custom_call.1} parent=1 // pred_region
      %3528 = dma.done [#allocation17], 256
    $region65: #{tpu_custom_call.1} parent=1 // pred_fallthru
      _
    %3529 = vsyncpa [#allocation8], 1
    %3530 = vsyncpa [#allocation11], 1
    %3531 = vsyncpa [#allocation14], 1
    %3532 = vsyncpa [#allocation9], 1
    %3533 = vsyncpa [#allocation17], 1

</llo_original>
